<compile_context>
chip_gen: v7x
topology: tpu7x:2x2x1
jax: 0.10.0
libtpu: 0.0.40
codegen_flags: <defaults>
</compile_context>

<pallas_src>
import functools

import jax
import jax.numpy as jnp
from jax.experimental import pallas as pl
from jax.experimental.pallas import tpu as pltpu

# ----------------------------- configuration --------------------------------
N_HEAD    = 4
D_K       = 32
D_V       = 32
D_MODEL   = N_HEAD * D_K          # 128 — lane-dense per perf feedback
LN_EPS    = 1e-5
NEG_SLOPE = 0.2                   # LeakyReLU slope


# ------------------------------ Pallas kernel --------------------------------
def _map_mha_kernel(q_ref, k_ref, v_ref, mask_ref,
                    uq_ref, ukt_ref, wv_ref, fcw_ref, fcb_ref, lnw_ref, lnb_ref,
                    out_ref, attn_ref, *, n_head, d_v, ln_eps, neg_slope):
    tb, lq, dm = q_ref.shape
    lk = k_ref.shape[1]

    q3 = q_ref[...]                                    # [tb, lq, dm]
    k3 = k_ref[...]                                    # [tb, lk, dm]
    q2 = q3.reshape(tb * lq, dm)
    v2 = v_ref[...].reshape(tb * lk, dm)
    maskf = mask_ref[...]                              # [tb, lq, lk]

    # ---- fused projections (weight_map already folded into Uq / Uk^T) -------
    # per-query scores, all heads at once: [tb*lq, H]
    sq = jnp.dot(q2, uq_ref[...], preferred_element_type=jnp.float32)
    sq3 = sq.reshape(tb, lq, n_head)
    # per-key scores with keys on the lane axis, all heads at once: [tb, H, lk]
    ukb = jnp.broadcast_to(ukt_ref[...][None, :, :], (tb, n_head, dm))
    sk = jnp.einsum('bhd,bkd->bhk', ukb, k3, preferred_element_type=jnp.float32)
    # fused V projection (head-major lane concat): [tb*lk, H*dv]
    vp = jnp.dot(v2, wv_ref[...], preferred_element_type=jnp.float32)
    vp3 = vp.reshape(tb, lk, n_head * d_v)

    # ---- per-head additive attention + weighted sum --------------------------
    ohs = []
    for h in range(n_head):
        logits = sq3[:, :, h:h + 1] + sk[:, h:h + 1, :]           # [tb, lq, lk]
        logits = jnp.where(maskf > 0.5, jnp.float32(-1e10), logits)
        logits = logits - jnp.max(logits, axis=-1, keepdims=True)
        e = jnp.exp(logits)
        attn_h = e * pl.reciprocal(jnp.sum(e, axis=-1, keepdims=True), approx=True)
        attn_ref[h] = attn_h                                       # [tb, lq, lk]
        vp_h = vp3[:, :, h * d_v:(h + 1) * d_v]                    # [tb, lk, dv]
        ohs.append(jnp.einsum('bqk,bkd->bqd', attn_h, vp_h,
                              preferred_element_type=jnp.float32))

    # ---- fc (single 128x128 matmul) + LeakyReLU + residual + LayerNorm -------
    o = jnp.concatenate(ohs, axis=-1).reshape(tb * lq, n_head * d_v)
    x = jnp.dot(o, fcw_ref[...], preferred_element_type=jnp.float32) + fcb_ref[...]
    x = jnp.where(x >= 0, x, neg_slope * x)            # LeakyReLU(0.2)
    # TODO(synk): nn.Dropout (attn + output) run in eval mode => identity.
    x = x + q2                                          # residual (original q)
    mean = jnp.mean(x, axis=-1, keepdims=True)
    var = jnp.mean(jnp.square(x - mean), axis=-1, keepdims=True)
    xn = (x - mean) * jax.lax.rsqrt(var + ln_eps)
    out_ref[...] = (xn * lnw_ref[...] + lnb_ref[...]).reshape(tb, lq, dm)


# ------------------------------ kernel wrapper --------------------------------
def map_mha_forward(params, q, k, v, mask, *, block_b=8):
    """MapBasedMultiHeadAttention.forward.
    q:[B,Lq,Dm]  k,v:[B,Lk,Dm]  mask:[B,Lq,Lk] bool (True = masked).
    Returns (output [B,Lq,Dm], attn [n_head*B, Lq, Lk])."""
    b, lq, dm = q.shape
    lk = k.shape[1]
    h, dk, dv = N_HEAD, D_K, D_V
    block_b = min(block_b, b)
    assert b % block_b == 0, "batch must be divisible by the batch block"

    # fold weight_map into the Q / K projections (one-time weight transform)
    wm_q = params['wm'][:dk, 0]
    wm_k = params['wm'][dk:, 0]
    uq = jnp.einsum('dhk,k->dh', params['wq'].reshape(dm, h, dk), wm_q)    # [Dm, H]
    ukt = jnp.einsum('dhk,k->hd', params['wk'].reshape(dm, h, dk), wm_k)   # [H, Dm]
    maskf = mask.astype(jnp.float32)

    kernel = functools.partial(_map_mha_kernel, n_head=h, d_v=dv,
                               ln_eps=LN_EPS, neg_slope=NEG_SLOPE)
    out, attn = pl.pallas_call(
        kernel,
        grid=(b // block_b,),
        in_specs=[
            pl.BlockSpec((block_b, lq, dm), lambda i: (i, 0, 0)),   # q
            pl.BlockSpec((block_b, lk, dm), lambda i: (i, 0, 0)),   # k
            pl.BlockSpec((block_b, lk, dm), lambda i: (i, 0, 0)),   # v
            pl.BlockSpec((block_b, lq, lk), lambda i: (i, 0, 0)),   # mask
            pl.BlockSpec((dm, h), lambda i: (0, 0)),                # Uq
            pl.BlockSpec((h, dm), lambda i: (0, 0)),                # Uk^T
            pl.BlockSpec((dm, h * dv), lambda i: (0, 0)),           # Wv
            pl.BlockSpec((h * dv, dm), lambda i: (0, 0)),           # fc W
            pl.BlockSpec((1, dm), lambda i: (0, 0)),                # fc b
            pl.BlockSpec((1, dm), lambda i: (0, 0)),                # ln w
            pl.BlockSpec((1, dm), lambda i: (0, 0)),                # ln b
        ],
        out_specs=[
            pl.BlockSpec((block_b, lq, dm), lambda i: (i, 0, 0)),
            pl.BlockSpec((h, block_b, lq, lk), lambda i: (0, i, 0, 0)),
        ],
        out_shape=[
            jax.ShapeDtypeStruct((b, lq, dm), jnp.float32),
            jax.ShapeDtypeStruct((h, b, lq, lk), jnp.float32),
        ],
        compiler_params=pltpu.CompilerParams(dimension_semantics=("parallel",)),
    )(q, k, v, maskf, uq, ukt, params['wv'],
      params['fc_w'], params['fc_b'], params['ln_w'], params['ln_b'])

    # torch layout: attn is [n_head * B, Lq, Lk], head-major
    return out, attn.reshape(h * b, lq, lk)


# --------------------------- pure-JAX reference --------------------------------
def map_mha_reference(p, q, k, v, mask):
    """Faithful translation of the torch forward (eval mode)."""
    b, lq, dm = q.shape
    lk = k.shape[1]
    h, dk, dv = N_HEAD, D_K, D_V
    residual = q
    Q = (q @ p['wq']).reshape(b, lq, h, dk)
    K = (k @ p['wk']).reshape(b, lk, h, dk)
    V = (v @ p['wv']).reshape(b, lk, h, dv)
    Qh = Q.transpose(2, 0, 1, 3).reshape(h * b, lq, dk)
    Kh = K.transpose(2, 0, 1, 3).reshape(h * b, lk, dk)
    Vh = V.transpose(2, 0, 1, 3).reshape(h * b, lk, dv)
    Qe = jnp.broadcast_to(Qh[:, :, None, :], (h * b, lq, lk, dk))
    Ke = jnp.broadcast_to(Kh[:, None, :, :], (h * b, lq, lk, dk))
    qk = jnp.concatenate([Qe, Ke], axis=3)                       # [H*B,Lq,Lk,2dk]
    attn = jnp.einsum('nqkc,c->nqk', qk, p['wm'][:, 0])          # weight_map
    maskr = jnp.tile(mask, (h, 1, 1))
    attn = jnp.where(maskr, jnp.float32(-1e10), attn)
    attn = jax.nn.softmax(attn, axis=2)
    out = jnp.einsum('nqk,nkd->nqd', attn, Vh)                   # bmm
    out = out.reshape(h, b, lq, dv).transpose(1, 2, 0, 3).reshape(b, lq, h * dv)
    out = out @ p['fc_w'] + p['fc_b'][0]
    out = jnp.where(out >= 0, out, NEG_SLOPE * out)              # LeakyReLU(0.2)
    out = out + residual
    mean = out.mean(-1, keepdims=True)
    var = ((out - mean) ** 2).mean(-1, keepdims=True)
    out = (out - mean) / jnp.sqrt(var + LN_EPS) * p['ln_w'][0] + p['ln_b'][0]
    return out, attn


# --------------------------------- params --------------------------------------
def init_params(key):
    ks = jax.random.split(key, 5)

    def lin(k, d_in, d_out):
        return (d_in ** -0.5) * jax.random.normal(k, (d_in, d_out), jnp.float32)

    return dict(
        wq=lin(ks[0], D_MODEL, N_HEAD * D_K),      # stored [in, out]
        wk=lin(ks[1], D_MODEL, N_HEAD * D_K),
        wv=lin(ks[2], D_MODEL, N_HEAD * D_K),
        wm=lin(ks[3], 2 * D_K, 1),                 # weight_map
        fc_w=lin(ks[4], N_HEAD * D_V, D_MODEL),
        fc_b=jnp.zeros((1, D_MODEL), jnp.float32),
        ln_w=jnp.ones((1, D_MODEL), jnp.float32),
        ln_b=jnp.zeros((1, D_MODEL), jnp.float32),
    )


# ----------------------------------- main ---------------------------------------
if __name__ == "__main__":
    key = jax.random.PRNGKey(0)
    kp, kq, kk, kv, km = jax.random.split(key, 5)

    B, LQ, LK = 32, 8, 16
    params = init_params(kp)
    q = jax.random.normal(kq, (B, LQ, D_MODEL), jnp.float32)
    k = jax.random.normal(kk, (B, LK, D_MODEL), jnp.float32)
    v = jax.random.normal(kv, (B, LK, D_MODEL), jnp.float32)
    mask = jax.random.bernoulli(km, 0.3, (B, LQ, LK))            # True = masked

    fwd = jax.jit(lambda q_, k_, v_, m_: map_mha_forward(params, q_, k_, v_, m_,
                                                         block_b=8))
    out, attn = fwd(q, k, v, mask)
    jax.block_until_ready((out, attn))

    out_ref, attn_ref = map_mha_reference(params, q, k, v, mask)

    assert out.shape == (B, LQ, D_MODEL)
    assert attn.shape == (N_HEAD * B, LQ, LK)
    assert bool(jnp.all(jnp.isfinite(out)))
    # loose tolerance: softmax uses pl.reciprocal(approx=True) on the EUP
    assert float(jnp.max(jnp.abs(out - out_ref))) < 5e-2
    assert float(jnp.max(jnp.abs(attn - attn_ref))) < 2e-2

    print("KERNEL_OK")
</pallas_src>

<mosaic_0001>
module attributes {stable_mosaic.version = 11 : i64} {
  func.func @_map_mha_kernel(%arg0: i32, %arg1: memref<8x8x128xf32, #tpu.memory_space<vmem>>, %arg2: memref<8x16x128xf32, #tpu.memory_space<vmem>>, %arg3: memref<8x16x128xf32, #tpu.memory_space<vmem>>, %arg4: memref<8x8x16xf32, #tpu.memory_space<vmem>>, %arg5: memref<128x4xf32, #tpu.memory_space<vmem>>, %arg6: memref<4x128xf32, #tpu.memory_space<vmem>>, %arg7: memref<128x128xf32, #tpu.memory_space<vmem>>, %arg8: memref<128x128xf32, #tpu.memory_space<vmem>>, %arg9: memref<1x128xf32, #tpu.memory_space<vmem>>, %arg10: memref<1x128xf32, #tpu.memory_space<vmem>>, %arg11: memref<1x128xf32, #tpu.memory_space<vmem>>, %arg12: memref<8x8x128xf32, #tpu.memory_space<vmem>>, %arg13: memref<4x8x8x16xf32, #tpu.memory_space<vmem>>) attributes {dimension_semantics = [#tpu.dimension_semantics<parallel>], iteration_bounds = array<i64: 4>, scalar_prefetch = 0 : i64, scratch_operands = 0 : i64, tpu.core_type = #tpu.core_type<tc>, window_params = [{transform_indices = @transform_0, window_bounds = array<i64: 8, 8, 128>}, {transform_indices = @transform_1, window_bounds = array<i64: 8, 16, 128>}, {transform_indices = @transform_2, window_bounds = array<i64: 8, 16, 128>}, {transform_indices = @transform_3, window_bounds = array<i64: 8, 8, 16>}, {pipeline_mode = #tpu.pipeline_mode<synchronous>, transform_indices = @transform_4, window_bounds = array<i64: 128, 4>}, {pipeline_mode = #tpu.pipeline_mode<synchronous>, transform_indices = @transform_5, window_bounds = array<i64: 4, 128>}, {pipeline_mode = #tpu.pipeline_mode<synchronous>, transform_indices = @transform_6, window_bounds = array<i64: 128, 128>}, {pipeline_mode = #tpu.pipeline_mode<synchronous>, transform_indices = @transform_7, window_bounds = array<i64: 128, 128>}, {pipeline_mode = #tpu.pipeline_mode<synchronous>, transform_indices = @transform_8, window_bounds = array<i64: 1, 128>}, {pipeline_mode = #tpu.pipeline_mode<synchronous>, transform_indices = @transform_9, window_bounds = array<i64: 1, 128>}, {pipeline_mode = #tpu.pipeline_mode<synchronous>, transform_indices = @transform_10, window_bounds = array<i64: 1, 128>}, {transform_indices = @transform_11, window_bounds = array<i64: 8, 8, 128>}, {transform_indices = @transform_12, window_bounds = array<i64: 4, 8, 8, 16>}]} {
    %c0 = arith.constant 0 : index
    %c0_0 = arith.constant 0 : index
    %c0_1 = arith.constant 0 : index
    %0 = vector.load %arg1[%c0, %c0_0, %c0_1] : memref<8x8x128xf32, #tpu.memory_space<vmem>>, vector<8x8x128xf32>
    %c0_2 = arith.constant 0 : index
    %c0_3 = arith.constant 0 : index
    %c0_4 = arith.constant 0 : index
    %1 = vector.load %arg2[%c0_2, %c0_3, %c0_4] : memref<8x16x128xf32, #tpu.memory_space<vmem>>, vector<8x16x128xf32>
    %2 = vector.shape_cast %0 : vector<8x8x128xf32> to vector<64x128xf32>
    %c0_5 = arith.constant 0 : index
    %c0_6 = arith.constant 0 : index
    %c0_7 = arith.constant 0 : index
    %3 = vector.load %arg3[%c0_5, %c0_6, %c0_7] : memref<8x16x128xf32, #tpu.memory_space<vmem>>, vector<8x16x128xf32>
    %4 = vector.shape_cast %3 : vector<8x16x128xf32> to vector<128x128xf32>
    %c0_8 = arith.constant 0 : index
    %c0_9 = arith.constant 0 : index
    %c0_10 = arith.constant 0 : index
    %5 = vector.load %arg4[%c0_8, %c0_9, %c0_10] : memref<8x8x16xf32, #tpu.memory_space<vmem>>, vector<8x8x16xf32>
    %c0_11 = arith.constant 0 : index
    %c0_12 = arith.constant 0 : index
    %6 = vector.load %arg5[%c0_11, %c0_12] : memref<128x4xf32, #tpu.memory_space<vmem>>, vector<128x4xf32>
    %cst = arith.constant dense<0.000000e+00> : vector<64x4xf32>
    %7 = tpu.matmul %2, %6, %cst {dimension_numbers = #tpu.dot_dimension_numbers<[1], [0], [0], [1], [0, 0, 1, 1], [], []>} : vector<64x128xf32>, vector<128x4xf32>, vector<64x4xf32> -> vector<64x4xf32>
    %8 = vector.shape_cast %7 : vector<64x4xf32> to vector<8x8x4xf32>
    %c0_13 = arith.constant 0 : index
    %c0_14 = arith.constant 0 : index
    %9 = vector.load %arg6[%c0_13, %c0_14] : memref<4x128xf32, #tpu.memory_space<vmem>>, vector<4x128xf32>
    %10 = vector.shape_cast %9 : vector<4x128xf32> to vector<1x4x128xf32>
    %11 = vector.shape_cast %10 : vector<1x4x128xf32> to vector<1x4x128xf32>
    %12 = vector.broadcast %11 : vector<1x4x128xf32> to vector<8x4x128xf32>
    "tpu.trace_start"() <{level = 10 : i32, message = "bhd,bkd->bhk"}> : () -> ()
    %cst_15 = arith.constant dense<0.000000e+00> : vector<8x4x16xf32>
    %13 = tpu.matmul %12, %1, %cst_15 {dimension_numbers = #tpu.dot_dimension_numbers<[2], [2], [1], [1], [0, 0, 0, 1, 1, 1], [0], [0]>} : vector<8x4x128xf32>, vector<8x16x128xf32>, vector<8x4x16xf32> -> vector<8x4x16xf32>
    "tpu.trace_stop"() : () -> ()
    %c0_16 = arith.constant 0 : index
    %c0_17 = arith.constant 0 : index
    %14 = vector.load %arg7[%c0_16, %c0_17] : memref<128x128xf32, #tpu.memory_space<vmem>>, vector<128x128xf32>
    %cst_18 = arith.constant dense<0.000000e+00> : vector<128x128xf32>
    %15 = tpu.matmul %4, %14, %cst_18 {dimension_numbers = #tpu.dot_dimension_numbers<[1], [0], [0], [1], [0, 0, 1, 1], [], []>} : vector<128x128xf32>, vector<128x128xf32>, vector<128x128xf32> -> vector<128x128xf32>
    %16 = vector.shape_cast %15 : vector<128x128xf32> to vector<8x16x128xf32>
    %17 = vector.extract_strided_slice %8 {offsets = [0, 0, 0], sizes = [8, 8, 1], strides = [1, 1, 1]} : vector<8x8x4xf32> to vector<8x8x1xf32>
    %18 = vector.extract_strided_slice %13 {offsets = [0, 0, 0], sizes = [8, 1, 16], strides = [1, 1, 1]} : vector<8x4x16xf32> to vector<8x1x16xf32>
    %19 = vector.broadcast %17 : vector<8x8x1xf32> to vector<8x8x16xf32>
    %20 = vector.broadcast %18 : vector<8x1x16xf32> to vector<8x8x16xf32>
    %21 = arith.addf %19, %20 : vector<8x8x16xf32>
    %cst_19 = arith.constant 5.000000e-01 : f32
    %22 = vector.broadcast %cst_19 : f32 to vector<8x8x16xf32>
    %23 = arith.cmpf ogt, %5, %22 : vector<8x8x16xf32>
    %cst_20 = arith.constant -1.000000e+10 : f32
    %24 = vector.broadcast %cst_20 : f32 to vector<8x8x16xf32>
    %25 = arith.select %23, %24, %21 : vector<8x8x16xi1>, vector<8x8x16xf32>
    %cst_21 = arith.constant dense<0xFF800000> : vector<8x8xf32>
    %26 = vector.multi_reduction <maximumf>, %25, %cst_21 [2] : vector<8x8x16xf32> to vector<8x8xf32>
    %27 = vector.shape_cast %26 : vector<8x8xf32> to vector<8x8x1xf32>
    %28 = vector.broadcast %27 : vector<8x8x1xf32> to vector<8x8x16xf32>
    %29 = arith.subf %25, %28 : vector<8x8x16xf32>
    %30 = math.exp %29 : vector<8x8x16xf32>
    %cst_22 = arith.constant dense<0.000000e+00> : vector<8x8xf32>
    %31 = vector.multi_reduction <add>, %30, %cst_22 [2] : vector<8x8x16xf32> to vector<8x8xf32>
    %32 = vector.shape_cast %31 : vector<8x8xf32> to vector<8x8x1xf32>
    %33 = tpu.reciprocal %32 {approx = true} : vector<8x8x1xf32> -> vector<8x8x1xf32>
    %34 = vector.broadcast %33 : vector<8x8x1xf32> to vector<8x8x16xf32>
    %35 = arith.mulf %30, %34 : vector<8x8x16xf32>
    %c0_23 = arith.constant 0 : index
    %c0_24 = arith.constant 0 : index
    %c0_25 = arith.constant 0 : index
    %c0_26 = arith.constant 0 : index
    %36 = vector.load %arg13[%c0_23, %c0_24, %c0_25, %c0_26] : memref<4x8x8x16xf32, #tpu.memory_space<vmem>>, vector<1x8x8x16xf32>
    %37 = vector.shape_cast %36 : vector<1x8x8x16xf32> to vector<8x8x16xf32>
    %38 = vector.shape_cast %35 : vector<8x8x16xf32> to vector<1x8x8x16xf32>
    tpu.vector_store %arg13[%c0_23, %c0_24, %c0_25, %c0_26], %38 {strides = array<i32>} : memref<4x8x8x16xf32, #tpu.memory_space<vmem>>, vector<1x8x8x16xf32>,
    %39 = vector.extract_strided_slice %16 {offsets = [0, 0, 0], sizes = [8, 16, 32], strides = [1, 1, 1]} : vector<8x16x128xf32> to vector<8x16x32xf32>
    "tpu.trace_start"() <{level = 10 : i32, message = "bqk,bkd->bqd"}> : () -> ()
    %cst_27 = arith.constant dense<0.000000e+00> : vector<8x8x32xf32>
    %40 = tpu.matmul %35, %39, %cst_27 {dimension_numbers = #tpu.dot_dimension_numbers<[2], [1], [1], [2], [0, 0, 0, 1, 1, 2], [0], [0]>} : vector<8x8x16xf32>, vector<8x16x32xf32>, vector<8x8x32xf32> -> vector<8x8x32xf32>
    "tpu.trace_stop"() : () -> ()
    %41 = vector.extract_strided_slice %8 {offsets = [0, 0, 1], sizes = [8, 8, 1], strides = [1, 1, 1]} : vector<8x8x4xf32> to vector<8x8x1xf32>
    %42 = vector.extract_strided_slice %13 {offsets = [0, 1, 0], sizes = [8, 1, 16], strides = [1, 1, 1]} : vector<8x4x16xf32> to vector<8x1x16xf32>
    %43 = vector.broadcast %41 : vector<8x8x1xf32> to vector<8x8x16xf32>
    %44 = vector.broadcast %42 : vector<8x1x16xf32> to vector<8x8x16xf32>
    %45 = arith.addf %43, %44 : vector<8x8x16xf32>
    %cst_28 = arith.constant 5.000000e-01 : f32
    %46 = vector.broadcast %cst_28 : f32 to vector<8x8x16xf32>
    %47 = arith.cmpf ogt, %5, %46 : vector<8x8x16xf32>
    %cst_29 = arith.constant -1.000000e+10 : f32
    %48 = vector.broadcast %cst_29 : f32 to vector<8x8x16xf32>
    %49 = arith.select %47, %48, %45 : vector<8x8x16xi1>, vector<8x8x16xf32>
    %cst_30 = arith.constant dense<0xFF800000> : vector<8x8xf32>
    %50 = vector.multi_reduction <maximumf>, %49, %cst_30 [2] : vector<8x8x16xf32> to vector<8x8xf32>
    %51 = vector.shape_cast %50 : vector<8x8xf32> to vector<8x8x1xf32>
    %52 = vector.broadcast %51 : vector<8x8x1xf32> to vector<8x8x16xf32>
    %53 = arith.subf %49, %52 : vector<8x8x16xf32>
    %54 = math.exp %53 : vector<8x8x16xf32>
    %cst_31 = arith.constant dense<0.000000e+00> : vector<8x8xf32>
    %55 = vector.multi_reduction <add>, %54, %cst_31 [2] : vector<8x8x16xf32> to vector<8x8xf32>
    %56 = vector.shape_cast %55 : vector<8x8xf32> to vector<8x8x1xf32>
    %57 = tpu.reciprocal %56 {approx = true} : vector<8x8x1xf32> -> vector<8x8x1xf32>
    %58 = vector.broadcast %57 : vector<8x8x1xf32> to vector<8x8x16xf32>
    %59 = arith.mulf %54, %58 : vector<8x8x16xf32>
    %c1 = arith.constant 1 : index
    %c0_32 = arith.constant 0 : index
    %c0_33 = arith.constant 0 : index
    %c0_34 = arith.constant 0 : index
    %60 = vector.load %arg13[%c1, %c0_32, %c0_33, %c0_34] : memref<4x8x8x16xf32, #tpu.memory_space<vmem>>, vector<1x8x8x16xf32>
    %61 = vector.shape_cast %60 : vector<1x8x8x16xf32> to vector<8x8x16xf32>
    %62 = vector.shape_cast %59 : vector<8x8x16xf32> to vector<1x8x8x16xf32>
    tpu.vector_store %arg13[%c1, %c0_32, %c0_33, %c0_34], %62 {strides = array<i32>} : memref<4x8x8x16xf32, #tpu.memory_space<vmem>>, vector<1x8x8x16xf32>,
    %63 = vector.extract_strided_slice %16 {offsets = [0, 0, 32], sizes = [8, 16, 32], strides = [1, 1, 1]} : vector<8x16x128xf32> to vector<8x16x32xf32>
    "tpu.trace_start"() <{level = 10 : i32, message = "bqk,bkd->bqd"}> : () -> ()
    %cst_35 = arith.constant dense<0.000000e+00> : vector<8x8x32xf32>
    %64 = tpu.matmul %59, %63, %cst_35 {dimension_numbers = #tpu.dot_dimension_numbers<[2], [1], [1], [2], [0, 0, 0, 1, 1, 2], [0], [0]>} : vector<8x8x16xf32>, vector<8x16x32xf32>, vector<8x8x32xf32> -> vector<8x8x32xf32>
    "tpu.trace_stop"() : () -> ()
    %65 = vector.extract_strided_slice %8 {offsets = [0, 0, 2], sizes = [8, 8, 1], strides = [1, 1, 1]} : vector<8x8x4xf32> to vector<8x8x1xf32>
    %66 = vector.extract_strided_slice %13 {offsets = [0, 2, 0], sizes = [8, 1, 16], strides = [1, 1, 1]} : vector<8x4x16xf32> to vector<8x1x16xf32>
    %67 = vector.broadcast %65 : vector<8x8x1xf32> to vector<8x8x16xf32>
    %68 = vector.broadcast %66 : vector<8x1x16xf32> to vector<8x8x16xf32>
    %69 = arith.addf %67, %68 : vector<8x8x16xf32>
    %cst_36 = arith.constant 5.000000e-01 : f32
    %70 = vector.broadcast %cst_36 : f32 to vector<8x8x16xf32>
    %71 = arith.cmpf ogt, %5, %70 : vector<8x8x16xf32>
    %cst_37 = arith.constant -1.000000e+10 : f32
    %72 = vector.broadcast %cst_37 : f32 to vector<8x8x16xf32>
    %73 = arith.select %71, %72, %69 : vector<8x8x16xi1>, vector<8x8x16xf32>
    %cst_38 = arith.constant dense<0xFF800000> : vector<8x8xf32>
    %74 = vector.multi_reduction <maximumf>, %73, %cst_38 [2] : vector<8x8x16xf32> to vector<8x8xf32>
    %75 = vector.shape_cast %74 : vector<8x8xf32> to vector<8x8x1xf32>
    %76 = vector.broadcast %75 : vector<8x8x1xf32> to vector<8x8x16xf32>
    %77 = arith.subf %73, %76 : vector<8x8x16xf32>
    %78 = math.exp %77 : vector<8x8x16xf32>
    %cst_39 = arith.constant dense<0.000000e+00> : vector<8x8xf32>
    %79 = vector.multi_reduction <add>, %78, %cst_39 [2] : vector<8x8x16xf32> to vector<8x8xf32>
    %80 = vector.shape_cast %79 : vector<8x8xf32> to vector<8x8x1xf32>
    %81 = tpu.reciprocal %80 {approx = true} : vector<8x8x1xf32> -> vector<8x8x1xf32>
    %82 = vector.broadcast %81 : vector<8x8x1xf32> to vector<8x8x16xf32>
    %83 = arith.mulf %78, %82 : vector<8x8x16xf32>
    %c2 = arith.constant 2 : index
    %c0_40 = arith.constant 0 : index
    %c0_41 = arith.constant 0 : index
    %c0_42 = arith.constant 0 : index
    %84 = vector.load %arg13[%c2, %c0_40, %c0_41, %c0_42] : memref<4x8x8x16xf32, #tpu.memory_space<vmem>>, vector<1x8x8x16xf32>
    %85 = vector.shape_cast %84 : vector<1x8x8x16xf32> to vector<8x8x16xf32>
    %86 = vector.shape_cast %83 : vector<8x8x16xf32> to vector<1x8x8x16xf32>
    tpu.vector_store %arg13[%c2, %c0_40, %c0_41, %c0_42], %86 {strides = array<i32>} : memref<4x8x8x16xf32, #tpu.memory_space<vmem>>, vector<1x8x8x16xf32>,
    %87 = vector.extract_strided_slice %16 {offsets = [0, 0, 64], sizes = [8, 16, 32], strides = [1, 1, 1]} : vector<8x16x128xf32> to vector<8x16x32xf32>
    "tpu.trace_start"() <{level = 10 : i32, message = "bqk,bkd->bqd"}> : () -> ()
    %cst_43 = arith.constant dense<0.000000e+00> : vector<8x8x32xf32>
    %88 = tpu.matmul %83, %87, %cst_43 {dimension_numbers = #tpu.dot_dimension_numbers<[2], [1], [1], [2], [0, 0, 0, 1, 1, 2], [0], [0]>} : vector<8x8x16xf32>, vector<8x16x32xf32>, vector<8x8x32xf32> -> vector<8x8x32xf32>
    "tpu.trace_stop"() : () -> ()
    %89 = vector.extract_strided_slice %8 {offsets = [0, 0, 3], sizes = [8, 8, 1], strides = [1, 1, 1]} : vector<8x8x4xf32> to vector<8x8x1xf32>
    %90 = vector.extract_strided_slice %13 {offsets = [0, 3, 0], sizes = [8, 1, 16], strides = [1, 1, 1]} : vector<8x4x16xf32> to vector<8x1x16xf32>
    %91 = vector.broadcast %89 : vector<8x8x1xf32> to vector<8x8x16xf32>
    %92 = vector.broadcast %90 : vector<8x1x16xf32> to vector<8x8x16xf32>
    %93 = arith.addf %91, %92 : vector<8x8x16xf32>
    %cst_44 = arith.constant 5.000000e-01 : f32
    %94 = vector.broadcast %cst_44 : f32 to vector<8x8x16xf32>
    %95 = arith.cmpf ogt, %5, %94 : vector<8x8x16xf32>
    %cst_45 = arith.constant -1.000000e+10 : f32
    %96 = vector.broadcast %cst_45 : f32 to vector<8x8x16xf32>
    %97 = arith.select %95, %96, %93 : vector<8x8x16xi1>, vector<8x8x16xf32>
    %cst_46 = arith.constant dense<0xFF800000> : vector<8x8xf32>
    %98 = vector.multi_reduction <maximumf>, %97, %cst_46 [2] : vector<8x8x16xf32> to vector<8x8xf32>
    %99 = vector.shape_cast %98 : vector<8x8xf32> to vector<8x8x1xf32>
    %100 = vector.broadcast %99 : vector<8x8x1xf32> to vector<8x8x16xf32>
    %101 = arith.subf %97, %100 : vector<8x8x16xf32>
    %102 = math.exp %101 : vector<8x8x16xf32>
    %cst_47 = arith.constant dense<0.000000e+00> : vector<8x8xf32>
    %103 = vector.multi_reduction <add>, %102, %cst_47 [2] : vector<8x8x16xf32> to vector<8x8xf32>
    %104 = vector.shape_cast %103 : vector<8x8xf32> to vector<8x8x1xf32>
    %105 = tpu.reciprocal %104 {approx = true} : vector<8x8x1xf32> -> vector<8x8x1xf32>
    %106 = vector.broadcast %105 : vector<8x8x1xf32> to vector<8x8x16xf32>
    %107 = arith.mulf %102, %106 : vector<8x8x16xf32>
    %c3 = arith.constant 3 : index
    %c0_48 = arith.constant 0 : index
    %c0_49 = arith.constant 0 : index
    %c0_50 = arith.constant 0 : index
    %108 = vector.load %arg13[%c3, %c0_48, %c0_49, %c0_50] : memref<4x8x8x16xf32, #tpu.memory_space<vmem>>, vector<1x8x8x16xf32>
    %109 = vector.shape_cast %108 : vector<1x8x8x16xf32> to vector<8x8x16xf32>
    %110 = vector.shape_cast %107 : vector<8x8x16xf32> to vector<1x8x8x16xf32>
    tpu.vector_store %arg13[%c3, %c0_48, %c0_49, %c0_50], %110 {strides = array<i32>} : memref<4x8x8x16xf32, #tpu.memory_space<vmem>>, vector<1x8x8x16xf32>,
    %111 = vector.extract_strided_slice %16 {offsets = [0, 0, 96], sizes = [8, 16, 32], strides = [1, 1, 1]} : vector<8x16x128xf32> to vector<8x16x32xf32>
    "tpu.trace_start"() <{level = 10 : i32, message = "bqk,bkd->bqd"}> : () -> ()
    %cst_51 = arith.constant dense<0.000000e+00> : vector<8x8x32xf32>
    %112 = tpu.matmul %107, %111, %cst_51 {dimension_numbers = #tpu.dot_dimension_numbers<[2], [1], [1], [2], [0, 0, 0, 1, 1, 2], [0], [0]>} : vector<8x8x16xf32>, vector<8x16x32xf32>, vector<8x8x32xf32> -> vector<8x8x32xf32>
    "tpu.trace_stop"() : () -> ()
    %113 = tpu.concatenate %40, %64, %88, %112 in 2 : vector<8x8x32xf32>, vector<8x8x32xf32>, vector<8x8x32xf32>, vector<8x8x32xf32> -> vector<8x8x128xf32>
    %114 = vector.shape_cast %113 : vector<8x8x128xf32> to vector<64x128xf32>
    %c0_52 = arith.constant 0 : index
    %c0_53 = arith.constant 0 : index
    %115 = vector.load %arg8[%c0_52, %c0_53] : memref<128x128xf32, #tpu.memory_space<vmem>>, vector<128x128xf32>
    %cst_54 = arith.constant dense<0.000000e+00> : vector<64x128xf32>
    %116 = tpu.matmul %114, %115, %cst_54 {dimension_numbers = #tpu.dot_dimension_numbers<[1], [0], [0], [1], [0, 0, 1, 1], [], []>} : vector<64x128xf32>, vector<128x128xf32>, vector<64x128xf32> -> vector<64x128xf32>
    %c0_55 = arith.constant 0 : index
    %c0_56 = arith.constant 0 : index
    %117 = vector.load %arg9[%c0_55, %c0_56] : memref<1x128xf32, #tpu.memory_space<vmem>>, vector<1x128xf32>
    %118 = vector.broadcast %117 : vector<1x128xf32> to vector<64x128xf32>
    %119 = arith.addf %116, %118 : vector<64x128xf32>
    %cst_57 = arith.constant 0.000000e+00 : f32
    %120 = vector.broadcast %cst_57 : f32 to vector<64x128xf32>
    %121 = arith.cmpf oge, %119, %120 : vector<64x128xf32>
    %cst_58 = arith.constant 2.000000e-01 : f32
    %122 = vector.broadcast %cst_58 : f32 to vector<64x128xf32>
    %123 = arith.mulf %122, %119 : vector<64x128xf32>
    %124 = arith.select %121, %119, %123 : vector<64x128xi1>, vector<64x128xf32>
    %125 = arith.addf %124, %2 : vector<64x128xf32>
    %cst_59 = arith.constant dense<0.000000e+00> : vector<64xf32>
    %126 = vector.multi_reduction <add>, %125, %cst_59 [1] : vector<64x128xf32> to vector<64xf32>
    %127 = vector.shape_cast %126 : vector<64xf32> to vector<64x1xf32>
    %cst_60 = arith.constant 1.280000e+02 : f32
    %128 = vector.broadcast %cst_60 : f32 to vector<64x1xf32>
    %129 = arith.divf %127, %128 : vector<64x1xf32>
    %130 = vector.broadcast %129 : vector<64x1xf32> to vector<64x128xf32>
    %131 = arith.subf %125, %130 : vector<64x128xf32>
    %132 = arith.mulf %131, %131 : vector<64x128xf32>
    %cst_61 = arith.constant dense<0.000000e+00> : vector<64xf32>
    %133 = vector.multi_reduction <add>, %132, %cst_61 [1] : vector<64x128xf32> to vector<64xf32>
    %134 = vector.shape_cast %133 : vector<64xf32> to vector<64x1xf32>
    %cst_62 = arith.constant 1.280000e+02 : f32
    %135 = vector.broadcast %cst_62 : f32 to vector<64x1xf32>
    %136 = arith.divf %134, %135 : vector<64x1xf32>
    %137 = vector.broadcast %129 : vector<64x1xf32> to vector<64x128xf32>
    %138 = arith.subf %125, %137 : vector<64x128xf32>
    %cst_63 = arith.constant 9.99999974E-6 : f32
    %139 = vector.broadcast %cst_63 : f32 to vector<64x1xf32>
    %140 = arith.addf %136, %139 : vector<64x1xf32>
    %141 = math.rsqrt %140 : vector<64x1xf32>
    %142 = vector.broadcast %141 : vector<64x1xf32> to vector<64x128xf32>
    %143 = arith.mulf %138, %142 : vector<64x128xf32>
    %c0_64 = arith.constant 0 : index
    %c0_65 = arith.constant 0 : index
    %144 = vector.load %arg10[%c0_64, %c0_65] : memref<1x128xf32, #tpu.memory_space<vmem>>, vector<1x128xf32>
    %145 = vector.broadcast %144 : vector<1x128xf32> to vector<64x128xf32>
    %146 = arith.mulf %143, %145 : vector<64x128xf32>
    %c0_66 = arith.constant 0 : index
    %c0_67 = arith.constant 0 : index
    %147 = vector.load %arg11[%c0_66, %c0_67] : memref<1x128xf32, #tpu.memory_space<vmem>>, vector<1x128xf32>
    %148 = vector.broadcast %147 : vector<1x128xf32> to vector<64x128xf32>
    %149 = arith.addf %146, %148 : vector<64x128xf32>
    %150 = vector.shape_cast %149 : vector<64x128xf32> to vector<8x8x128xf32>
    %c0_68 = arith.constant 0 : index
    %c0_69 = arith.constant 0 : index
    %c0_70 = arith.constant 0 : index
    %151 = vector.load %arg12[%c0_68, %c0_69, %c0_70] : memref<8x8x128xf32, #tpu.memory_space<vmem>>, vector<8x8x128xf32>
    tpu.vector_store %arg12[%c0_68, %c0_69, %c0_70], %150 {strides = array<i32>} : memref<8x8x128xf32, #tpu.memory_space<vmem>>, vector<8x8x128xf32>,
    return
  }
  func.func @transform_0(%arg0: i32) -> (i32, i32, i32) {
    %c0_i32 = arith.constant 0 : i32
    %c0_i32_0 = arith.constant 0 : i32
    %c0_i32_1 = arith.constant 0 : i32
    return %arg0, %c0_i32, %c0_i32_0 : i32, i32, i32
  }
  func.func @transform_1(%arg0: i32) -> (i32, i32, i32) {
    %c0_i32 = arith.constant 0 : i32
    %c0_i32_0 = arith.constant 0 : i32
    %c0_i32_1 = arith.constant 0 : i32
    return %arg0, %c0_i32, %c0_i32_0 : i32, i32, i32
  }
  func.func @transform_2(%arg0: i32) -> (i32, i32, i32) {
    %c0_i32 = arith.constant 0 : i32
    %c0_i32_0 = arith.constant 0 : i32
    %c0_i32_1 = arith.constant 0 : i32
    return %arg0, %c0_i32, %c0_i32_0 : i32, i32, i32
  }
  func.func @transform_3(%arg0: i32) -> (i32, i32, i32) {
    %c0_i32 = arith.constant 0 : i32
    %c0_i32_0 = arith.constant 0 : i32
    %c0_i32_1 = arith.constant 0 : i32
    return %arg0, %c0_i32, %c0_i32_0 : i32, i32, i32
  }
  func.func @transform_4(%arg0: i32) -> (i32, i32) {
    %c0_i32 = arith.constant 0 : i32
    %c0_i32_0 = arith.constant 0 : i32
    %c0_i32_1 = arith.constant 0 : i32
    return %c0_i32, %c0_i32_0 : i32, i32
  }
  func.func @transform_5(%arg0: i32) -> (i32, i32) {
    %c0_i32 = arith.constant 0 : i32
    %c0_i32_0 = arith.constant 0 : i32
    %c0_i32_1 = arith.constant 0 : i32
    return %c0_i32, %c0_i32_0 : i32, i32
  }
  func.func @transform_6(%arg0: i32) -> (i32, i32) {
    %c0_i32 = arith.constant 0 : i32
    %c0_i32_0 = arith.constant 0 : i32
    %c0_i32_1 = arith.constant 0 : i32
    return %c0_i32, %c0_i32_0 : i32, i32
  }
  func.func @transform_7(%arg0: i32) -> (i32, i32) {
    %c0_i32 = arith.constant 0 : i32
    %c0_i32_0 = arith.constant 0 : i32
    %c0_i32_1 = arith.constant 0 : i32
    return %c0_i32, %c0_i32_0 : i32, i32
  }
  func.func @transform_8(%arg0: i32) -> (i32, i32) {
    %c0_i32 = arith.constant 0 : i32
    %c0_i32_0 = arith.constant 0 : i32
    %c0_i32_1 = arith.constant 0 : i32
    return %c0_i32, %c0_i32_0 : i32, i32
  }
  func.func @transform_9(%arg0: i32) -> (i32, i32) {
    %c0_i32 = arith.constant 0 : i32
    %c0_i32_0 = arith.constant 0 : i32
    %c0_i32_1 = arith.constant 0 : i32
    return %c0_i32, %c0_i32_0 : i32, i32
  }
  func.func @transform_10(%arg0: i32) -> (i32, i32) {
    %c0_i32 = arith.constant 0 : i32
    %c0_i32_0 = arith.constant 0 : i32
    %c0_i32_1 = arith.constant 0 : i32
    return %c0_i32, %c0_i32_0 : i32, i32
  }
  func.func @transform_11(%arg0: i32) -> (i32, i32, i32) {
    %c0_i32 = arith.constant 0 : i32
    %c0_i32_0 = arith.constant 0 : i32
    %c0_i32_1 = arith.constant 0 : i32
    return %arg0, %c0_i32, %c0_i32_0 : i32, i32, i32
  }
  func.func @transform_12(%arg0: i32) -> (i32, i32, i32, i32) {
    %c0_i32 = arith.constant 0 : i32
    %c0_i32_0 = arith.constant 0 : i32
    %c0_i32_1 = arith.constant 0 : i32
    %c0_i32_2 = arith.constant 0 : i32
    return %c0_i32, %arg0, %c0_i32_0, %c0_i32_1 : i32, i32, i32, i32
  }
}

</mosaic_0001>

<llo_original>
// kernel: _lambda_.1
$region0: #{_lambda_.1}
  #allocation0 [shape = 'u32[]', space=smem, size = 0x4, offset = 0x4, fixed_abs, tag = 'smem constant byte address 0x4 - core index']
  #allocation1 [shape = 'u32[144,128]{1,0:T(1,128)}', space=vmem, size = 0x12000, scoped, tag = 'internal scratch']
  %s0 = inlined_call_operand.hbm [shape: f32[32,8,128], index: 0, kind: input, shape index: {}]
  %s1 = inlined_call_operand.vmem [shape: f32[32,16,128], index: 1, kind: input, shape index: {}]
  %s2 = inlined_call_operand.hbm [shape: f32[32,16,128], index: 2, kind: input, shape index: {}]
  %s3 = inlined_call_operand.vmem [shape: f32[32,8,16], index: 3, kind: input, shape index: {}]
  %s4 = inlined_call_operand.hbm [shape: f32[128,4], index: 4, kind: input, shape index: {}]
  %s5 = inlined_call_operand.vmem [shape: f32[4,128], index: 5, kind: input, shape index: {}]
  %s6 = inlined_call_operand.hbm [shape: f32[128,128], index: 6, kind: input, shape index: {}]
  %s7 = inlined_call_operand.hbm [shape: f32[128,128], index: 7, kind: input, shape index: {}]
  %s8 = inlined_call_operand.vmem [shape: f32[1,128], index: 8, kind: input, shape index: {}, may-alias: {8,10}]
  %s9 = inlined_call_operand.vmem [shape: f32[1,128], index: 9, kind: input, shape index: {}]
  %s10 = inlined_call_operand.vmem [shape: f32[1,128], index: 10, kind: input, shape index: {}, may-alias: {8,10}]
  %s11 = inlined_call_operand.hbm [shape: f32[32,8,128], index: 11, kind: output, shape index: {0}]
  %s12 = inlined_call_operand.vmem [shape: f32[4,32,8,16], index: 12, kind: output, shape index: {1}]
  %13 = xla_tuple %s11, %s12
  %s14 = sld [smem:[#allocation0]]
  $region139: #{_lambda_.1} parent=0
    _
  %s16 = ssub.s32 1, %s14
  %s17 = scalar_select 0, %s16, %s14
  $region1: #{_lambda_.1} parent=0
    #allocation2 [shape = 'u8[65536]{0}', space=vmem, size = 0x10000, scoped, tag = 'input window, operand 0']
    #allocation3 [shape = 's32[2]{0}', space=sflag, size = 0x8, scoped, tag = 'scoped memory for _lambda_.1']
    #allocation4 [shape = 's32[2]{0}', space=sflag, size = 0x8, scoped, tag = 'scoped memory for _lambda_.1']
    #allocation5 [shape = 'u8[131072]{0}', space=vmem, size = 0x20000, scoped, tag = 'input window, operand 2']
    #allocation6 [shape = 's32[2]{0}', space=sflag, size = 0x8, scoped, tag = 'scoped memory for _lambda_.1']
    #allocation7 [shape = 'u8[65536]{0}', space=vmem, size = 0x10000, scoped, tag = 'input window, operand 4, single buffered']
    #allocation8 [shape = 'u8[65536]{0}', space=vmem, size = 0x10000, scoped, tag = 'input window, operand 6, single buffered']
    #allocation9 [shape = 's32[1]{0}', space=sflag, size = 0x4, scoped, tag = 'scoped memory for _lambda_.1']
    #allocation10 [shape = 'u8[65536]{0}', space=vmem, size = 0x10000, scoped, tag = 'input window, operand 7, single buffered']
    #allocation11 [shape = 'u8[65536]{0}', space=vmem, size = 0x10000, scoped, tag = 'output window, operand 0']
    #allocation12 [shape = 'u8[262144]{0}', space=vmem, size = 0x40000, scoped, tag = 'output window, operand 1']
    %18 = vsyncpa [#allocation3], 0
    %s19 = scalar_lea.sflag [#allocation3], 1
    %20 = vsyncpa %s19, 0
    %21 = vsyncpa [#allocation6], 0
    %s22 = scalar_lea.sflag [#allocation6], 1
    %23 = vsyncpa %s22, 0
    %24 = vsyncpa [#allocation9], 0
    %25 = vsyncpa [#allocation4], 0
    %s26 = scalar_lea.sflag [#allocation4], 1
    %27 = vsyncpa %s26, 0
    loop: start=0, step=1, limit=6
    $region2: #{_lambda_.1} parent=1 // loop_pre_header
      _
    $region3: #{_lambda_.1} parent=1 // loop_header
      %s29 = sphi 0, %s33
      %p30 = scmp.ge.s32.totalorder %s29, 6
      %s39 = sphi 0, %s41
      %s42 = sphi 0, %s39
      %s43 = sphi 0, %s42
      %s59 = sphi 0, %s43
      %s65 = sphi 0, %s67
      %s68 = sphi 0, %s65
      %s69 = sphi 0, %s68
      %s85 = sphi 0, %s69
      %s91 = sphi 0, %s93
      %s94 = sphi 0, %s91
      %s95 = sphi 0, %s94
      %s111 = sphi 0, %s95
      %s117 = sphi 0, %s119
      %s120 = sphi 0, %s117
      %s121 = sphi 0, %s120
      %s137 = sphi 0, %s121
      %s141 = sphi 0, %s141
      %s143 = sphi 0, %s141
      %s144 = sphi 0, %s143
      %s158 = sphi 0, %s144
      %s162 = sphi 0, %s162
      %s164 = sphi 0, %s162
      %s165 = sphi 0, %s164
      %s179 = sphi 0, %s165
      %s183 = sphi 0, %s183
      %s185 = sphi 0, %s183
      %s186 = sphi 0, %s185
      %s200 = sphi 0, %s186
      %s204 = sphi 0, %s204
      %s206 = sphi 0, %s204
      %s207 = sphi 0, %s206
      %s221 = sphi 0, %s207
      %s225 = sphi 0, %s225
      %s227 = sphi 0, %s225
      %s228 = sphi 0, %s227
      %s242 = sphi 0, %s228
      %s246 = sphi 0, %s246
      %s248 = sphi 0, %s246
      %s249 = sphi 0, %s248
      %s263 = sphi 0, %s249
      %s267 = sphi 0, %s267
      %s269 = sphi 0, %s267
      %s270 = sphi 0, %s269
      %s284 = sphi 0, %s270
      %s290 = sphi 0, %s292
      %s293 = sphi 0, %s290
      %s294 = sphi 0, %s293
      %s310 = sphi 0, %s294
      %s316 = sphi 0, %s318
      %s319 = sphi 0, %s316
      %s320 = sphi 0, %s319
      %s336 = sphi 0, %s320
    $region4: #{_lambda_.1} parent=1 // loop_header_branch
      %32 = sbr.rel (%p30) target = $region8
    $region5: #{_lambda_.1} parent=1 // loop_body
      %s34 = ssub.s32 %s29, 1
      %s35 = ssub.s32 %s29, 2
      %s36 = sadd.s32 %s29, 1
      %s37 = ssub.s32 %s29, %s36
      %p38 = scmp.eq.s32.totalorder %s37, 0
      %s40 = sadd.s32 %s39, 1
      %s41 = scalar_select %p38, %s39, %s40
      %p44 = pneg %p38
      %p45 = scmp.eq.s32.totalorder %s29, 3
      %p46 = por %p44, %p45
      %p47 = scmp.ne.s32.totalorder %s39, %s42
      %p48 = scmp.eq.s32.totalorder %s29, 0
      %p49 = por %p47, %p48
      %p50 = scmp.ne.s32.totalorder %s39, %s42
      %p51 = scmp.eq.s32.totalorder %s34, 3
      %p52 = por %p50, %p51
      %p53 = scmp.ne.s32.totalorder %s42, %s43
      %p54 = scmp.eq.s32.totalorder %s34, 0
      %p55 = por %p53, %p54
      %p56 = scmp.ne.s32.totalorder %s42, %s43
      %p57 = scmp.eq.s32.totalorder %s35, 3
      %p58 = por %p56, %p57
      %p60 = scmp.ne.s32.totalorder %s43, %s59
      %p61 = scmp.eq.s32.totalorder %s35, 0
      %p62 = por %p60, %p61
      %s63 = ssub.s32 %s29, %s36
      %p64 = scmp.eq.s32.totalorder %s63, 0
      %s66 = sadd.s32 %s65, 1
      %s67 = scalar_select %p64, %s65, %s66
      %p70 = pneg %p64
      %p71 = scmp.eq.s32.totalorder %s29, 3
      %p72 = por %p70, %p71
      %p73 = scmp.ne.s32.totalorder %s65, %s68
      %p74 = scmp.eq.s32.totalorder %s29, 0
      %p75 = por %p73, %p74
      %p76 = scmp.ne.s32.totalorder %s65, %s68
      %p77 = scmp.eq.s32.totalorder %s34, 3
      %p78 = por %p76, %p77
      %p79 = scmp.ne.s32.totalorder %s68, %s69
      %p80 = scmp.eq.s32.totalorder %s34, 0
      %p81 = por %p79, %p80
      %p82 = scmp.ne.s32.totalorder %s68, %s69
      %p83 = scmp.eq.s32.totalorder %s35, 3
      %p84 = por %p82, %p83
      %p86 = scmp.ne.s32.totalorder %s69, %s85
      %p87 = scmp.eq.s32.totalorder %s35, 0
      %p88 = por %p86, %p87
      %s89 = ssub.s32 %s29, %s36
      %p90 = scmp.eq.s32.totalorder %s89, 0
      %s92 = sadd.s32 %s91, 1
      %s93 = scalar_select %p90, %s91, %s92
      %p96 = pneg %p90
      %p97 = scmp.eq.s32.totalorder %s29, 3
      %p98 = por %p96, %p97
      %p99 = scmp.ne.s32.totalorder %s91, %s94
      %p100 = scmp.eq.s32.totalorder %s29, 0
      %p101 = por %p99, %p100
      %p102 = scmp.ne.s32.totalorder %s91, %s94
      %p103 = scmp.eq.s32.totalorder %s34, 3
      %p104 = por %p102, %p103
      %p105 = scmp.ne.s32.totalorder %s94, %s95
      %p106 = scmp.eq.s32.totalorder %s34, 0
      %p107 = por %p105, %p106
      %p108 = scmp.ne.s32.totalorder %s94, %s95
      %p109 = scmp.eq.s32.totalorder %s35, 3
      %p110 = por %p108, %p109
      %p112 = scmp.ne.s32.totalorder %s95, %s111
      %p113 = scmp.eq.s32.totalorder %s35, 0
      %p114 = por %p112, %p113
      %s115 = ssub.s32 %s29, %s36
      %p116 = scmp.eq.s32.totalorder %s115, 0
      %s118 = sadd.s32 %s117, 1
      %s119 = scalar_select %p116, %s117, %s118
      %p122 = pneg %p116
      %p123 = scmp.eq.s32.totalorder %s29, 3
      %p124 = por %p122, %p123
      %p125 = scmp.ne.s32.totalorder %s117, %s120
      %p126 = scmp.eq.s32.totalorder %s29, 0
      %p127 = por %p125, %p126
      %p128 = scmp.ne.s32.totalorder %s117, %s120
      %p129 = scmp.eq.s32.totalorder %s34, 3
      %p130 = por %p128, %p129
      %p131 = scmp.ne.s32.totalorder %s120, %s121
      %p132 = scmp.eq.s32.totalorder %s34, 0
      %p133 = por %p131, %p132
      %p134 = scmp.ne.s32.totalorder %s120, %s121
      %p135 = scmp.eq.s32.totalorder %s35, 3
      %p136 = por %p134, %p135
      %p138 = scmp.ne.s32.totalorder %s121, %s137
      %p139 = scmp.eq.s32.totalorder %s35, 0
      %p140 = por %p138, %p139
      %s142 = sadd.s32 %s141, 1
      %p145 = scmp.eq.s32.totalorder %s29, 3
      %p146 = scmp.ne.s32.totalorder %s141, %s143
      %p147 = scmp.eq.s32.totalorder %s29, 0
      %p148 = por %p146, %p147
      %p149 = scmp.ne.s32.totalorder %s141, %s143
      %p150 = scmp.eq.s32.totalorder %s34, 3
      %p151 = por %p149, %p150
      %p152 = scmp.ne.s32.totalorder %s143, %s144
      %p153 = scmp.eq.s32.totalorder %s34, 0
      %p154 = por %p152, %p153
      %p155 = scmp.ne.s32.totalorder %s143, %s144
      %p156 = scmp.eq.s32.totalorder %s35, 3
      %p157 = por %p155, %p156
      %p159 = scmp.ne.s32.totalorder %s144, %s158
      %p160 = scmp.eq.s32.totalorder %s35, 0
      %p161 = por %p159, %p160
      %s163 = sadd.s32 %s162, 1
      %p166 = scmp.eq.s32.totalorder %s29, 3
      %p167 = scmp.ne.s32.totalorder %s162, %s164
      %p168 = scmp.eq.s32.totalorder %s29, 0
      %p169 = por %p167, %p168
      %p170 = scmp.ne.s32.totalorder %s162, %s164
      %p171 = scmp.eq.s32.totalorder %s34, 3
      %p172 = por %p170, %p171
      %p173 = scmp.ne.s32.totalorder %s164, %s165
      %p174 = scmp.eq.s32.totalorder %s34, 0
      %p175 = por %p173, %p174
      %p176 = scmp.ne.s32.totalorder %s164, %s165
      %p177 = scmp.eq.s32.totalorder %s35, 3
      %p178 = por %p176, %p177
      %p180 = scmp.ne.s32.totalorder %s165, %s179
      %p181 = scmp.eq.s32.totalorder %s35, 0
      %p182 = por %p180, %p181
      %s184 = sadd.s32 %s183, 1
      %p187 = scmp.eq.s32.totalorder %s29, 3
      %p188 = scmp.ne.s32.totalorder %s183, %s185
      %p189 = scmp.eq.s32.totalorder %s29, 0
      %p190 = por %p188, %p189
      %p191 = scmp.ne.s32.totalorder %s183, %s185
      %p192 = scmp.eq.s32.totalorder %s34, 3
      %p193 = por %p191, %p192
      %p194 = scmp.ne.s32.totalorder %s185, %s186
      %p195 = scmp.eq.s32.totalorder %s34, 0
      %p196 = por %p194, %p195
      %p197 = scmp.ne.s32.totalorder %s185, %s186
      %p198 = scmp.eq.s32.totalorder %s35, 3
      %p199 = por %p197, %p198
      %p201 = scmp.ne.s32.totalorder %s186, %s200
      %p202 = scmp.eq.s32.totalorder %s35, 0
      %p203 = por %p201, %p202
      %s205 = sadd.s32 %s204, 1
      %p208 = scmp.eq.s32.totalorder %s29, 3
      %p209 = scmp.ne.s32.totalorder %s204, %s206
      %p210 = scmp.eq.s32.totalorder %s29, 0
      %p211 = por %p209, %p210
      %p212 = scmp.ne.s32.totalorder %s204, %s206
      %p213 = scmp.eq.s32.totalorder %s34, 3
      %p214 = por %p212, %p213
      %p215 = scmp.ne.s32.totalorder %s206, %s207
      %p216 = scmp.eq.s32.totalorder %s34, 0
      %p217 = por %p215, %p216
      %p218 = scmp.ne.s32.totalorder %s206, %s207
      %p219 = scmp.eq.s32.totalorder %s35, 3
      %p220 = por %p218, %p219
      %p222 = scmp.ne.s32.totalorder %s207, %s221
      %p223 = scmp.eq.s32.totalorder %s35, 0
      %p224 = por %p222, %p223
      %s226 = sadd.s32 %s225, 1
      %p229 = scmp.eq.s32.totalorder %s29, 3
      %p230 = scmp.ne.s32.totalorder %s225, %s227
      %p231 = scmp.eq.s32.totalorder %s29, 0
      %p232 = por %p230, %p231
      %p233 = scmp.ne.s32.totalorder %s225, %s227
      %p234 = scmp.eq.s32.totalorder %s34, 3
      %p235 = por %p233, %p234
      %p236 = scmp.ne.s32.totalorder %s227, %s228
      %p237 = scmp.eq.s32.totalorder %s34, 0
      %p238 = por %p236, %p237
      %p239 = scmp.ne.s32.totalorder %s227, %s228
      %p240 = scmp.eq.s32.totalorder %s35, 3
      %p241 = por %p239, %p240
      %p243 = scmp.ne.s32.totalorder %s228, %s242
      %p244 = scmp.eq.s32.totalorder %s35, 0
      %p245 = por %p243, %p244
      %s247 = sadd.s32 %s246, 1
      %p250 = scmp.eq.s32.totalorder %s29, 3
      %p251 = scmp.ne.s32.totalorder %s246, %s248
      %p252 = scmp.eq.s32.totalorder %s29, 0
      %p253 = por %p251, %p252
      %p254 = scmp.ne.s32.totalorder %s246, %s248
      %p255 = scmp.eq.s32.totalorder %s34, 3
      %p256 = por %p254, %p255
      %p257 = scmp.ne.s32.totalorder %s248, %s249
      %p258 = scmp.eq.s32.totalorder %s34, 0
      %p259 = por %p257, %p258
      %p260 = scmp.ne.s32.totalorder %s248, %s249
      %p261 = scmp.eq.s32.totalorder %s35, 3
      %p262 = por %p260, %p261
      %p264 = scmp.ne.s32.totalorder %s249, %s263
      %p265 = scmp.eq.s32.totalorder %s35, 0
      %p266 = por %p264, %p265
      %s268 = sadd.s32 %s267, 1
      %p271 = scmp.eq.s32.totalorder %s29, 3
      %p272 = scmp.ne.s32.totalorder %s267, %s269
      %p273 = scmp.eq.s32.totalorder %s29, 0
      %p274 = por %p272, %p273
      %p275 = scmp.ne.s32.totalorder %s267, %s269
      %p276 = scmp.eq.s32.totalorder %s34, 3
      %p277 = por %p275, %p276
      %p278 = scmp.ne.s32.totalorder %s269, %s270
      %p279 = scmp.eq.s32.totalorder %s34, 0
      %p280 = por %p278, %p279
      %p281 = scmp.ne.s32.totalorder %s269, %s270
      %p282 = scmp.eq.s32.totalorder %s35, 3
      %p283 = por %p281, %p282
      %p285 = scmp.ne.s32.totalorder %s270, %s284
      %p286 = scmp.eq.s32.totalorder %s35, 0
      %p287 = por %p285, %p286
      %s288 = ssub.s32 %s29, %s36
      %p289 = scmp.eq.s32.totalorder %s288, 0
      %s291 = sadd.s32 %s290, 1
      %s292 = scalar_select %p289, %s290, %s291
      %p295 = pneg %p289
      %p296 = scmp.eq.s32.totalorder %s29, 3
      %p297 = por %p295, %p296
      %p298 = scmp.ne.s32.totalorder %s290, %s293
      %p299 = scmp.eq.s32.totalorder %s29, 0
      %p300 = por %p298, %p299
      %p301 = scmp.ne.s32.totalorder %s290, %s293
      %p302 = scmp.eq.s32.totalorder %s34, 3
      %p303 = por %p301, %p302
      %p304 = scmp.ne.s32.totalorder %s293, %s294
      %p305 = scmp.eq.s32.totalorder %s34, 0
      %p306 = por %p304, %p305
      %p307 = scmp.ne.s32.totalorder %s293, %s294
      %p308 = scmp.eq.s32.totalorder %s35, 3
      %p309 = por %p307, %p308
      %p311 = scmp.ne.s32.totalorder %s294, %s310
      %p312 = scmp.eq.s32.totalorder %s35, 0
      %p313 = por %p311, %p312
      %s314 = ssub.s32 %s29, %s36
      %p315 = scmp.eq.s32.totalorder %s314, 0
      %s317 = sadd.s32 %s316, 1
      %s318 = scalar_select %p315, %s316, %s317
      %p321 = pneg %p315
      %p322 = scmp.eq.s32.totalorder %s29, 3
      %p323 = por %p321, %p322
      %p324 = scmp.ne.s32.totalorder %s316, %s319
      %p325 = scmp.eq.s32.totalorder %s29, 0
      %p326 = por %p324, %p325
      %p327 = scmp.ne.s32.totalorder %s316, %s319
      %p328 = scmp.eq.s32.totalorder %s34, 3
      %p329 = por %p327, %p328
      %p330 = scmp.ne.s32.totalorder %s319, %s320
      %p331 = scmp.eq.s32.totalorder %s34, 0
      %p332 = por %p330, %p331
      %p333 = scmp.ne.s32.totalorder %s319, %s320
      %p334 = scmp.eq.s32.totalorder %s35, 3
      %p335 = por %p333, %p334
      %p337 = scmp.ne.s32.totalorder %s320, %s336
      %p338 = scmp.eq.s32.totalorder %s35, 0
      %p339 = por %p337, %p338
      %p340 = scmp.le.s32.totalorder 1, %s29
      %p341 = scmp.lt.s32.totalorder %s29, 5
      %p342 = pnand %p340, %p341
      %p343 = pneg %p342
      // Predicated region
      $region9: #{_lambda_.1} parent=5 // pred_check
        _
      $region10: #{_lambda_.1} parent=5 // pred_check_branch
        %345 = sbr.rel (%p342) target = $region12
      $region11: #{_lambda_.1} parent=5 // pred_region
        %s346 = ssub.s32 %s29, 1
        // Predicated region
        $region13: #{_lambda_.1} parent=11 // pred_check
          %p347 = pneg %p154
        $region14: #{_lambda_.1} parent=11 // pred_check_branch
          %349 = sbr.rel (%p347) target = $region16
        $region15: #{_lambda_.1} parent=11 // pred_region
          %s351 = ssub.s32 2048, 2048
          %352 = vsyncadd [#allocation6], %s351
          %s353 = sshll.u32 [#allocation7], 4
          %s354 = int_to_ptr.vmem [resolvable:$true] %s353
          %359 = dma.hbm_to_vmem [thread:$0]  %s4, 2048, %s354, [#allocation6], 128, 128, 8
        $region16: #{_lambda_.1} parent=11 // pred_fallthru
          _
        // Predicated region
        $region17: #{_lambda_.1} parent=11 // pred_check
          %p360 = pneg %p175
        $region18: #{_lambda_.1} parent=11 // pred_check_branch
          %362 = sbr.rel (%p360) target = $region20
        $region19: #{_lambda_.1} parent=11 // pred_region
          _
        $region20: #{_lambda_.1} parent=11 // pred_fallthru
          _
        // Predicated region
        $region21: #{_lambda_.1} parent=11 // pred_check
          %p363 = pneg %p196
        $region22: #{_lambda_.1} parent=11 // pred_check_branch
          %365 = sbr.rel (%p363) target = $region24
        $region23: #{_lambda_.1} parent=11 // pred_region
          %s367 = ssub.s32 2048, 2048
          %368 = vsyncadd [#allocation9], %s367
          %s369 = sshll.u32 [#allocation8], 4
          %s370 = int_to_ptr.vmem [resolvable:$true] %s369
          %375 = dma.hbm_to_vmem [thread:$0]  %s6, 2048, %s370, [#allocation9], 128, 128, 8
        $region24: #{_lambda_.1} parent=11 // pred_fallthru
          _
        // Predicated region
        $region25: #{_lambda_.1} parent=11 // pred_check
          %p376 = pneg %p217
        $region26: #{_lambda_.1} parent=11 // pred_check_branch
          %378 = sbr.rel (%p376) target = $region28
        $region27: #{_lambda_.1} parent=11 // pred_region
          %s380 = ssub.s32 2048, 2048
          %381 = vsyncadd [#allocation9], %s380
          %s382 = sshll.u32 [#allocation10], 4
          %s383 = int_to_ptr.vmem [resolvable:$true] %s382
          %388 = dma.hbm_to_vmem [thread:$0]  %s7, 2048, %s383, [#allocation9], 128, 128, 8
        $region28: #{_lambda_.1} parent=11 // pred_fallthru
          _
        // Predicated region
        $region29: #{_lambda_.1} parent=11 // pred_check
          %p389 = pneg %p238
        $region30: #{_lambda_.1} parent=11 // pred_check_branch
          %391 = sbr.rel (%p389) target = $region32
        $region31: #{_lambda_.1} parent=11 // pred_region
          _
        $region32: #{_lambda_.1} parent=11 // pred_fallthru
          _
        // Predicated region
        $region33: #{_lambda_.1} parent=11 // pred_check
          %p392 = pneg %p259
        $region34: #{_lambda_.1} parent=11 // pred_check_branch
          %394 = sbr.rel (%p392) target = $region36
        $region35: #{_lambda_.1} parent=11 // pred_region
          _
        $region36: #{_lambda_.1} parent=11 // pred_fallthru
          _
        // Predicated region
        $region37: #{_lambda_.1} parent=11 // pred_check
          %p395 = pneg %p280
        $region38: #{_lambda_.1} parent=11 // pred_check_branch
          %397 = sbr.rel (%p395) target = $region40
        $region39: #{_lambda_.1} parent=11 // pred_region
          _
        $region40: #{_lambda_.1} parent=11 // pred_fallthru
          _
      $region12: #{_lambda_.1} parent=5 // pred_fallthru
        _
      %p398 = scmp.lt.s32.totalorder %s29, 4
      // Predicated region
      $region41: #{_lambda_.1} parent=5 // pred_check
        %p399 = pneg %p398
      $region42: #{_lambda_.1} parent=5 // pred_check_branch
        %401 = sbr.rel (%p399) target = $region44
      $region43: #{_lambda_.1} parent=5 // pred_region
        // Predicated region
        $region45: #{_lambda_.1} parent=43 // pred_check
          %p402 = pneg %p49
        $region46: #{_lambda_.1} parent=43 // pred_check_branch
          %404 = sbr.rel (%p402) target = $region48
        $region47: #{_lambda_.1} parent=43 // pred_region
          %s405 = sand.u32 %s39, 1
          %s406 = scalar_lea.sflag [#allocation3], %s405
          %s407 = sand.u32 %s39, 1
          %s408 = smul.addr %s407, 64
          %s409 = scalar_lea.vmem [#allocation2], %s408
          %s410 = smul.u32 8, %s29
          %s412 = ssub.s32 1024, 1024
          %413 = vsyncadd %s406, %s412
          %s414 = smul.addr %s410, 128
          %s415 = scalar_lea.hbm %s0, %s414
          %s416 = sshll.u32 %s409, 4
          %s417 = int_to_ptr.vmem [resolvable:$true] %s416
          %422 = dma.hbm_to_vmem [thread:$0]  %s415, 1024, %s417, %s406, 128, 128, 8
        $region48: #{_lambda_.1} parent=43 // pred_fallthru
          _
        // Predicated region
        $region49: #{_lambda_.1} parent=43 // pred_check
          %p423 = pneg %p75
        $region50: #{_lambda_.1} parent=43 // pred_check_branch
          %425 = sbr.rel (%p423) target = $region52
        $region51: #{_lambda_.1} parent=43 // pred_region
          %s426 = smul.u32 8, %s29
          %p427 = scmp.lt.s32.totalorder %s426, 31
          %s428 = scalar_select %p427, %s426, 31
          %s429 = smul.addr %s428, 2
          %s430 = smul.addr %s429, 8
          %s431 = scalar_lea.vmem %s1, %s430
          %s432 = smul.u32 8, %s29
        $region52: #{_lambda_.1} parent=43 // pred_fallthru
          _
        // Predicated region
        $region53: #{_lambda_.1} parent=43 // pred_check
          %p433 = pneg %p101
        $region54: #{_lambda_.1} parent=43 // pred_check_branch
          %435 = sbr.rel (%p433) target = $region56
        $region55: #{_lambda_.1} parent=43 // pred_region
          %s436 = sand.u32 %s29, 1
          %s437 = scalar_lea.sflag [#allocation6], %s436
          %s438 = sand.u32 %s91, 1
          %s439 = smul.addr %s438, 128
          %s440 = scalar_lea.vmem [#allocation5], %s439
          %s441 = smul.u32 8, %s29
          %s443 = ssub.s32 2048, 2048
          %444 = vsyncadd %s437, %s443
          %s445 = smul.addr %s441, 2
          %s446 = smul.addr %s445, 128
          %s447 = scalar_lea.hbm %s2, %s446
          %s448 = sshll.u32 %s440, 4
          %s449 = int_to_ptr.vmem [resolvable:$true] %s448
          %454 = dma.hbm_to_vmem [thread:$0]  %s447, 2048, %s449, %s437, 128, 128, 8
        $region56: #{_lambda_.1} parent=43 // pred_fallthru
          _
        // Predicated region
        $region57: #{_lambda_.1} parent=43 // pred_check
          %p455 = pneg %p127
        $region58: #{_lambda_.1} parent=43 // pred_check_branch
          %457 = sbr.rel (%p455) target = $region60
        $region59: #{_lambda_.1} parent=43 // pred_region
          %s458 = smul.u32 8, %s29
          %p459 = scmp.lt.s32.totalorder %s458, 31
          %s460 = scalar_select %p459, %s458, 31
          %s461 = smul.addr %s460, 8
          %s462 = scalar_lea.vmem %s3, %s461
          %s463 = smul.u32 8, %s29
        $region60: #{_lambda_.1} parent=43 // pred_fallthru
          _
      $region44: #{_lambda_.1} parent=5 // pred_fallthru
        _
      %p464 = scmp.le.s32.totalorder 1, %s29
      %p465 = scmp.lt.s32.totalorder %s29, 5
      %p466 = pnand %p464, %p465
      %p467 = pneg %p466
      // Predicated region
      $region61: #{_lambda_.1} parent=5 // pred_check
        _
      $region62: #{_lambda_.1} parent=5 // pred_check_branch
        %469 = sbr.rel (%p466) target = $region64
      $region63: #{_lambda_.1} parent=5 // pred_region
        %s470 = ssub.s32 %s29, 1
        %s471 = sand.u32 %s42, 1
        %s472 = scalar_lea.sflag [#allocation3], %s471
        %s473 = sand.u32 %s42, 1
        %s474 = smul.addr %s473, 64
        %s475 = scalar_lea.vmem [#allocation2], %s474
        // Predicated region
        $region65: #{_lambda_.1} parent=63 // pred_check
          %p476 = pneg %p55
        $region66: #{_lambda_.1} parent=63 // pred_check_branch
          %478 = sbr.rel (%p476) target = $region68
        $region67: #{_lambda_.1} parent=63 // pred_region
          %479 = dma.done %s472, 1024
        $region68: #{_lambda_.1} parent=63 // pred_fallthru
          _
        %s480 = sand.u32 %s34, 1
        %s481 = scalar_lea.sflag [#allocation6], %s480
        %s482 = sand.u32 %s94, 1
        %s483 = smul.addr %s482, 128
        %s484 = scalar_lea.vmem [#allocation5], %s483
        // Predicated region
        $region69: #{_lambda_.1} parent=63 // pred_check
          %p485 = pneg %p107
        $region70: #{_lambda_.1} parent=63 // pred_check_branch
          %487 = sbr.rel (%p485) target = $region72
        $region71: #{_lambda_.1} parent=63 // pred_region
          %488 = dma.done %s481, 2048
        $region72: #{_lambda_.1} parent=63 // pred_fallthru
          _
        // Predicated region
        $region73: #{_lambda_.1} parent=63 // pred_check
          %p489 = pneg %p154
        $region74: #{_lambda_.1} parent=63 // pred_check_branch
          %491 = sbr.rel (%p489) target = $region76
        $region75: #{_lambda_.1} parent=63 // pred_region
          %492 = dma.done [#allocation6], 2048
        $region76: #{_lambda_.1} parent=63 // pred_fallthru
          _
        // Predicated region
        $region77: #{_lambda_.1} parent=63 // pred_check
          %p493 = pneg %p196
        $region78: #{_lambda_.1} parent=63 // pred_check_branch
          %495 = sbr.rel (%p493) target = $region80
        $region79: #{_lambda_.1} parent=63 // pred_region
          %496 = dma.done [#allocation9], 2048
        $region80: #{_lambda_.1} parent=63 // pred_fallthru
          _
        // Predicated region
        $region81: #{_lambda_.1} parent=63 // pred_check
          %p497 = pneg %p217
        $region82: #{_lambda_.1} parent=63 // pred_check_branch
          %499 = sbr.rel (%p497) target = $region84
        $region83: #{_lambda_.1} parent=63 // pred_region
          %500 = dma.done [#allocation9], 2048
        $region84: #{_lambda_.1} parent=63 // pred_fallthru
          _
        %s501 = sand.u32 %s42, 1
        %s502 = scalar_lea.sflag [#allocation3], %s501
        %s503 = sand.u32 %s42, 1
        %s504 = smul.addr %s503, 64
        %s505 = scalar_lea.vmem [#allocation2], %s504
        %p506 = pneg %p55
        %p507 = pneg %p52
        %s508 = smul.u32 8, %s34
        %p509 = scmp.lt.s32.totalorder %s508, 31
        %s510 = scalar_select %p509, %s508, 31
        %s511 = smul.addr %s510, 2
        %s512 = smul.addr %s511, 8
        %s513 = scalar_lea.vmem %s1, %s512
        %p514 = pneg %p81
        %p515 = pneg %p78
        %s516 = sand.u32 %s34, 1
        %s517 = scalar_lea.sflag [#allocation6], %s516
        %s518 = sand.u32 %s94, 1
        %s519 = smul.addr %s518, 128
        %s520 = scalar_lea.vmem [#allocation5], %s519
        %p521 = pneg %p107
        %p522 = pneg %p104
        %s523 = smul.u32 8, %s34
        %p524 = scmp.lt.s32.totalorder %s523, 31
        %s525 = scalar_select %p524, %s523, 31
        %s526 = smul.addr %s525, 8
        %s527 = scalar_lea.vmem %s3, %s526
        %p528 = pneg %p133
        %p529 = pneg %p130
        %p530 = pneg %p154
        %p531 = pneg %p151
        %p532 = pneg %p175
        %p533 = pneg %p172
        %p534 = pneg %p196
        %p535 = pneg %p193
        %p536 = pneg %p217
        %p537 = pneg %p214
        %p538 = pneg %p238
        %p539 = pneg %p235
        %p540 = pneg %p259
        %p541 = pneg %p256
        %p542 = pneg %p280
        %p543 = pneg %p277
        %p544 = pneg %p306
        %p545 = pneg %p303
        %s546 = sand.u32 %s293, 1
        %s547 = scalar_lea.sflag [#allocation4], %s546
        %s548 = sand.u32 %s293, 1
        %s549 = smul.addr %s548, 64
        %s550 = scalar_lea.vmem [#allocation11], %s549
        %p551 = pneg %p332
        %p552 = pneg %p329
        %s553 = sand.u32 %s319, 1
        %s554 = sand.u32 %s319, 1
        %s555 = smul.addr %s554, 256
        %s556 = scalar_lea.vmem [#allocation12], %s555
        %s557 = smul.u32 8, %s34
        %s558 = smul.u32 8, %s34
        %p559 = scmp.lt.s32.totalorder %s558, 31
        %s560 = scalar_select %p559, %s558, 31
        %s561 = smul.addr %s560, 2
        %s562 = smul.addr %s561, 8
        %s563 = scalar_lea.vmem %s1, %s562
        %s564 = smul.u32 8, %s34
        %s565 = smul.u32 8, %s34
        %s566 = smul.u32 8, %s34
        %p567 = scmp.lt.s32.totalorder %s566, 31
        %s568 = scalar_select %p567, %s566, 31
        %s569 = smul.addr %s568, 8
        %s570 = scalar_lea.vmem %s3, %s569
        %s571 = smul.u32 8, %s34
        %s572 = smul.u32 8, %s34
        %s573 = smul.u32 8, %s34
        %v574 = vld [vmem:[%s475] sm:$0xff]
        %v575 = vld [vmem:[%s475 + $0x8] sm:$0xff]
        %v576 = vld [vmem:[%s475 + $0x10] sm:$0xff]
        %v577 = vld [vmem:[%s475 + $0x18] sm:$0xff]
        %v578 = vld [vmem:[%s475 + $0x20] sm:$0xff]
        %v579 = vld [vmem:[%s475 + $0x28] sm:$0xff]
        %v580 = vld [vmem:[%s475 + $0x30] sm:$0xff]
        %v581 = vld [vmem:[%s475 + $0x38] sm:$0xff]
        %v582 = vld [vmem:[%s563] sm:$0xff]
        %v583 = vld [vmem:[%s563 + $0x8] sm:$0xff]
        %v584 = vld [vmem:[%s563 + $0x10] sm:$0xff]
        %v585 = vld [vmem:[%s563 + $0x18] sm:$0xff]
        %v586 = vld [vmem:[%s563 + $0x20] sm:$0xff]
        %v587 = vld [vmem:[%s563 + $0x28] sm:$0xff]
        %v588 = vld [vmem:[%s563 + $0x30] sm:$0xff]
        %v589 = vld [vmem:[%s563 + $0x38] sm:$0xff]
        %v590 = vld [vmem:[%s563 + $0x40] sm:$0xff]
        %v591 = vld [vmem:[%s563 + $0x48] sm:$0xff]
        %v592 = vld [vmem:[%s563 + $0x50] sm:$0xff]
        %v593 = vld [vmem:[%s563 + $0x58] sm:$0xff]
        %v594 = vld [vmem:[%s563 + $0x60] sm:$0xff]
        %v595 = vld [vmem:[%s563 + $0x68] sm:$0xff]
        %v596 = vld [vmem:[%s563 + $0x70] sm:$0xff]
        %v597 = vld [vmem:[%s563 + $0x78] sm:$0xff]
        %v598 = vld [vmem:[%s484] sm:$0xff]
        %v599 = vld [vmem:[%s484 + $0x8] sm:$0xff]
        %v600 = vld [vmem:[%s484 + $0x10] sm:$0xff]
        %v601 = vld [vmem:[%s484 + $0x18] sm:$0xff]
        %v602 = vld [vmem:[%s484 + $0x20] sm:$0xff]
        %v603 = vld [vmem:[%s484 + $0x28] sm:$0xff]
        %v604 = vld [vmem:[%s484 + $0x30] sm:$0xff]
        %v605 = vld [vmem:[%s484 + $0x38] sm:$0xff]
        %v606 = vld [vmem:[%s484 + $0x40] sm:$0xff]
        %v607 = vld [vmem:[%s484 + $0x48] sm:$0xff]
        %v608 = vld [vmem:[%s484 + $0x50] sm:$0xff]
        %v609 = vld [vmem:[%s484 + $0x58] sm:$0xff]
        %v610 = vld [vmem:[%s484 + $0x60] sm:$0xff]
        %v611 = vld [vmem:[%s484 + $0x68] sm:$0xff]
        %v612 = vld [vmem:[%s484 + $0x70] sm:$0xff]
        %v613 = vld [vmem:[%s484 + $0x78] sm:$0xff]
        %v614 = vld [vmem:[%s570] sm:$0xff]
        %v615 = vld [vmem:[%s570 + $0x8] sm:$0xff]
        %v616 = vld [vmem:[%s570 + $0x10] sm:$0xff]
        %v617 = vld [vmem:[%s570 + $0x18] sm:$0xff]
        %v618 = vld [vmem:[%s570 + $0x20] sm:$0xff]
        %v619 = vld [vmem:[%s570 + $0x28] sm:$0xff]
        %v620 = vld [vmem:[%s570 + $0x30] sm:$0xff]
        %v621 = vld [vmem:[%s570 + $0x38] sm:$0xff]
        %v622 = vld [vmem:[#allocation7] sm:$0xff]
        %v623 = vld [vmem:[#allocation7 + $0x8] sm:$0xff]
        %v624 = vld [vmem:[#allocation7 + $0x10] sm:$0xff]
        %v625 = vld [vmem:[#allocation7 + $0x18] sm:$0xff]
        %v626 = vld [vmem:[#allocation7 + $0x20] sm:$0xff]
        %v627 = vld [vmem:[#allocation7 + $0x28] sm:$0xff]
        %v628 = vld [vmem:[#allocation7 + $0x30] sm:$0xff]
        %v629 = vld [vmem:[#allocation7 + $0x38] sm:$0xff]
        %v630 = vld [vmem:[#allocation7 + $0x40] sm:$0xff]
        %v631 = vld [vmem:[#allocation7 + $0x48] sm:$0xff]
        %v632 = vld [vmem:[#allocation7 + $0x50] sm:$0xff]
        %v633 = vld [vmem:[#allocation7 + $0x58] sm:$0xff]
        %v634 = vld [vmem:[#allocation7 + $0x60] sm:$0xff]
        %v635 = vld [vmem:[#allocation7 + $0x68] sm:$0xff]
        %v636 = vld [vmem:[#allocation7 + $0x70] sm:$0xff]
        %v637 = vld [vmem:[#allocation7 + $0x78] sm:$0xff]
        %638 = vmatprep.subr.mxu0 0.0
        %639 = vmatpush1.msra.mxu0 %v622
        %640 = vmatprep.subr.mxu0 0.0
        %641 = vmatpush1.msra.mxu0 %v623
        %642 = vmatprep.subr.mxu0 0.0
        %643 = vmatpush1.msra.mxu0 %v624
        %644 = vmatprep.subr.mxu0 0.0
        %645 = vmatpush1.msra.mxu0 %v625
        %646 = vmatprep.subr.mxu0 0.0
        %647 = vmatpush1.msra.mxu0 %v626
        %648 = vmatprep.subr.mxu0 0.0
        %649 = vmatpush1.msra.mxu0 %v627
        %650 = vmatprep.subr.mxu0 0.0
        %651 = vmatpush1.msra.mxu0 %v628
        %652 = vmatprep.subr.mxu0 0.0
        %653 = vmatpush1.msra.mxu0 %v629
        %654 = vmatprep.subr.mxu0 0.0
        %655 = vmatpush1.msra.mxu0 %v630
        %656 = vmatprep.subr.mxu0 0.0
        %657 = vmatpush1.msra.mxu0 %v631
        %658 = vmatprep.subr.mxu0 0.0
        %659 = vmatpush1.msra.mxu0 %v632
        %660 = vmatprep.subr.mxu0 0.0
        %661 = vmatpush1.msra.mxu0 %v633
        %662 = vmatprep.subr.mxu0 0.0
        %663 = vmatpush1.msra.mxu0 %v634
        %664 = vmatprep.subr.mxu0 0.0
        %665 = vmatpush1.msra.mxu0 %v635
        %666 = vmatprep.subr.mxu0 0.0
        %667 = vmatpush1.msra.mxu0 %v636
        %668 = vmatprep.subr.mxu0 0.0
        %669 = vmatpush1.msra.mxu0 %v637
        %670 = vmatprep.subr.mxu0 0.0
        %671 = vmatpush1.msra.mxu0 0.0
        %672 = vmatprep.subr.mxu0 0.0
        %673 = vmatpush1.msra.mxu0 0.0
        %674 = vmatprep.subr.mxu0 0.0
        %675 = vmatpush1.msra.mxu0 0.0
        %676 = vmatprep.subr.mxu0 0.0
        %677 = vmatpush1.msra.mxu0 0.0
        %678 = vmatprep.subr.mxu0 0.0
        %679 = vmatpush1.msra.mxu0 0.0
        %680 = vmatprep.subr.mxu0 0.0
        %681 = vmatpush1.msra.mxu0 0.0
        %682 = vmatprep.subr.mxu0 0.0
        %683 = vmatpush1.msra.mxu0 0.0
        %684 = vmatprep.subr.mxu0 0.0
        %685 = vmatpush1.msra.mxu0 0.0
        %686 = vmatprep.subr.mxu0 0.0
        %687 = vmatpush1.msra.mxu0 0.0
        %688 = vmatprep.subr.mxu0 0.0
        %689 = vmatpush1.msra.mxu0 0.0
        %690 = vmatprep.subr.mxu0 0.0
        %691 = vmatpush1.msra.mxu0 0.0
        %692 = vmatprep.subr.mxu0 0.0
        %693 = vmatpush1.msra.mxu0 0.0
        %694 = vmatprep.subr.mxu0 0.0
        %695 = vmatpush1.msra.mxu0 0.0
        %696 = vmatprep.subr.mxu0 0.0
        %697 = vmatpush1.msra.mxu0 0.0
        %698 = vmatprep.subr.mxu0 0.0
        %699 = vmatpush1.msra.mxu0 0.0
        %700 = vmatprep.subr.mxu0 0.0
        %701 = vmatpush1.msra.mxu0 0.0
        %702 = vmatprep.mubr.f32.mxu0 0.0
        %703 = vmatmul.mubr.f32.gmra.mrb[0].mxu0 %v574
        %v704 = vpop.f32.mrb[0].mxu0
        %v705 = vadd.f32 0.0, %v704
        %v706 = vpop.f32.mrb[0].mxu0
        %707 = vmatprep.mubr.f32.mxu0 0.0
        %708 = vmatmul.mubr.f32.gmra.mrb[0].mxu0 %v575
        %v709 = vpop.f32.mrb[0].mxu0
        %v710 = vadd.f32 0.0, %v709
        %v711 = vpop.f32.mrb[0].mxu0
        %712 = vmatprep.mubr.f32.mxu0 0.0
        %713 = vmatmul.mubr.f32.gmra.mrb[0].mxu0 %v576
        %v714 = vpop.f32.mrb[0].mxu0
        %v715 = vadd.f32 0.0, %v714
        %v716 = vpop.f32.mrb[0].mxu0
        %717 = vmatprep.mubr.f32.mxu0 0.0
        %718 = vmatmul.mubr.f32.gmra.mrb[0].mxu0 %v577
        %v719 = vpop.f32.mrb[0].mxu0
        %v720 = vadd.f32 0.0, %v719
        %v721 = vpop.f32.mrb[0].mxu0
        %722 = vmatprep.mubr.f32.mxu0 0.0
        %723 = vmatmul.mubr.f32.gmra.mrb[0].mxu0 %v578
        %v724 = vpop.f32.mrb[0].mxu0
        %v725 = vadd.f32 0.0, %v724
        %v726 = vpop.f32.mrb[0].mxu0
        %727 = vmatprep.mubr.f32.mxu0 0.0
        %728 = vmatmul.mubr.f32.gmra.mrb[0].mxu0 %v579
        %v729 = vpop.f32.mrb[0].mxu0
        %v730 = vadd.f32 0.0, %v729
        %v731 = vpop.f32.mrb[0].mxu0
        %732 = vmatprep.mubr.f32.mxu0 0.0
        %733 = vmatmul.mubr.f32.gmra.mrb[0].mxu0 %v580
        %v734 = vpop.f32.mrb[0].mxu0
        %v735 = vadd.f32 0.0, %v734
        %v736 = vpop.f32.mrb[0].mxu0
        %737 = vmatprep.mubr.f32.mxu0 0.0
        %738 = vmatmul.mubr.f32.gmra.mrb[0].mxu0 %v581
        %v739 = vpop.f32.mrb[0].mxu0
        %v740 = vadd.f32 0.0, %v739
        %v741 = vpop.f32.mrb[0].mxu0
        %742 = vdwg.mxu0
        %v743 = vld [vmem:[%s5] sm:$0xf]
        %744 = vmatprep.subr.mxu0 0.0
        %745 = vmatpush1.xpose.msra.mxu0 %v582
        %746 = vmatprep.subr.mxu0 0.0
        %747 = vmatpush1.xpose.msra.mxu0 %v583
        %748 = vmatprep.subr.mxu0 0.0
        %749 = vmatpush1.xpose.msra.mxu0 0.0
        %750 = vmatprep.subr.mxu0 0.0
        %751 = vmatpush1.xpose.msra.mxu0 0.0
        %752 = vmatprep.subr.mxu0 0.0
        %753 = vmatpush1.xpose.msra.mxu0 0.0
        %754 = vmatprep.subr.mxu0 0.0
        %755 = vmatpush1.xpose.msra.mxu0 0.0
        %756 = vmatprep.subr.mxu0 0.0
        %757 = vmatpush1.xpose.msra.mxu0 0.0
        %758 = vmatprep.subr.mxu0 0.0
        %759 = vmatpush1.xpose.msra.mxu0 0.0
        %760 = vmatprep.subr.mxu0 0.0
        %761 = vmatpush1.xpose.msra.mxu0 0.0
        %762 = vmatprep.subr.mxu0 0.0
        %763 = vmatpush1.xpose.msra.mxu0 0.0
        %764 = vmatprep.subr.mxu0 0.0
        %765 = vmatpush1.xpose.msra.mxu0 0.0
        %766 = vmatprep.subr.mxu0 0.0
        %767 = vmatpush1.xpose.msra.mxu0 0.0
        %768 = vmatprep.subr.mxu0 0.0
        %769 = vmatpush1.xpose.msra.mxu0 0.0
        %770 = vmatprep.subr.mxu0 0.0
        %771 = vmatpush1.xpose.msra.mxu0 0.0
        %772 = vmatprep.subr.mxu0 0.0
        %773 = vmatpush1.xpose.msra.mxu0 0.0
        %774 = vmatprep.subr.mxu0 0.0
        %775 = vmatpush1.xpose.msra.mxu0 0.0
        %776 = vmatprep.subr.mxu0 0.0
        %777 = vmatpush1.xpose.msra.mxu0 0.0
        %778 = vmatprep.subr.mxu0 0.0
        %779 = vmatpush1.xpose.msra.mxu0 0.0
        %780 = vmatprep.subr.mxu0 0.0
        %781 = vmatpush1.xpose.msra.mxu0 0.0
        %782 = vmatprep.subr.mxu0 0.0
        %783 = vmatpush1.xpose.msra.mxu0 0.0
        %784 = vmatprep.subr.mxu0 0.0
        %785 = vmatpush1.xpose.msra.mxu0 0.0
        %786 = vmatprep.subr.mxu0 0.0
        %787 = vmatpush1.xpose.msra.mxu0 0.0
        %788 = vmatprep.subr.mxu0 0.0
        %789 = vmatpush1.xpose.msra.mxu0 0.0
        %790 = vmatprep.subr.mxu0 0.0
        %791 = vmatpush1.xpose.msra.mxu0 0.0
        %792 = vmatprep.subr.mxu0 0.0
        %793 = vmatpush1.xpose.msra.mxu0 0.0
        %794 = vmatprep.subr.mxu0 0.0
        %795 = vmatpush1.xpose.msra.mxu0 0.0
        %796 = vmatprep.subr.mxu0 0.0
        %797 = vmatpush1.xpose.msra.mxu0 0.0
        %798 = vmatprep.subr.mxu0 0.0
        %799 = vmatpush1.xpose.msra.mxu0 0.0
        %800 = vmatprep.subr.mxu0 0.0
        %801 = vmatpush1.xpose.msra.mxu0 0.0
        %802 = vmatprep.subr.mxu0 0.0
        %803 = vmatpush1.xpose.msra.mxu0 0.0
        %804 = vmatprep.subr.mxu0 0.0
        %805 = vmatpush1.xpose.msra.mxu0 0.0
        %806 = vmatprep.subr.mxu0 0.0
        %807 = vmatpush1.xpose.msra.mxu0 0.0
        %808 = vmatprep.mubr.f32.mxu0 0.0
        %809 = vmatmul.mubr.f32.gmra.mrb[0].mxu0 %v743
        %v810 = vpop.f32.mrb[0].mxu0
        %v811 = vadd.f32 0.0, %v810
        %v812 = vpop.f32.mrb[0].mxu0
        %813 = vdwg.mxu0
        %814 = vmatprep.subr.mxu0 0.0
        %815 = vmatpush1.xpose.msra.mxu0 %v584
        %816 = vmatprep.subr.mxu0 0.0
        %817 = vmatpush1.xpose.msra.mxu0 %v585
        %818 = vmatprep.subr.mxu0 0.0
        %819 = vmatpush1.xpose.msra.mxu0 0.0
        %820 = vmatprep.subr.mxu0 0.0
        %821 = vmatpush1.xpose.msra.mxu0 0.0
        %822 = vmatprep.subr.mxu0 0.0
        %823 = vmatpush1.xpose.msra.mxu0 0.0
        %824 = vmatprep.subr.mxu0 0.0
        %825 = vmatpush1.xpose.msra.mxu0 0.0
        %826 = vmatprep.subr.mxu0 0.0
        %827 = vmatpush1.xpose.msra.mxu0 0.0
        %828 = vmatprep.subr.mxu0 0.0
        %829 = vmatpush1.xpose.msra.mxu0 0.0
        %830 = vmatprep.subr.mxu0 0.0
        %831 = vmatpush1.xpose.msra.mxu0 0.0
        %832 = vmatprep.subr.mxu0 0.0
        %833 = vmatpush1.xpose.msra.mxu0 0.0
        %834 = vmatprep.subr.mxu0 0.0
        %835 = vmatpush1.xpose.msra.mxu0 0.0
        %836 = vmatprep.subr.mxu0 0.0
        %837 = vmatpush1.xpose.msra.mxu0 0.0
        %838 = vmatprep.subr.mxu0 0.0
        %839 = vmatpush1.xpose.msra.mxu0 0.0
        %840 = vmatprep.subr.mxu0 0.0
        %841 = vmatpush1.xpose.msra.mxu0 0.0
        %842 = vmatprep.subr.mxu0 0.0
        %843 = vmatpush1.xpose.msra.mxu0 0.0
        %844 = vmatprep.subr.mxu0 0.0
        %845 = vmatpush1.xpose.msra.mxu0 0.0
        %846 = vmatprep.subr.mxu0 0.0
        %847 = vmatpush1.xpose.msra.mxu0 0.0
        %848 = vmatprep.subr.mxu0 0.0
        %849 = vmatpush1.xpose.msra.mxu0 0.0
        %850 = vmatprep.subr.mxu0 0.0
        %851 = vmatpush1.xpose.msra.mxu0 0.0
        %852 = vmatprep.subr.mxu0 0.0
        %853 = vmatpush1.xpose.msra.mxu0 0.0
        %854 = vmatprep.subr.mxu0 0.0
        %855 = vmatpush1.xpose.msra.mxu0 0.0
        %856 = vmatprep.subr.mxu0 0.0
        %857 = vmatpush1.xpose.msra.mxu0 0.0
        %858 = vmatprep.subr.mxu0 0.0
        %859 = vmatpush1.xpose.msra.mxu0 0.0
        %860 = vmatprep.subr.mxu0 0.0
        %861 = vmatpush1.xpose.msra.mxu0 0.0
        %862 = vmatprep.subr.mxu0 0.0
        %863 = vmatpush1.xpose.msra.mxu0 0.0
        %864 = vmatprep.subr.mxu0 0.0
        %865 = vmatpush1.xpose.msra.mxu0 0.0
        %866 = vmatprep.subr.mxu0 0.0
        %867 = vmatpush1.xpose.msra.mxu0 0.0
        %868 = vmatprep.subr.mxu0 0.0
        %869 = vmatpush1.xpose.msra.mxu0 0.0
        %870 = vmatprep.subr.mxu0 0.0
        %871 = vmatpush1.xpose.msra.mxu0 0.0
        %872 = vmatprep.subr.mxu0 0.0
        %873 = vmatpush1.xpose.msra.mxu0 0.0
        %874 = vmatprep.subr.mxu0 0.0
        %875 = vmatpush1.xpose.msra.mxu0 0.0
        %876 = vmatprep.subr.mxu0 0.0
        %877 = vmatpush1.xpose.msra.mxu0 0.0
        %878 = vmatprep.mubr.f32.mxu0 0.0
        %879 = vmatmul.mubr.f32.gmra.mrb[0].mxu0 %v743
        %v880 = vpop.f32.mrb[0].mxu0
        %v881 = vadd.f32 0.0, %v880
        %v882 = vpop.f32.mrb[0].mxu0
        %883 = vdwg.mxu0
        %884 = vmatprep.subr.mxu0 0.0
        %885 = vmatpush1.xpose.msra.mxu0 %v586
        %886 = vmatprep.subr.mxu0 0.0
        %887 = vmatpush1.xpose.msra.mxu0 %v587
        %888 = vmatprep.subr.mxu0 0.0
        %889 = vmatpush1.xpose.msra.mxu0 0.0
        %890 = vmatprep.subr.mxu0 0.0
        %891 = vmatpush1.xpose.msra.mxu0 0.0
        %892 = vmatprep.subr.mxu0 0.0
        %893 = vmatpush1.xpose.msra.mxu0 0.0
        %894 = vmatprep.subr.mxu0 0.0
        %895 = vmatpush1.xpose.msra.mxu0 0.0
        %896 = vmatprep.subr.mxu0 0.0
        %897 = vmatpush1.xpose.msra.mxu0 0.0
        %898 = vmatprep.subr.mxu0 0.0
        %899 = vmatpush1.xpose.msra.mxu0 0.0
        %900 = vmatprep.subr.mxu0 0.0
        %901 = vmatpush1.xpose.msra.mxu0 0.0
        %902 = vmatprep.subr.mxu0 0.0
        %903 = vmatpush1.xpose.msra.mxu0 0.0
        %904 = vmatprep.subr.mxu0 0.0
        %905 = vmatpush1.xpose.msra.mxu0 0.0
        %906 = vmatprep.subr.mxu0 0.0
        %907 = vmatpush1.xpose.msra.mxu0 0.0
        %908 = vmatprep.subr.mxu0 0.0
        %909 = vmatpush1.xpose.msra.mxu0 0.0
        %910 = vmatprep.subr.mxu0 0.0
        %911 = vmatpush1.xpose.msra.mxu0 0.0
        %912 = vmatprep.subr.mxu0 0.0
        %913 = vmatpush1.xpose.msra.mxu0 0.0
        %914 = vmatprep.subr.mxu0 0.0
        %915 = vmatpush1.xpose.msra.mxu0 0.0
        %916 = vmatprep.subr.mxu0 0.0
        %917 = vmatpush1.xpose.msra.mxu0 0.0
        %918 = vmatprep.subr.mxu0 0.0
        %919 = vmatpush1.xpose.msra.mxu0 0.0
        %920 = vmatprep.subr.mxu0 0.0
        %921 = vmatpush1.xpose.msra.mxu0 0.0
        %922 = vmatprep.subr.mxu0 0.0
        %923 = vmatpush1.xpose.msra.mxu0 0.0
        %924 = vmatprep.subr.mxu0 0.0
        %925 = vmatpush1.xpose.msra.mxu0 0.0
        %926 = vmatprep.subr.mxu0 0.0
        %927 = vmatpush1.xpose.msra.mxu0 0.0
        %928 = vmatprep.subr.mxu0 0.0
        %929 = vmatpush1.xpose.msra.mxu0 0.0
        %930 = vmatprep.subr.mxu0 0.0
        %931 = vmatpush1.xpose.msra.mxu0 0.0
        %932 = vmatprep.subr.mxu0 0.0
        %933 = vmatpush1.xpose.msra.mxu0 0.0
        %934 = vmatprep.subr.mxu0 0.0
        %935 = vmatpush1.xpose.msra.mxu0 0.0
        %936 = vmatprep.subr.mxu0 0.0
        %937 = vmatpush1.xpose.msra.mxu0 0.0
        %938 = vmatprep.subr.mxu0 0.0
        %939 = vmatpush1.xpose.msra.mxu0 0.0
        %940 = vmatprep.subr.mxu0 0.0
        %941 = vmatpush1.xpose.msra.mxu0 0.0
        %942 = vmatprep.subr.mxu0 0.0
        %943 = vmatpush1.xpose.msra.mxu0 0.0
        %944 = vmatprep.subr.mxu0 0.0
        %945 = vmatpush1.xpose.msra.mxu0 0.0
        %946 = vmatprep.subr.mxu0 0.0
        %947 = vmatpush1.xpose.msra.mxu0 0.0
        %948 = vmatprep.mubr.f32.mxu0 0.0
        %949 = vmatmul.mubr.f32.gmra.mrb[0].mxu0 %v743
        %v950 = vpop.f32.mrb[0].mxu0
        %v951 = vadd.f32 0.0, %v950
        %v952 = vpop.f32.mrb[0].mxu0
        %953 = vdwg.mxu0
        %954 = vmatprep.subr.mxu0 0.0
        %955 = vmatpush1.xpose.msra.mxu0 %v588
        %956 = vmatprep.subr.mxu0 0.0
        %957 = vmatpush1.xpose.msra.mxu0 %v589
        %958 = vmatprep.subr.mxu0 0.0
        %959 = vmatpush1.xpose.msra.mxu0 0.0
        %960 = vmatprep.subr.mxu0 0.0
        %961 = vmatpush1.xpose.msra.mxu0 0.0
        %962 = vmatprep.subr.mxu0 0.0
        %963 = vmatpush1.xpose.msra.mxu0 0.0
        %964 = vmatprep.subr.mxu0 0.0
        %965 = vmatpush1.xpose.msra.mxu0 0.0
        %966 = vmatprep.subr.mxu0 0.0
        %967 = vmatpush1.xpose.msra.mxu0 0.0
        %968 = vmatprep.subr.mxu0 0.0
        %969 = vmatpush1.xpose.msra.mxu0 0.0
        %970 = vmatprep.subr.mxu0 0.0
        %971 = vmatpush1.xpose.msra.mxu0 0.0
        %972 = vmatprep.subr.mxu0 0.0
        %973 = vmatpush1.xpose.msra.mxu0 0.0
        %974 = vmatprep.subr.mxu0 0.0
        %975 = vmatpush1.xpose.msra.mxu0 0.0
        %976 = vmatprep.subr.mxu0 0.0
        %977 = vmatpush1.xpose.msra.mxu0 0.0
        %978 = vmatprep.subr.mxu0 0.0
        %979 = vmatpush1.xpose.msra.mxu0 0.0
        %980 = vmatprep.subr.mxu0 0.0
        %981 = vmatpush1.xpose.msra.mxu0 0.0
        %982 = vmatprep.subr.mxu0 0.0
        %983 = vmatpush1.xpose.msra.mxu0 0.0
        %984 = vmatprep.subr.mxu0 0.0
        %985 = vmatpush1.xpose.msra.mxu0 0.0
        %986 = vmatprep.subr.mxu0 0.0
        %987 = vmatpush1.xpose.msra.mxu0 0.0
        %988 = vmatprep.subr.mxu0 0.0
        %989 = vmatpush1.xpose.msra.mxu0 0.0
        %990 = vmatprep.subr.mxu0 0.0
        %991 = vmatpush1.xpose.msra.mxu0 0.0
        %992 = vmatprep.subr.mxu0 0.0
        %993 = vmatpush1.xpose.msra.mxu0 0.0
        %994 = vmatprep.subr.mxu0 0.0
        %995 = vmatpush1.xpose.msra.mxu0 0.0
        %996 = vmatprep.subr.mxu0 0.0
        %997 = vmatpush1.xpose.msra.mxu0 0.0
        %998 = vmatprep.subr.mxu0 0.0
        %999 = vmatpush1.xpose.msra.mxu0 0.0
        %1000 = vmatprep.subr.mxu0 0.0
        %1001 = vmatpush1.xpose.msra.mxu0 0.0
        %1002 = vmatprep.subr.mxu0 0.0
        %1003 = vmatpush1.xpose.msra.mxu0 0.0
        %1004 = vmatprep.subr.mxu0 0.0
        %1005 = vmatpush1.xpose.msra.mxu0 0.0
        %1006 = vmatprep.subr.mxu0 0.0
        %1007 = vmatpush1.xpose.msra.mxu0 0.0
        %1008 = vmatprep.subr.mxu0 0.0
        %1009 = vmatpush1.xpose.msra.mxu0 0.0
        %1010 = vmatprep.subr.mxu0 0.0
        %1011 = vmatpush1.xpose.msra.mxu0 0.0
        %1012 = vmatprep.subr.mxu0 0.0
        %1013 = vmatpush1.xpose.msra.mxu0 0.0
        %1014 = vmatprep.subr.mxu0 0.0
        %1015 = vmatpush1.xpose.msra.mxu0 0.0
        %1016 = vmatprep.subr.mxu0 0.0
        %1017 = vmatpush1.xpose.msra.mxu0 0.0
        %1018 = vmatprep.mubr.f32.mxu0 0.0
        %1019 = vmatmul.mubr.f32.gmra.mrb[0].mxu0 %v743
        %v1020 = vpop.f32.mrb[0].mxu0
        %v1021 = vadd.f32 0.0, %v1020
        %v1022 = vpop.f32.mrb[0].mxu0
        %1023 = vdwg.mxu0
        %1024 = vmatprep.subr.mxu0 0.0
        %1025 = vmatpush1.xpose.msra.mxu0 %v590
        %1026 = vmatprep.subr.mxu0 0.0
        %1027 = vmatpush1.xpose.msra.mxu0 %v591
        %1028 = vmatprep.subr.mxu0 0.0
        %1029 = vmatpush1.xpose.msra.mxu0 0.0
        %1030 = vmatprep.subr.mxu0 0.0
        %1031 = vmatpush1.xpose.msra.mxu0 0.0
        %1032 = vmatprep.subr.mxu0 0.0
        %1033 = vmatpush1.xpose.msra.mxu0 0.0
        %1034 = vmatprep.subr.mxu0 0.0
        %1035 = vmatpush1.xpose.msra.mxu0 0.0
        %1036 = vmatprep.subr.mxu0 0.0
        %1037 = vmatpush1.xpose.msra.mxu0 0.0
        %1038 = vmatprep.subr.mxu0 0.0
        %1039 = vmatpush1.xpose.msra.mxu0 0.0
        %1040 = vmatprep.subr.mxu0 0.0
        %1041 = vmatpush1.xpose.msra.mxu0 0.0
        %1042 = vmatprep.subr.mxu0 0.0
        %1043 = vmatpush1.xpose.msra.mxu0 0.0
        %1044 = vmatprep.subr.mxu0 0.0
        %1045 = vmatpush1.xpose.msra.mxu0 0.0
        %1046 = vmatprep.subr.mxu0 0.0
        %1047 = vmatpush1.xpose.msra.mxu0 0.0
        %1048 = vmatprep.subr.mxu0 0.0
        %1049 = vmatpush1.xpose.msra.mxu0 0.0
        %1050 = vmatprep.subr.mxu0 0.0
        %1051 = vmatpush1.xpose.msra.mxu0 0.0
        %1052 = vmatprep.subr.mxu0 0.0
        %1053 = vmatpush1.xpose.msra.mxu0 0.0
        %1054 = vmatprep.subr.mxu0 0.0
        %1055 = vmatpush1.xpose.msra.mxu0 0.0
        %1056 = vmatprep.subr.mxu0 0.0
        %1057 = vmatpush1.xpose.msra.mxu0 0.0
        %1058 = vmatprep.subr.mxu0 0.0
        %1059 = vmatpush1.xpose.msra.mxu0 0.0
        %1060 = vmatprep.subr.mxu0 0.0
        %1061 = vmatpush1.xpose.msra.mxu0 0.0
        %1062 = vmatprep.subr.mxu0 0.0
        %1063 = vmatpush1.xpose.msra.mxu0 0.0
        %1064 = vmatprep.subr.mxu0 0.0
        %1065 = vmatpush1.xpose.msra.mxu0 0.0
        %1066 = vmatprep.subr.mxu0 0.0
        %1067 = vmatpush1.xpose.msra.mxu0 0.0
        %1068 = vmatprep.subr.mxu0 0.0
        %1069 = vmatpush1.xpose.msra.mxu0 0.0
        %1070 = vmatprep.subr.mxu0 0.0
        %1071 = vmatpush1.xpose.msra.mxu0 0.0
        %1072 = vmatprep.subr.mxu0 0.0
        %1073 = vmatpush1.xpose.msra.mxu0 0.0
        %1074 = vmatprep.subr.mxu0 0.0
        %1075 = vmatpush1.xpose.msra.mxu0 0.0
        %1076 = vmatprep.subr.mxu0 0.0
        %1077 = vmatpush1.xpose.msra.mxu0 0.0
        %1078 = vmatprep.subr.mxu0 0.0
        %1079 = vmatpush1.xpose.msra.mxu0 0.0
        %1080 = vmatprep.subr.mxu0 0.0
        %1081 = vmatpush1.xpose.msra.mxu0 0.0
        %1082 = vmatprep.subr.mxu0 0.0
        %1083 = vmatpush1.xpose.msra.mxu0 0.0
        %1084 = vmatprep.subr.mxu0 0.0
        %1085 = vmatpush1.xpose.msra.mxu0 0.0
        %1086 = vmatprep.subr.mxu0 0.0
        %1087 = vmatpush1.xpose.msra.mxu0 0.0
        %1088 = vmatprep.mubr.f32.mxu0 0.0
        %1089 = vmatmul.mubr.f32.gmra.mrb[0].mxu0 %v743
        %v1090 = vpop.f32.mrb[0].mxu0
        %v1091 = vadd.f32 0.0, %v1090
        %v1092 = vpop.f32.mrb[0].mxu0
        %1093 = vdwg.mxu0
        %1094 = vmatprep.subr.mxu0 0.0
        %1095 = vmatpush1.xpose.msra.mxu0 %v592
        %1096 = vmatprep.subr.mxu0 0.0
        %1097 = vmatpush1.xpose.msra.mxu0 %v593
        %1098 = vmatprep.subr.mxu0 0.0
        %1099 = vmatpush1.xpose.msra.mxu0 0.0
        %1100 = vmatprep.subr.mxu0 0.0
        %1101 = vmatpush1.xpose.msra.mxu0 0.0
        %1102 = vmatprep.subr.mxu0 0.0
        %1103 = vmatpush1.xpose.msra.mxu0 0.0
        %1104 = vmatprep.subr.mxu0 0.0
        %1105 = vmatpush1.xpose.msra.mxu0 0.0
        %1106 = vmatprep.subr.mxu0 0.0
        %1107 = vmatpush1.xpose.msra.mxu0 0.0
        %1108 = vmatprep.subr.mxu0 0.0
        %1109 = vmatpush1.xpose.msra.mxu0 0.0
        %1110 = vmatprep.subr.mxu0 0.0
        %1111 = vmatpush1.xpose.msra.mxu0 0.0
        %1112 = vmatprep.subr.mxu0 0.0
        %1113 = vmatpush1.xpose.msra.mxu0 0.0
        %1114 = vmatprep.subr.mxu0 0.0
        %1115 = vmatpush1.xpose.msra.mxu0 0.0
        %1116 = vmatprep.subr.mxu0 0.0
        %1117 = vmatpush1.xpose.msra.mxu0 0.0
        %1118 = vmatprep.subr.mxu0 0.0
        %1119 = vmatpush1.xpose.msra.mxu0 0.0
        %1120 = vmatprep.subr.mxu0 0.0
        %1121 = vmatpush1.xpose.msra.mxu0 0.0
        %1122 = vmatprep.subr.mxu0 0.0
        %1123 = vmatpush1.xpose.msra.mxu0 0.0
        %1124 = vmatprep.subr.mxu0 0.0
        %1125 = vmatpush1.xpose.msra.mxu0 0.0
        %1126 = vmatprep.subr.mxu0 0.0
        %1127 = vmatpush1.xpose.msra.mxu0 0.0
        %1128 = vmatprep.subr.mxu0 0.0
        %1129 = vmatpush1.xpose.msra.mxu0 0.0
        %1130 = vmatprep.subr.mxu0 0.0
        %1131 = vmatpush1.xpose.msra.mxu0 0.0
        %1132 = vmatprep.subr.mxu0 0.0
        %1133 = vmatpush1.xpose.msra.mxu0 0.0
        %1134 = vmatprep.subr.mxu0 0.0
        %1135 = vmatpush1.xpose.msra.mxu0 0.0
        %1136 = vmatprep.subr.mxu0 0.0
        %1137 = vmatpush1.xpose.msra.mxu0 0.0
        %1138 = vmatprep.subr.mxu0 0.0
        %1139 = vmatpush1.xpose.msra.mxu0 0.0
        %1140 = vmatprep.subr.mxu0 0.0
        %1141 = vmatpush1.xpose.msra.mxu0 0.0
        %1142 = vmatprep.subr.mxu0 0.0
        %1143 = vmatpush1.xpose.msra.mxu0 0.0
        %1144 = vmatprep.subr.mxu0 0.0
        %1145 = vmatpush1.xpose.msra.mxu0 0.0
        %1146 = vmatprep.subr.mxu0 0.0
        %1147 = vmatpush1.xpose.msra.mxu0 0.0
        %1148 = vmatprep.subr.mxu0 0.0
        %1149 = vmatpush1.xpose.msra.mxu0 0.0
        %1150 = vmatprep.subr.mxu0 0.0
        %1151 = vmatpush1.xpose.msra.mxu0 0.0
        %1152 = vmatprep.subr.mxu0 0.0
        %1153 = vmatpush1.xpose.msra.mxu0 0.0
        %1154 = vmatprep.subr.mxu0 0.0
        %1155 = vmatpush1.xpose.msra.mxu0 0.0
        %1156 = vmatprep.subr.mxu0 0.0
        %1157 = vmatpush1.xpose.msra.mxu0 0.0
        %1158 = vmatprep.mubr.f32.mxu0 0.0
        %1159 = vmatmul.mubr.f32.gmra.mrb[0].mxu0 %v743
        %v1160 = vpop.f32.mrb[0].mxu0
        %v1161 = vadd.f32 0.0, %v1160
        %v1162 = vpop.f32.mrb[0].mxu0
        %1163 = vdwg.mxu0
        %1164 = vmatprep.subr.mxu0 0.0
        %1165 = vmatpush1.xpose.msra.mxu0 %v594
        %1166 = vmatprep.subr.mxu0 0.0
        %1167 = vmatpush1.xpose.msra.mxu0 %v595
        %1168 = vmatprep.subr.mxu0 0.0
        %1169 = vmatpush1.xpose.msra.mxu0 0.0
        %1170 = vmatprep.subr.mxu0 0.0
        %1171 = vmatpush1.xpose.msra.mxu0 0.0
        %1172 = vmatprep.subr.mxu0 0.0
        %1173 = vmatpush1.xpose.msra.mxu0 0.0
        %1174 = vmatprep.subr.mxu0 0.0
        %1175 = vmatpush1.xpose.msra.mxu0 0.0
        %1176 = vmatprep.subr.mxu0 0.0
        %1177 = vmatpush1.xpose.msra.mxu0 0.0
        %1178 = vmatprep.subr.mxu0 0.0
        %1179 = vmatpush1.xpose.msra.mxu0 0.0
        %1180 = vmatprep.subr.mxu0 0.0
        %1181 = vmatpush1.xpose.msra.mxu0 0.0
        %1182 = vmatprep.subr.mxu0 0.0
        %1183 = vmatpush1.xpose.msra.mxu0 0.0
        %1184 = vmatprep.subr.mxu0 0.0
        %1185 = vmatpush1.xpose.msra.mxu0 0.0
        %1186 = vmatprep.subr.mxu0 0.0
        %1187 = vmatpush1.xpose.msra.mxu0 0.0
        %1188 = vmatprep.subr.mxu0 0.0
        %1189 = vmatpush1.xpose.msra.mxu0 0.0
        %1190 = vmatprep.subr.mxu0 0.0
        %1191 = vmatpush1.xpose.msra.mxu0 0.0
        %1192 = vmatprep.subr.mxu0 0.0
        %1193 = vmatpush1.xpose.msra.mxu0 0.0
        %1194 = vmatprep.subr.mxu0 0.0
        %1195 = vmatpush1.xpose.msra.mxu0 0.0
        %1196 = vmatprep.subr.mxu0 0.0
        %1197 = vmatpush1.xpose.msra.mxu0 0.0
        %1198 = vmatprep.subr.mxu0 0.0
        %1199 = vmatpush1.xpose.msra.mxu0 0.0
        %1200 = vmatprep.subr.mxu0 0.0
        %1201 = vmatpush1.xpose.msra.mxu0 0.0
        %1202 = vmatprep.subr.mxu0 0.0
        %1203 = vmatpush1.xpose.msra.mxu0 0.0
        %1204 = vmatprep.subr.mxu0 0.0
        %1205 = vmatpush1.xpose.msra.mxu0 0.0
        %1206 = vmatprep.subr.mxu0 0.0
        %1207 = vmatpush1.xpose.msra.mxu0 0.0
        %1208 = vmatprep.subr.mxu0 0.0
        %1209 = vmatpush1.xpose.msra.mxu0 0.0
        %1210 = vmatprep.subr.mxu0 0.0
        %1211 = vmatpush1.xpose.msra.mxu0 0.0
        %1212 = vmatprep.subr.mxu0 0.0
        %1213 = vmatpush1.xpose.msra.mxu0 0.0
        %1214 = vmatprep.subr.mxu0 0.0
        %1215 = vmatpush1.xpose.msra.mxu0 0.0
        %1216 = vmatprep.subr.mxu0 0.0
        %1217 = vmatpush1.xpose.msra.mxu0 0.0
        %1218 = vmatprep.subr.mxu0 0.0
        %1219 = vmatpush1.xpose.msra.mxu0 0.0
        %1220 = vmatprep.subr.mxu0 0.0
        %1221 = vmatpush1.xpose.msra.mxu0 0.0
        %1222 = vmatprep.subr.mxu0 0.0
        %1223 = vmatpush1.xpose.msra.mxu0 0.0
        %1224 = vmatprep.subr.mxu0 0.0
        %1225 = vmatpush1.xpose.msra.mxu0 0.0
        %1226 = vmatprep.subr.mxu0 0.0
        %1227 = vmatpush1.xpose.msra.mxu0 0.0
        %1228 = vmatprep.mubr.f32.mxu0 0.0
        %1229 = vmatmul.mubr.f32.gmra.mrb[0].mxu0 %v743
        %v1230 = vpop.f32.mrb[0].mxu0
        %v1231 = vadd.f32 0.0, %v1230
        %v1232 = vpop.f32.mrb[0].mxu0
        %1233 = vdwg.mxu0
        %1234 = vmatprep.subr.mxu0 0.0
        %1235 = vmatpush1.xpose.msra.mxu0 %v596
        %1236 = vmatprep.subr.mxu0 0.0
        %1237 = vmatpush1.xpose.msra.mxu0 %v597
        %1238 = vmatprep.subr.mxu0 0.0
        %1239 = vmatpush1.xpose.msra.mxu0 0.0
        %1240 = vmatprep.subr.mxu0 0.0
        %1241 = vmatpush1.xpose.msra.mxu0 0.0
        %1242 = vmatprep.subr.mxu0 0.0
        %1243 = vmatpush1.xpose.msra.mxu0 0.0
        %1244 = vmatprep.subr.mxu0 0.0
        %1245 = vmatpush1.xpose.msra.mxu0 0.0
        %1246 = vmatprep.subr.mxu0 0.0
        %1247 = vmatpush1.xpose.msra.mxu0 0.0
        %1248 = vmatprep.subr.mxu0 0.0
        %1249 = vmatpush1.xpose.msra.mxu0 0.0
        %1250 = vmatprep.subr.mxu0 0.0
        %1251 = vmatpush1.xpose.msra.mxu0 0.0
        %1252 = vmatprep.subr.mxu0 0.0
        %1253 = vmatpush1.xpose.msra.mxu0 0.0
        %1254 = vmatprep.subr.mxu0 0.0
        %1255 = vmatpush1.xpose.msra.mxu0 0.0
        %1256 = vmatprep.subr.mxu0 0.0
        %1257 = vmatpush1.xpose.msra.mxu0 0.0
        %1258 = vmatprep.subr.mxu0 0.0
        %1259 = vmatpush1.xpose.msra.mxu0 0.0
        %1260 = vmatprep.subr.mxu0 0.0
        %1261 = vmatpush1.xpose.msra.mxu0 0.0
        %1262 = vmatprep.subr.mxu0 0.0
        %1263 = vmatpush1.xpose.msra.mxu0 0.0
        %1264 = vmatprep.subr.mxu0 0.0
        %1265 = vmatpush1.xpose.msra.mxu0 0.0
        %1266 = vmatprep.subr.mxu0 0.0
        %1267 = vmatpush1.xpose.msra.mxu0 0.0
        %1268 = vmatprep.subr.mxu0 0.0
        %1269 = vmatpush1.xpose.msra.mxu0 0.0
        %1270 = vmatprep.subr.mxu0 0.0
        %1271 = vmatpush1.xpose.msra.mxu0 0.0
        %1272 = vmatprep.subr.mxu0 0.0
        %1273 = vmatpush1.xpose.msra.mxu0 0.0
        %1274 = vmatprep.subr.mxu0 0.0
        %1275 = vmatpush1.xpose.msra.mxu0 0.0
        %1276 = vmatprep.subr.mxu0 0.0
        %1277 = vmatpush1.xpose.msra.mxu0 0.0
        %1278 = vmatprep.subr.mxu0 0.0
        %1279 = vmatpush1.xpose.msra.mxu0 0.0
        %1280 = vmatprep.subr.mxu0 0.0
        %1281 = vmatpush1.xpose.msra.mxu0 0.0
        %1282 = vmatprep.subr.mxu0 0.0
        %1283 = vmatpush1.xpose.msra.mxu0 0.0
        %1284 = vmatprep.subr.mxu0 0.0
        %1285 = vmatpush1.xpose.msra.mxu0 0.0
        %1286 = vmatprep.subr.mxu0 0.0
        %1287 = vmatpush1.xpose.msra.mxu0 0.0
        %1288 = vmatprep.subr.mxu0 0.0
        %1289 = vmatpush1.xpose.msra.mxu0 0.0
        %1290 = vmatprep.subr.mxu0 0.0
        %1291 = vmatpush1.xpose.msra.mxu0 0.0
        %1292 = vmatprep.subr.mxu0 0.0
        %1293 = vmatpush1.xpose.msra.mxu0 0.0
        %1294 = vmatprep.subr.mxu0 0.0
        %1295 = vmatpush1.xpose.msra.mxu0 0.0
        %1296 = vmatprep.subr.mxu0 0.0
        %1297 = vmatpush1.xpose.msra.mxu0 0.0
        %1298 = vmatprep.mubr.f32.mxu0 0.0
        %1299 = vmatmul.mubr.f32.gmra.mrb[0].mxu0 %v743
        %v1300 = vpop.f32.mrb[0].mxu0
        %v1301 = vadd.f32 0.0, %v1300
        %v1302 = vpop.f32.mrb[0].mxu0
        %1303 = vdwg.mxu0
        %v1304 = vld [vmem:[#allocation8] sm:$0xff]
        %v1305 = vld [vmem:[#allocation8 + $0x8] sm:$0xff]
        %v1306 = vld [vmem:[#allocation8 + $0x10] sm:$0xff]
        %v1307 = vld [vmem:[#allocation8 + $0x18] sm:$0xff]
        %v1308 = vld [vmem:[#allocation8 + $0x20] sm:$0xff]
        %v1309 = vld [vmem:[#allocation8 + $0x28] sm:$0xff]
        %v1310 = vld [vmem:[#allocation8 + $0x30] sm:$0xff]
        %v1311 = vld [vmem:[#allocation8 + $0x38] sm:$0xff]
        %v1312 = vld [vmem:[#allocation8 + $0x40] sm:$0xff]
        %v1313 = vld [vmem:[#allocation8 + $0x48] sm:$0xff]
        %v1314 = vld [vmem:[#allocation8 + $0x50] sm:$0xff]
        %v1315 = vld [vmem:[#allocation8 + $0x58] sm:$0xff]
        %v1316 = vld [vmem:[#allocation8 + $0x60] sm:$0xff]
        %v1317 = vld [vmem:[#allocation8 + $0x68] sm:$0xff]
        %v1318 = vld [vmem:[#allocation8 + $0x70] sm:$0xff]
        %v1319 = vld [vmem:[#allocation8 + $0x78] sm:$0xff]
        %1320 = vmatprep.subr.mxu0 0.0
        %1321 = vmatpush1.msra.mxu0 %v1304
        %1322 = vmatprep.subr.mxu0 0.0
        %1323 = vmatpush1.msra.mxu0 %v1305
        %1324 = vmatprep.subr.mxu0 0.0
        %1325 = vmatpush1.msra.mxu0 %v1306
        %1326 = vmatprep.subr.mxu0 0.0
        %1327 = vmatpush1.msra.mxu0 %v1307
        %1328 = vmatprep.subr.mxu0 0.0
        %1329 = vmatpush1.msra.mxu0 %v1308
        %1330 = vmatprep.subr.mxu0 0.0
        %1331 = vmatpush1.msra.mxu0 %v1309
        %1332 = vmatprep.subr.mxu0 0.0
        %1333 = vmatpush1.msra.mxu0 %v1310
        %1334 = vmatprep.subr.mxu0 0.0
        %1335 = vmatpush1.msra.mxu0 %v1311
        %1336 = vmatprep.subr.mxu0 0.0
        %1337 = vmatpush1.msra.mxu0 %v1312
        %1338 = vmatprep.subr.mxu0 0.0
        %1339 = vmatpush1.msra.mxu0 %v1313
        %1340 = vmatprep.subr.mxu0 0.0
        %1341 = vmatpush1.msra.mxu0 %v1314
        %1342 = vmatprep.subr.mxu0 0.0
        %1343 = vmatpush1.msra.mxu0 %v1315
        %1344 = vmatprep.subr.mxu0 0.0
        %1345 = vmatpush1.msra.mxu0 %v1316
        %1346 = vmatprep.subr.mxu0 0.0
        %1347 = vmatpush1.msra.mxu0 %v1317
        %1348 = vmatprep.subr.mxu0 0.0
        %1349 = vmatpush1.msra.mxu0 %v1318
        %1350 = vmatprep.subr.mxu0 0.0
        %1351 = vmatpush1.msra.mxu0 %v1319
        %1352 = vmatprep.subr.mxu0 0.0
        %1353 = vmatpush1.msra.mxu0 0.0
        %1354 = vmatprep.subr.mxu0 0.0
        %1355 = vmatpush1.msra.mxu0 0.0
        %1356 = vmatprep.subr.mxu0 0.0
        %1357 = vmatpush1.msra.mxu0 0.0
        %1358 = vmatprep.subr.mxu0 0.0
        %1359 = vmatpush1.msra.mxu0 0.0
        %1360 = vmatprep.subr.mxu0 0.0
        %1361 = vmatpush1.msra.mxu0 0.0
        %1362 = vmatprep.subr.mxu0 0.0
        %1363 = vmatpush1.msra.mxu0 0.0
        %1364 = vmatprep.subr.mxu0 0.0
        %1365 = vmatpush1.msra.mxu0 0.0
        %1366 = vmatprep.subr.mxu0 0.0
        %1367 = vmatpush1.msra.mxu0 0.0
        %1368 = vmatprep.subr.mxu0 0.0
        %1369 = vmatpush1.msra.mxu0 0.0
        %1370 = vmatprep.subr.mxu0 0.0
        %1371 = vmatpush1.msra.mxu0 0.0
        %1372 = vmatprep.subr.mxu0 0.0
        %1373 = vmatpush1.msra.mxu0 0.0
        %1374 = vmatprep.subr.mxu0 0.0
        %1375 = vmatpush1.msra.mxu0 0.0
        %1376 = vmatprep.subr.mxu0 0.0
        %1377 = vmatpush1.msra.mxu0 0.0
        %1378 = vmatprep.subr.mxu0 0.0
        %1379 = vmatpush1.msra.mxu0 0.0
        %1380 = vmatprep.subr.mxu0 0.0
        %1381 = vmatpush1.msra.mxu0 0.0
        %1382 = vmatprep.subr.mxu0 0.0
        %1383 = vmatpush1.msra.mxu0 0.0
        %1384 = vmatprep.mubr.f32.mxu0 0.0
        %1385 = vmatmul.mubr.f32.gmra.mrb[0].mxu0 %v598
        %v1386 = vpop.f32.mrb[0].mxu0
        %v1387 = vadd.f32 0.0, %v1386
        %v1388 = vpop.f32.mrb[0].mxu0
        %1389 = vmatprep.mubr.f32.mxu0 0.0
        %1390 = vmatmul.mubr.f32.gmra.mrb[0].mxu0 %v599
        %v1391 = vpop.f32.mrb[0].mxu0
        %v1392 = vadd.f32 0.0, %v1391
        %v1393 = vpop.f32.mrb[0].mxu0
        %1394 = vmatprep.mubr.f32.mxu0 0.0
        %1395 = vmatmul.mubr.f32.gmra.mrb[0].mxu0 %v600
        %v1396 = vpop.f32.mrb[0].mxu0
        %v1397 = vadd.f32 0.0, %v1396
        %v1398 = vpop.f32.mrb[0].mxu0
        %1399 = vmatprep.mubr.f32.mxu0 0.0
        %1400 = vmatmul.mubr.f32.gmra.mrb[0].mxu0 %v601
        %v1401 = vpop.f32.mrb[0].mxu0
        %v1402 = vadd.f32 0.0, %v1401
        %v1403 = vpop.f32.mrb[0].mxu0
        %1404 = vmatprep.mubr.f32.mxu0 0.0
        %1405 = vmatmul.mubr.f32.gmra.mrb[0].mxu0 %v602
        %v1406 = vpop.f32.mrb[0].mxu0
        %v1407 = vadd.f32 0.0, %v1406
        %v1408 = vpop.f32.mrb[0].mxu0
        %1409 = vmatprep.mubr.f32.mxu0 0.0
        %1410 = vmatmul.mubr.f32.gmra.mrb[0].mxu0 %v603
        %v1411 = vpop.f32.mrb[0].mxu0
        %v1412 = vadd.f32 0.0, %v1411
        %v1413 = vpop.f32.mrb[0].mxu0
        %1414 = vmatprep.mubr.f32.mxu0 0.0
        %1415 = vmatmul.mubr.f32.gmra.mrb[0].mxu0 %v604
        %v1416 = vpop.f32.mrb[0].mxu0
        %v1417 = vadd.f32 0.0, %v1416
        %v1418 = vpop.f32.mrb[0].mxu0
        %1419 = vmatprep.mubr.f32.mxu0 0.0
        %1420 = vmatmul.mubr.f32.gmra.mrb[0].mxu0 %v605
        %v1421 = vpop.f32.mrb[0].mxu0
        %v1422 = vadd.f32 0.0, %v1421
        %v1423 = vpop.f32.mrb[0].mxu0
        %1424 = vmatprep.mubr.f32.mxu0 0.0
        %1425 = vmatmul.mubr.f32.gmra.mrb[0].mxu0 %v606
        %v1426 = vpop.f32.mrb[0].mxu0
        %v1427 = vadd.f32 0.0, %v1426
        %v1428 = vpop.f32.mrb[0].mxu0
        %1429 = vmatprep.mubr.f32.mxu0 0.0
        %1430 = vmatmul.mubr.f32.gmra.mrb[0].mxu0 %v607
        %v1431 = vpop.f32.mrb[0].mxu0
        %v1432 = vadd.f32 0.0, %v1431
        %v1433 = vpop.f32.mrb[0].mxu0
        %1434 = vmatprep.mubr.f32.mxu0 0.0
        %1435 = vmatmul.mubr.f32.gmra.mrb[0].mxu0 %v608
        %v1436 = vpop.f32.mrb[0].mxu0
        %v1437 = vadd.f32 0.0, %v1436
        %v1438 = vpop.f32.mrb[0].mxu0
        %1439 = vmatprep.mubr.f32.mxu0 0.0
        %1440 = vmatmul.mubr.f32.gmra.mrb[0].mxu0 %v609
        %v1441 = vpop.f32.mrb[0].mxu0
        %v1442 = vadd.f32 0.0, %v1441
        %v1443 = vpop.f32.mrb[0].mxu0
        %1444 = vmatprep.mubr.f32.mxu0 0.0
        %1445 = vmatmul.mubr.f32.gmra.mrb[0].mxu0 %v610
        %v1446 = vpop.f32.mrb[0].mxu0
        %v1447 = vadd.f32 0.0, %v1446
        %v1448 = vpop.f32.mrb[0].mxu0
        %1449 = vmatprep.mubr.f32.mxu0 0.0
        %1450 = vmatmul.mubr.f32.gmra.mrb[0].mxu0 %v611
        %v1451 = vpop.f32.mrb[0].mxu0
        %v1452 = vadd.f32 0.0, %v1451
        %v1453 = vpop.f32.mrb[0].mxu0
        %1454 = vmatprep.mubr.f32.mxu0 0.0
        %1455 = vmatmul.mubr.f32.gmra.mrb[0].mxu0 %v612
        %v1456 = vpop.f32.mrb[0].mxu0
        %v1457 = vadd.f32 0.0, %v1456
        %v1458 = vpop.f32.mrb[0].mxu0
        %1459 = vmatprep.mubr.f32.mxu0 0.0
        %1460 = vmatmul.mubr.f32.gmra.mrb[0].mxu0 %v613
        %v1461 = vpop.f32.mrb[0].mxu0
        %v1462 = vadd.f32 0.0, %v1461
        %v1463 = vpop.f32.mrb[0].mxu0
        %1464 = vdwg.mxu0
        %1466 = vset.pattern.permute.xlu0 0
        %1467 = vperm.xlu0 %1466, %v705
        %v1468 = vpop.permute.xlu0 %1467
        %1471 = vset.pattern.permute.xlu0 0
        %1472 = vperm.xlu0 %1471, %v710
        %v1473 = vpop.permute.xlu0 %1472
        %1476 = vset.pattern.permute.xlu0 0
        %1477 = vperm.xlu0 %1476, %v715
        %v1478 = vpop.permute.xlu0 %1477
        %1481 = vset.pattern.permute.xlu0 0
        %1482 = vperm.xlu0 %1481, %v720
        %v1483 = vpop.permute.xlu0 %1482
        %1486 = vset.pattern.permute.xlu0 0
        %1487 = vperm.xlu0 %1486, %v725
        %v1488 = vpop.permute.xlu0 %1487
        %1491 = vset.pattern.permute.xlu0 0
        %1492 = vperm.xlu0 %1491, %v730
        %v1493 = vpop.permute.xlu0 %1492
        %1496 = vset.pattern.permute.xlu0 0
        %1497 = vperm.xlu0 %1496, %v735
        %v1498 = vpop.permute.xlu0 %1497
        %1501 = vset.pattern.permute.xlu0 0
        %1502 = vperm.xlu0 %1501, %v740
        %v1503 = vpop.permute.xlu0 %1502
        %v1505 = vlaneseq
        %v1506 = vshrl.u32 %v1505, 7
        %v1507 = vsub.s32 0, %v1506
        %v1508 = vrot.slane %v811, %v1507
        %v1509 = vlaneseq
        %v1510 = vshrl.u32 %v1509, 7
        %v1511 = vsub.s32 0, %v1510
        %v1512 = vrot.slane %v881, %v1511
        %v1513 = vlaneseq
        %v1514 = vshrl.u32 %v1513, 7
        %v1515 = vsub.s32 0, %v1514
        %v1516 = vrot.slane %v951, %v1515
        %v1517 = vlaneseq
        %v1518 = vshrl.u32 %v1517, 7
        %v1519 = vsub.s32 0, %v1518
        %v1520 = vrot.slane %v1021, %v1519
        %v1521 = vlaneseq
        %v1522 = vshrl.u32 %v1521, 7
        %v1523 = vsub.s32 0, %v1522
        %v1524 = vrot.slane %v1091, %v1523
        %v1525 = vlaneseq
        %v1526 = vshrl.u32 %v1525, 7
        %v1527 = vsub.s32 0, %v1526
        %v1528 = vrot.slane %v1161, %v1527
        %v1529 = vlaneseq
        %v1530 = vshrl.u32 %v1529, 7
        %v1531 = vsub.s32 0, %v1530
        %v1532 = vrot.slane %v1231, %v1531
        %v1533 = vlaneseq
        %v1534 = vshrl.u32 %v1533, 7
        %v1535 = vsub.s32 0, %v1534
        %v1536 = vrot.slane %v1301, %v1535
        %v1537 = vadd.f32 %v1468, %v1508
        %v1538 = vadd.f32 %v1473, %v1512
        %v1539 = vadd.f32 %v1478, %v1516
        %v1540 = vadd.f32 %v1483, %v1520
        %v1541 = vadd.f32 %v1488, %v1524
        %v1542 = vadd.f32 %v1493, %v1528
        %v1543 = vadd.f32 %v1498, %v1532
        %v1544 = vadd.f32 %v1503, %v1536
        %vm1545 = vcmp.gt.f32.partialorder %v614, 0.5
        %vm1546 = vcmp.gt.f32.partialorder %v615, 0.5
        %vm1547 = vcmp.gt.f32.partialorder %v616, 0.5
        %vm1548 = vcmp.gt.f32.partialorder %v617, 0.5
        %vm1549 = vcmp.gt.f32.partialorder %v618, 0.5
        %vm1550 = vcmp.gt.f32.partialorder %v619, 0.5
        %vm1551 = vcmp.gt.f32.partialorder %v620, 0.5
        %vm1552 = vcmp.gt.f32.partialorder %v621, 0.5
        %v1553 = vsel %vm1545, -1e+10, %v1537
        %v1554 = vsel %vm1546, -1e+10, %v1538
        %v1555 = vsel %vm1547, -1e+10, %v1539
        %v1556 = vsel %vm1548, -1e+10, %v1540
        %v1557 = vsel %vm1549, -1e+10, %v1541
        %v1558 = vsel %vm1550, -1e+10, %v1542
        %v1559 = vsel %vm1551, -1e+10, %v1543
        %v1560 = vsel %vm1552, -1e+10, %v1544
        %vm1561 = vcmask 130048
        %v1562 = vsel %vm1561, %v1553, -inf
        %1563 = vmax.xlane.f32.xlu0 %v1562
        %v1564 = vpop.xlane.xlu0 %1563
        %v1565 = vsel %vm1561, %v1554, -inf
        %1566 = vmax.xlane.f32.xlu0 %v1565
        %v1567 = vpop.xlane.xlu0 %1566
        %v1568 = vsel %vm1561, %v1555, -inf
        %1569 = vmax.xlane.f32.xlu0 %v1568
        %v1570 = vpop.xlane.xlu0 %1569
        %v1571 = vsel %vm1561, %v1556, -inf
        %1572 = vmax.xlane.f32.xlu0 %v1571
        %v1573 = vpop.xlane.xlu0 %1572
        %v1574 = vsel %vm1561, %v1557, -inf
        %1575 = vmax.xlane.f32.xlu0 %v1574
        %v1576 = vpop.xlane.xlu0 %1575
        %v1577 = vsel %vm1561, %v1558, -inf
        %1578 = vmax.xlane.f32.xlu0 %v1577
        %v1579 = vpop.xlane.xlu0 %1578
        %v1580 = vsel %vm1561, %v1559, -inf
        %1581 = vmax.xlane.f32.xlu0 %v1580
        %v1582 = vpop.xlane.xlu0 %1581
        %v1583 = vsel %vm1561, %v1560, -inf
        %1584 = vmax.xlane.f32.xlu0 %v1583
        %v1585 = vpop.xlane.xlu0 %1584
        %v1586 = vsub.f32 %v1553, %v1564
        %v1587 = vsub.f32 %v1554, %v1567
        %v1588 = vsub.f32 %v1555, %v1570
        %v1589 = vsub.f32 %v1556, %v1573
        %v1590 = vsub.f32 %v1557, %v1576
        %v1591 = vsub.f32 %v1558, %v1579
        %v1592 = vsub.f32 %v1559, %v1582
        %v1593 = vsub.f32 %v1560, %v1585
        %v1594 = vmul.f32 %v1586, 1.442695
        %v1595 = vpow.pop %v1594
        %v1596 = vmul.f32 %v1587, 1.442695
        %v1597 = vpow.pop %v1596
        %v1598 = vmul.f32 %v1588, 1.442695
        %v1599 = vpow.pop %v1598
        %v1600 = vmul.f32 %v1589, 1.442695
        %v1601 = vpow.pop %v1600
        %v1602 = vmul.f32 %v1590, 1.442695
        %v1603 = vpow.pop %v1602
        %v1604 = vmul.f32 %v1591, 1.442695
        %v1605 = vpow.pop %v1604
        %v1606 = vmul.f32 %v1592, 1.442695
        %v1607 = vpow.pop %v1606
        %v1608 = vmul.f32 %v1593, 1.442695
        %v1609 = vpow.pop %v1608
        %v1610 = vsel %vm1561, %v1595, 0.0
        %1611 = vadd.xlane.f32.xlu0 %v1610
        %v1612 = vpop.xlane.xlu0 %1611
        %v1613 = vsel %vm1561, %v1597, 0.0
        %1614 = vadd.xlane.f32.xlu0 %v1613
        %v1615 = vpop.xlane.xlu0 %1614
        %v1616 = vsel %vm1561, %v1599, 0.0
        %1617 = vadd.xlane.f32.xlu0 %v1616
        %v1618 = vpop.xlane.xlu0 %1617
        %v1619 = vsel %vm1561, %v1601, 0.0
        %1620 = vadd.xlane.f32.xlu0 %v1619
        %v1621 = vpop.xlane.xlu0 %1620
        %v1622 = vsel %vm1561, %v1603, 0.0
        %1623 = vadd.xlane.f32.xlu0 %v1622
        %v1624 = vpop.xlane.xlu0 %1623
        %v1625 = vsel %vm1561, %v1605, 0.0
        %1626 = vadd.xlane.f32.xlu0 %v1625
        %v1627 = vpop.xlane.xlu0 %1626
        %v1628 = vsel %vm1561, %v1607, 0.0
        %1629 = vadd.xlane.f32.xlu0 %v1628
        %v1630 = vpop.xlane.xlu0 %1629
        %v1631 = vsel %vm1561, %v1609, 0.0
        %1632 = vadd.xlane.f32.xlu0 %v1631
        %v1633 = vpop.xlane.xlu0 %1632
        %v1634 = vrcp.pop %v1612
        %v1635 = vrcp.pop %v1615
        %v1636 = vrcp.pop %v1618
        %v1637 = vrcp.pop %v1621
        %v1638 = vrcp.pop %v1624
        %v1639 = vrcp.pop %v1627
        %v1640 = vrcp.pop %v1630
        %v1641 = vrcp.pop %v1633
        %v1642 = vmul.f32 %v1595, %v1634
        %v1643 = vmul.f32 %v1597, %v1635
        %v1644 = vmul.f32 %v1599, %v1636
        %v1645 = vmul.f32 %v1601, %v1637
        %v1646 = vmul.f32 %v1603, %v1638
        %v1647 = vmul.f32 %v1605, %v1639
        %v1648 = vmul.f32 %v1607, %v1640
        %v1649 = vmul.f32 %v1609, %v1641
        %1650 = vst.msk [vmem:[%s556] sm:$0xff] %vm1561, %v1642
        %1651 = vst.msk [vmem:[%s556 + $0x8] sm:$0xff] %vm1561, %v1643
        %1652 = vst.msk [vmem:[%s556 + $0x10] sm:$0xff] %vm1561, %v1644
        %1653 = vst.msk [vmem:[%s556 + $0x18] sm:$0xff] %vm1561, %v1645
        %1654 = vst.msk [vmem:[%s556 + $0x20] sm:$0xff] %vm1561, %v1646
        %1655 = vst.msk [vmem:[%s556 + $0x28] sm:$0xff] %vm1561, %v1647
        %1656 = vst.msk [vmem:[%s556 + $0x30] sm:$0xff] %vm1561, %v1648
        %1657 = vst.msk [vmem:[%s556 + $0x38] sm:$0xff] %vm1561, %v1649
        %v1659 = vsel %vm1561, %v1642, 0
        %1661 = vmatprep.subr.mxu0 0.0
        %1662 = vmatpush1.msra.mxu0 %v1387
        %1663 = vmatprep.subr.mxu0 0.0
        %1664 = vmatpush1.msra.mxu0 %v1392
        %1665 = vmatprep.subr.mxu0 0.0
        %1666 = vmatpush1.msra.mxu0 0.0
        %1667 = vmatprep.subr.mxu0 0.0
        %1668 = vmatpush1.msra.mxu0 0.0
        %1669 = vmatprep.subr.mxu0 0.0
        %1670 = vmatpush1.msra.mxu0 0.0
        %1671 = vmatprep.subr.mxu0 0.0
        %1672 = vmatpush1.msra.mxu0 0.0
        %1673 = vmatprep.subr.mxu0 0.0
        %1674 = vmatpush1.msra.mxu0 0.0
        %1675 = vmatprep.subr.mxu0 0.0
        %1676 = vmatpush1.msra.mxu0 0.0
        %1677 = vmatprep.subr.mxu0 0.0
        %1678 = vmatpush1.msra.mxu0 0.0
        %1679 = vmatprep.subr.mxu0 0.0
        %1680 = vmatpush1.msra.mxu0 0.0
        %1681 = vmatprep.subr.mxu0 0.0
        %1682 = vmatpush1.msra.mxu0 0.0
        %1683 = vmatprep.subr.mxu0 0.0
        %1684 = vmatpush1.msra.mxu0 0.0
        %1685 = vmatprep.subr.mxu0 0.0
        %1686 = vmatpush1.msra.mxu0 0.0
        %1687 = vmatprep.subr.mxu0 0.0
        %1688 = vmatpush1.msra.mxu0 0.0
        %1689 = vmatprep.subr.mxu0 0.0
        %1690 = vmatpush1.msra.mxu0 0.0
        %1691 = vmatprep.subr.mxu0 0.0
        %1692 = vmatpush1.msra.mxu0 0.0
        %1693 = vmatprep.subr.mxu0 0.0
        %1694 = vmatpush1.msra.mxu0 0.0
        %1695 = vmatprep.subr.mxu0 0.0
        %1696 = vmatpush1.msra.mxu0 0.0
        %1697 = vmatprep.subr.mxu0 0.0
        %1698 = vmatpush1.msra.mxu0 0.0
        %1699 = vmatprep.subr.mxu0 0.0
        %1700 = vmatpush1.msra.mxu0 0.0
        %1701 = vmatprep.subr.mxu0 0.0
        %1702 = vmatpush1.msra.mxu0 0.0
        %1703 = vmatprep.subr.mxu0 0.0
        %1704 = vmatpush1.msra.mxu0 0.0
        %1705 = vmatprep.subr.mxu0 0.0
        %1706 = vmatpush1.msra.mxu0 0.0
        %1707 = vmatprep.subr.mxu0 0.0
        %1708 = vmatpush1.msra.mxu0 0.0
        %1709 = vmatprep.subr.mxu0 0.0
        %1710 = vmatpush1.msra.mxu0 0.0
        %1711 = vmatprep.subr.mxu0 0.0
        %1712 = vmatpush1.msra.mxu0 0.0
        %1713 = vmatprep.subr.mxu0 0.0
        %1714 = vmatpush1.msra.mxu0 0.0
        %1715 = vmatprep.subr.mxu0 0.0
        %1716 = vmatpush1.msra.mxu0 0.0
        %1717 = vmatprep.subr.mxu0 0.0
        %1718 = vmatpush1.msra.mxu0 0.0
        %1719 = vmatprep.subr.mxu0 0.0
        %1720 = vmatpush1.msra.mxu0 0.0
        %1721 = vmatprep.subr.mxu0 0.0
        %1722 = vmatpush1.msra.mxu0 0.0
        %1723 = vmatprep.subr.mxu0 0.0
        %1724 = vmatpush1.msra.mxu0 0.0
        %1725 = vmatprep.mubr.f32.mxu0 0.0
        %1726 = vmatmul.mubr.f32.gmra.mrb[0].mxu0 %v1659
        %v1727 = vpop.f32.mrb[0].mxu0
        %v1728 = vadd.f32 0.0, %v1727
        %v1729 = vpop.f32.mrb[0].mxu0
        %1730 = vdwg.mxu0
        %v1732 = vsel %vm1561, %v1643, 0
        %1734 = vmatprep.subr.mxu0 0.0
        %1735 = vmatpush1.msra.mxu0 %v1397
        %1736 = vmatprep.subr.mxu0 0.0
        %1737 = vmatpush1.msra.mxu0 %v1402
        %1738 = vmatprep.subr.mxu0 0.0
        %1739 = vmatpush1.msra.mxu0 0.0
        %1740 = vmatprep.subr.mxu0 0.0
        %1741 = vmatpush1.msra.mxu0 0.0
        %1742 = vmatprep.subr.mxu0 0.0
        %1743 = vmatpush1.msra.mxu0 0.0
        %1744 = vmatprep.subr.mxu0 0.0
        %1745 = vmatpush1.msra.mxu0 0.0
        %1746 = vmatprep.subr.mxu0 0.0
        %1747 = vmatpush1.msra.mxu0 0.0
        %1748 = vmatprep.subr.mxu0 0.0
        %1749 = vmatpush1.msra.mxu0 0.0
        %1750 = vmatprep.subr.mxu0 0.0
        %1751 = vmatpush1.msra.mxu0 0.0
        %1752 = vmatprep.subr.mxu0 0.0
        %1753 = vmatpush1.msra.mxu0 0.0
        %1754 = vmatprep.subr.mxu0 0.0
        %1755 = vmatpush1.msra.mxu0 0.0
        %1756 = vmatprep.subr.mxu0 0.0
        %1757 = vmatpush1.msra.mxu0 0.0
        %1758 = vmatprep.subr.mxu0 0.0
        %1759 = vmatpush1.msra.mxu0 0.0
        %1760 = vmatprep.subr.mxu0 0.0
        %1761 = vmatpush1.msra.mxu0 0.0
        %1762 = vmatprep.subr.mxu0 0.0
        %1763 = vmatpush1.msra.mxu0 0.0
        %1764 = vmatprep.subr.mxu0 0.0
        %1765 = vmatpush1.msra.mxu0 0.0
        %1766 = vmatprep.subr.mxu0 0.0
        %1767 = vmatpush1.msra.mxu0 0.0
        %1768 = vmatprep.subr.mxu0 0.0
        %1769 = vmatpush1.msra.mxu0 0.0
        %1770 = vmatprep.subr.mxu0 0.0
        %1771 = vmatpush1.msra.mxu0 0.0
        %1772 = vmatprep.subr.mxu0 0.0
        %1773 = vmatpush1.msra.mxu0 0.0
        %1774 = vmatprep.subr.mxu0 0.0
        %1775 = vmatpush1.msra.mxu0 0.0
        %1776 = vmatprep.subr.mxu0 0.0
        %1777 = vmatpush1.msra.mxu0 0.0
        %1778 = vmatprep.subr.mxu0 0.0
        %1779 = vmatpush1.msra.mxu0 0.0
        %1780 = vmatprep.subr.mxu0 0.0
        %1781 = vmatpush1.msra.mxu0 0.0
        %1782 = vmatprep.subr.mxu0 0.0
        %1783 = vmatpush1.msra.mxu0 0.0
        %1784 = vmatprep.subr.mxu0 0.0
        %1785 = vmatpush1.msra.mxu0 0.0
        %1786 = vmatprep.subr.mxu0 0.0
        %1787 = vmatpush1.msra.mxu0 0.0
        %1788 = vmatprep.subr.mxu0 0.0
        %1789 = vmatpush1.msra.mxu0 0.0
        %1790 = vmatprep.subr.mxu0 0.0
        %1791 = vmatpush1.msra.mxu0 0.0
        %1792 = vmatprep.subr.mxu0 0.0
        %1793 = vmatpush1.msra.mxu0 0.0
        %1794 = vmatprep.subr.mxu0 0.0
        %1795 = vmatpush1.msra.mxu0 0.0
        %1796 = vmatprep.subr.mxu0 0.0
        %1797 = vmatpush1.msra.mxu0 0.0
        %1798 = vmatprep.mubr.f32.mxu0 0.0
        %1799 = vmatmul.mubr.f32.gmra.mrb[0].mxu0 %v1732
        %v1800 = vpop.f32.mrb[0].mxu0
        %v1801 = vadd.f32 0.0, %v1800
        %v1802 = vpop.f32.mrb[0].mxu0
        %1803 = vdwg.mxu0
        %v1805 = vsel %vm1561, %v1644, 0
        %1807 = vmatprep.subr.mxu0 0.0
        %1808 = vmatpush1.msra.mxu0 %v1407
        %1809 = vmatprep.subr.mxu0 0.0
        %1810 = vmatpush1.msra.mxu0 %v1412
        %1811 = vmatprep.subr.mxu0 0.0
        %1812 = vmatpush1.msra.mxu0 0.0
        %1813 = vmatprep.subr.mxu0 0.0
        %1814 = vmatpush1.msra.mxu0 0.0
        %1815 = vmatprep.subr.mxu0 0.0
        %1816 = vmatpush1.msra.mxu0 0.0
        %1817 = vmatprep.subr.mxu0 0.0
        %1818 = vmatpush1.msra.mxu0 0.0
        %1819 = vmatprep.subr.mxu0 0.0
        %1820 = vmatpush1.msra.mxu0 0.0
        %1821 = vmatprep.subr.mxu0 0.0
        %1822 = vmatpush1.msra.mxu0 0.0
        %1823 = vmatprep.subr.mxu0 0.0
        %1824 = vmatpush1.msra.mxu0 0.0
        %1825 = vmatprep.subr.mxu0 0.0
        %1826 = vmatpush1.msra.mxu0 0.0
        %1827 = vmatprep.subr.mxu0 0.0
        %1828 = vmatpush1.msra.mxu0 0.0
        %1829 = vmatprep.subr.mxu0 0.0
        %1830 = vmatpush1.msra.mxu0 0.0
        %1831 = vmatprep.subr.mxu0 0.0
        %1832 = vmatpush1.msra.mxu0 0.0
        %1833 = vmatprep.subr.mxu0 0.0
        %1834 = vmatpush1.msra.mxu0 0.0
        %1835 = vmatprep.subr.mxu0 0.0
        %1836 = vmatpush1.msra.mxu0 0.0
        %1837 = vmatprep.subr.mxu0 0.0
        %1838 = vmatpush1.msra.mxu0 0.0
        %1839 = vmatprep.subr.mxu0 0.0
        %1840 = vmatpush1.msra.mxu0 0.0
        %1841 = vmatprep.subr.mxu0 0.0
        %1842 = vmatpush1.msra.mxu0 0.0
        %1843 = vmatprep.subr.mxu0 0.0
        %1844 = vmatpush1.msra.mxu0 0.0
        %1845 = vmatprep.subr.mxu0 0.0
        %1846 = vmatpush1.msra.mxu0 0.0
        %1847 = vmatprep.subr.mxu0 0.0
        %1848 = vmatpush1.msra.mxu0 0.0
        %1849 = vmatprep.subr.mxu0 0.0
        %1850 = vmatpush1.msra.mxu0 0.0
        %1851 = vmatprep.subr.mxu0 0.0
        %1852 = vmatpush1.msra.mxu0 0.0
        %1853 = vmatprep.subr.mxu0 0.0
        %1854 = vmatpush1.msra.mxu0 0.0
        %1855 = vmatprep.subr.mxu0 0.0
        %1856 = vmatpush1.msra.mxu0 0.0
        %1857 = vmatprep.subr.mxu0 0.0
        %1858 = vmatpush1.msra.mxu0 0.0
        %1859 = vmatprep.subr.mxu0 0.0
        %1860 = vmatpush1.msra.mxu0 0.0
        %1861 = vmatprep.subr.mxu0 0.0
        %1862 = vmatpush1.msra.mxu0 0.0
        %1863 = vmatprep.subr.mxu0 0.0
        %1864 = vmatpush1.msra.mxu0 0.0
        %1865 = vmatprep.subr.mxu0 0.0
        %1866 = vmatpush1.msra.mxu0 0.0
        %1867 = vmatprep.subr.mxu0 0.0
        %1868 = vmatpush1.msra.mxu0 0.0
        %1869 = vmatprep.subr.mxu0 0.0
        %1870 = vmatpush1.msra.mxu0 0.0
        %1871 = vmatprep.mubr.f32.mxu0 0.0
        %1872 = vmatmul.mubr.f32.gmra.mrb[0].mxu0 %v1805
        %v1873 = vpop.f32.mrb[0].mxu0
        %v1874 = vadd.f32 0.0, %v1873
        %v1875 = vpop.f32.mrb[0].mxu0
        %1876 = vdwg.mxu0
        %v1878 = vsel %vm1561, %v1645, 0
        %1880 = vmatprep.subr.mxu0 0.0
        %1881 = vmatpush1.msra.mxu0 %v1417
        %1882 = vmatprep.subr.mxu0 0.0
        %1883 = vmatpush1.msra.mxu0 %v1422
        %1884 = vmatprep.subr.mxu0 0.0
        %1885 = vmatpush1.msra.mxu0 0.0
        %1886 = vmatprep.subr.mxu0 0.0
        %1887 = vmatpush1.msra.mxu0 0.0
        %1888 = vmatprep.subr.mxu0 0.0
        %1889 = vmatpush1.msra.mxu0 0.0
        %1890 = vmatprep.subr.mxu0 0.0
        %1891 = vmatpush1.msra.mxu0 0.0
        %1892 = vmatprep.subr.mxu0 0.0
        %1893 = vmatpush1.msra.mxu0 0.0
        %1894 = vmatprep.subr.mxu0 0.0
        %1895 = vmatpush1.msra.mxu0 0.0
        %1896 = vmatprep.subr.mxu0 0.0
        %1897 = vmatpush1.msra.mxu0 0.0
        %1898 = vmatprep.subr.mxu0 0.0
        %1899 = vmatpush1.msra.mxu0 0.0
        %1900 = vmatprep.subr.mxu0 0.0
        %1901 = vmatpush1.msra.mxu0 0.0
        %1902 = vmatprep.subr.mxu0 0.0
        %1903 = vmatpush1.msra.mxu0 0.0
        %1904 = vmatprep.subr.mxu0 0.0
        %1905 = vmatpush1.msra.mxu0 0.0
        %1906 = vmatprep.subr.mxu0 0.0
        %1907 = vmatpush1.msra.mxu0 0.0
        %1908 = vmatprep.subr.mxu0 0.0
        %1909 = vmatpush1.msra.mxu0 0.0
        %1910 = vmatprep.subr.mxu0 0.0
        %1911 = vmatpush1.msra.mxu0 0.0
        %1912 = vmatprep.subr.mxu0 0.0
        %1913 = vmatpush1.msra.mxu0 0.0
        %1914 = vmatprep.subr.mxu0 0.0
        %1915 = vmatpush1.msra.mxu0 0.0
        %1916 = vmatprep.subr.mxu0 0.0
        %1917 = vmatpush1.msra.mxu0 0.0
        %1918 = vmatprep.subr.mxu0 0.0
        %1919 = vmatpush1.msra.mxu0 0.0
        %1920 = vmatprep.subr.mxu0 0.0
        %1921 = vmatpush1.msra.mxu0 0.0
        %1922 = vmatprep.subr.mxu0 0.0
        %1923 = vmatpush1.msra.mxu0 0.0
        %1924 = vmatprep.subr.mxu0 0.0
        %1925 = vmatpush1.msra.mxu0 0.0
        %1926 = vmatprep.subr.mxu0 0.0
        %1927 = vmatpush1.msra.mxu0 0.0
        %1928 = vmatprep.subr.mxu0 0.0
        %1929 = vmatpush1.msra.mxu0 0.0
        %1930 = vmatprep.subr.mxu0 0.0
        %1931 = vmatpush1.msra.mxu0 0.0
        %1932 = vmatprep.subr.mxu0 0.0
        %1933 = vmatpush1.msra.mxu0 0.0
        %1934 = vmatprep.subr.mxu0 0.0
        %1935 = vmatpush1.msra.mxu0 0.0
        %1936 = vmatprep.subr.mxu0 0.0
        %1937 = vmatpush1.msra.mxu0 0.0
        %1938 = vmatprep.subr.mxu0 0.0
        %1939 = vmatpush1.msra.mxu0 0.0
        %1940 = vmatprep.subr.mxu0 0.0
        %1941 = vmatpush1.msra.mxu0 0.0
        %1942 = vmatprep.subr.mxu0 0.0
        %1943 = vmatpush1.msra.mxu0 0.0
        %1944 = vmatprep.mubr.f32.mxu0 0.0
        %1945 = vmatmul.mubr.f32.gmra.mrb[0].mxu0 %v1878
        %v1946 = vpop.f32.mrb[0].mxu0
        %v1947 = vadd.f32 0.0, %v1946
        %v1948 = vpop.f32.mrb[0].mxu0
        %1949 = vdwg.mxu0
        %v1951 = vsel %vm1561, %v1646, 0
        %1953 = vmatprep.subr.mxu0 0.0
        %1954 = vmatpush1.msra.mxu0 %v1427
        %1955 = vmatprep.subr.mxu0 0.0
        %1956 = vmatpush1.msra.mxu0 %v1432
        %1957 = vmatprep.subr.mxu0 0.0
        %1958 = vmatpush1.msra.mxu0 0.0
        %1959 = vmatprep.subr.mxu0 0.0
        %1960 = vmatpush1.msra.mxu0 0.0
        %1961 = vmatprep.subr.mxu0 0.0
        %1962 = vmatpush1.msra.mxu0 0.0
        %1963 = vmatprep.subr.mxu0 0.0
        %1964 = vmatpush1.msra.mxu0 0.0
        %1965 = vmatprep.subr.mxu0 0.0
        %1966 = vmatpush1.msra.mxu0 0.0
        %1967 = vmatprep.subr.mxu0 0.0
        %1968 = vmatpush1.msra.mxu0 0.0
        %1969 = vmatprep.subr.mxu0 0.0
        %1970 = vmatpush1.msra.mxu0 0.0
        %1971 = vmatprep.subr.mxu0 0.0
        %1972 = vmatpush1.msra.mxu0 0.0
        %1973 = vmatprep.subr.mxu0 0.0
        %1974 = vmatpush1.msra.mxu0 0.0
        %1975 = vmatprep.subr.mxu0 0.0
        %1976 = vmatpush1.msra.mxu0 0.0
        %1977 = vmatprep.subr.mxu0 0.0
        %1978 = vmatpush1.msra.mxu0 0.0
        %1979 = vmatprep.subr.mxu0 0.0
        %1980 = vmatpush1.msra.mxu0 0.0
        %1981 = vmatprep.subr.mxu0 0.0
        %1982 = vmatpush1.msra.mxu0 0.0
        %1983 = vmatprep.subr.mxu0 0.0
        %1984 = vmatpush1.msra.mxu0 0.0
        %1985 = vmatprep.subr.mxu0 0.0
        %1986 = vmatpush1.msra.mxu0 0.0
        %1987 = vmatprep.subr.mxu0 0.0
        %1988 = vmatpush1.msra.mxu0 0.0
        %1989 = vmatprep.subr.mxu0 0.0
        %1990 = vmatpush1.msra.mxu0 0.0
        %1991 = vmatprep.subr.mxu0 0.0
        %1992 = vmatpush1.msra.mxu0 0.0
        %1993 = vmatprep.subr.mxu0 0.0
        %1994 = vmatpush1.msra.mxu0 0.0
        %1995 = vmatprep.subr.mxu0 0.0
        %1996 = vmatpush1.msra.mxu0 0.0
        %1997 = vmatprep.subr.mxu0 0.0
        %1998 = vmatpush1.msra.mxu0 0.0
        %1999 = vmatprep.subr.mxu0 0.0
        %2000 = vmatpush1.msra.mxu0 0.0
        %2001 = vmatprep.subr.mxu0 0.0
        %2002 = vmatpush1.msra.mxu0 0.0
        %2003 = vmatprep.subr.mxu0 0.0
        %2004 = vmatpush1.msra.mxu0 0.0
        %2005 = vmatprep.subr.mxu0 0.0
        %2006 = vmatpush1.msra.mxu0 0.0
        %2007 = vmatprep.subr.mxu0 0.0
        %2008 = vmatpush1.msra.mxu0 0.0
        %2009 = vmatprep.subr.mxu0 0.0
        %2010 = vmatpush1.msra.mxu0 0.0
        %2011 = vmatprep.subr.mxu0 0.0
        %2012 = vmatpush1.msra.mxu0 0.0
        %2013 = vmatprep.subr.mxu0 0.0
        %2014 = vmatpush1.msra.mxu0 0.0
        %2015 = vmatprep.subr.mxu0 0.0
        %2016 = vmatpush1.msra.mxu0 0.0
        %2017 = vmatprep.mubr.f32.mxu0 0.0
        %2018 = vmatmul.mubr.f32.gmra.mrb[0].mxu0 %v1951
        %v2019 = vpop.f32.mrb[0].mxu0
        %v2020 = vadd.f32 0.0, %v2019
        %v2021 = vpop.f32.mrb[0].mxu0
        %2022 = vdwg.mxu0
        %v2024 = vsel %vm1561, %v1647, 0
        %2026 = vmatprep.subr.mxu0 0.0
        %2027 = vmatpush1.msra.mxu0 %v1437
        %2028 = vmatprep.subr.mxu0 0.0
        %2029 = vmatpush1.msra.mxu0 %v1442
        %2030 = vmatprep.subr.mxu0 0.0
        %2031 = vmatpush1.msra.mxu0 0.0
        %2032 = vmatprep.subr.mxu0 0.0
        %2033 = vmatpush1.msra.mxu0 0.0
        %2034 = vmatprep.subr.mxu0 0.0
        %2035 = vmatpush1.msra.mxu0 0.0
        %2036 = vmatprep.subr.mxu0 0.0
        %2037 = vmatpush1.msra.mxu0 0.0
        %2038 = vmatprep.subr.mxu0 0.0
        %2039 = vmatpush1.msra.mxu0 0.0
        %2040 = vmatprep.subr.mxu0 0.0
        %2041 = vmatpush1.msra.mxu0 0.0
        %2042 = vmatprep.subr.mxu0 0.0
        %2043 = vmatpush1.msra.mxu0 0.0
        %2044 = vmatprep.subr.mxu0 0.0
        %2045 = vmatpush1.msra.mxu0 0.0
        %2046 = vmatprep.subr.mxu0 0.0
        %2047 = vmatpush1.msra.mxu0 0.0
        %2048 = vmatprep.subr.mxu0 0.0
        %2049 = vmatpush1.msra.mxu0 0.0
        %2050 = vmatprep.subr.mxu0 0.0
        %2051 = vmatpush1.msra.mxu0 0.0
        %2052 = vmatprep.subr.mxu0 0.0
        %2053 = vmatpush1.msra.mxu0 0.0
        %2054 = vmatprep.subr.mxu0 0.0
        %2055 = vmatpush1.msra.mxu0 0.0
        %2056 = vmatprep.subr.mxu0 0.0
        %2057 = vmatpush1.msra.mxu0 0.0
        %2058 = vmatprep.subr.mxu0 0.0
        %2059 = vmatpush1.msra.mxu0 0.0
        %2060 = vmatprep.subr.mxu0 0.0
        %2061 = vmatpush1.msra.mxu0 0.0
        %2062 = vmatprep.subr.mxu0 0.0
        %2063 = vmatpush1.msra.mxu0 0.0
        %2064 = vmatprep.subr.mxu0 0.0
        %2065 = vmatpush1.msra.mxu0 0.0
        %2066 = vmatprep.subr.mxu0 0.0
        %2067 = vmatpush1.msra.mxu0 0.0
        %2068 = vmatprep.subr.mxu0 0.0
        %2069 = vmatpush1.msra.mxu0 0.0
        %2070 = vmatprep.subr.mxu0 0.0
        %2071 = vmatpush1.msra.mxu0 0.0
        %2072 = vmatprep.subr.mxu0 0.0
        %2073 = vmatpush1.msra.mxu0 0.0
        %2074 = vmatprep.subr.mxu0 0.0
        %2075 = vmatpush1.msra.mxu0 0.0
        %2076 = vmatprep.subr.mxu0 0.0
        %2077 = vmatpush1.msra.mxu0 0.0
        %2078 = vmatprep.subr.mxu0 0.0
        %2079 = vmatpush1.msra.mxu0 0.0
        %2080 = vmatprep.subr.mxu0 0.0
        %2081 = vmatpush1.msra.mxu0 0.0
        %2082 = vmatprep.subr.mxu0 0.0
        %2083 = vmatpush1.msra.mxu0 0.0
        %2084 = vmatprep.subr.mxu0 0.0
        %2085 = vmatpush1.msra.mxu0 0.0
        %2086 = vmatprep.subr.mxu0 0.0
        %2087 = vmatpush1.msra.mxu0 0.0
        %2088 = vmatprep.subr.mxu0 0.0
        %2089 = vmatpush1.msra.mxu0 0.0
        %2090 = vmatprep.mubr.f32.mxu0 0.0
        %2091 = vmatmul.mubr.f32.gmra.mrb[0].mxu0 %v2024
        %v2092 = vpop.f32.mrb[0].mxu0
        %v2093 = vadd.f32 0.0, %v2092
        %v2094 = vpop.f32.mrb[0].mxu0
        %2095 = vdwg.mxu0
        %v2097 = vsel %vm1561, %v1648, 0
        %2099 = vmatprep.subr.mxu0 0.0
        %2100 = vmatpush1.msra.mxu0 %v1447
        %2101 = vmatprep.subr.mxu0 0.0
        %2102 = vmatpush1.msra.mxu0 %v1452
        %2103 = vmatprep.subr.mxu0 0.0
        %2104 = vmatpush1.msra.mxu0 0.0
        %2105 = vmatprep.subr.mxu0 0.0
        %2106 = vmatpush1.msra.mxu0 0.0
        %2107 = vmatprep.subr.mxu0 0.0
        %2108 = vmatpush1.msra.mxu0 0.0
        %2109 = vmatprep.subr.mxu0 0.0
        %2110 = vmatpush1.msra.mxu0 0.0
        %2111 = vmatprep.subr.mxu0 0.0
        %2112 = vmatpush1.msra.mxu0 0.0
        %2113 = vmatprep.subr.mxu0 0.0
        %2114 = vmatpush1.msra.mxu0 0.0
        %2115 = vmatprep.subr.mxu0 0.0
        %2116 = vmatpush1.msra.mxu0 0.0
        %2117 = vmatprep.subr.mxu0 0.0
        %2118 = vmatpush1.msra.mxu0 0.0
        %2119 = vmatprep.subr.mxu0 0.0
        %2120 = vmatpush1.msra.mxu0 0.0
        %2121 = vmatprep.subr.mxu0 0.0
        %2122 = vmatpush1.msra.mxu0 0.0
        %2123 = vmatprep.subr.mxu0 0.0
        %2124 = vmatpush1.msra.mxu0 0.0
        %2125 = vmatprep.subr.mxu0 0.0
        %2126 = vmatpush1.msra.mxu0 0.0
        %2127 = vmatprep.subr.mxu0 0.0
        %2128 = vmatpush1.msra.mxu0 0.0
        %2129 = vmatprep.subr.mxu0 0.0
        %2130 = vmatpush1.msra.mxu0 0.0
        %2131 = vmatprep.subr.mxu0 0.0
        %2132 = vmatpush1.msra.mxu0 0.0
        %2133 = vmatprep.subr.mxu0 0.0
        %2134 = vmatpush1.msra.mxu0 0.0
        %2135 = vmatprep.subr.mxu0 0.0
        %2136 = vmatpush1.msra.mxu0 0.0
        %2137 = vmatprep.subr.mxu0 0.0
        %2138 = vmatpush1.msra.mxu0 0.0
        %2139 = vmatprep.subr.mxu0 0.0
        %2140 = vmatpush1.msra.mxu0 0.0
        %2141 = vmatprep.subr.mxu0 0.0
        %2142 = vmatpush1.msra.mxu0 0.0
        %2143 = vmatprep.subr.mxu0 0.0
        %2144 = vmatpush1.msra.mxu0 0.0
        %2145 = vmatprep.subr.mxu0 0.0
        %2146 = vmatpush1.msra.mxu0 0.0
        %2147 = vmatprep.subr.mxu0 0.0
        %2148 = vmatpush1.msra.mxu0 0.0
        %2149 = vmatprep.subr.mxu0 0.0
        %2150 = vmatpush1.msra.mxu0 0.0
        %2151 = vmatprep.subr.mxu0 0.0
        %2152 = vmatpush1.msra.mxu0 0.0
        %2153 = vmatprep.subr.mxu0 0.0
        %2154 = vmatpush1.msra.mxu0 0.0
        %2155 = vmatprep.subr.mxu0 0.0
        %2156 = vmatpush1.msra.mxu0 0.0
        %2157 = vmatprep.subr.mxu0 0.0
        %2158 = vmatpush1.msra.mxu0 0.0
        %2159 = vmatprep.subr.mxu0 0.0
        %2160 = vmatpush1.msra.mxu0 0.0
        %2161 = vmatprep.subr.mxu0 0.0
        %2162 = vmatpush1.msra.mxu0 0.0
        %2163 = vmatprep.mubr.f32.mxu0 0.0
        %2164 = vmatmul.mubr.f32.gmra.mrb[0].mxu0 %v2097
        %v2165 = vpop.f32.mrb[0].mxu0
        %v2166 = vadd.f32 0.0, %v2165
        %v2167 = vpop.f32.mrb[0].mxu0
        %2168 = vdwg.mxu0
        %v2170 = vsel %vm1561, %v1649, 0
        %2172 = vmatprep.subr.mxu0 0.0
        %2173 = vmatpush1.msra.mxu0 %v1457
        %2174 = vmatprep.subr.mxu0 0.0
        %2175 = vmatpush1.msra.mxu0 %v1462
        %2176 = vmatprep.subr.mxu0 0.0
        %2177 = vmatpush1.msra.mxu0 0.0
        %2178 = vmatprep.subr.mxu0 0.0
        %2179 = vmatpush1.msra.mxu0 0.0
        %2180 = vmatprep.subr.mxu0 0.0
        %2181 = vmatpush1.msra.mxu0 0.0
        %2182 = vmatprep.subr.mxu0 0.0
        %2183 = vmatpush1.msra.mxu0 0.0
        %2184 = vmatprep.subr.mxu0 0.0
        %2185 = vmatpush1.msra.mxu0 0.0
        %2186 = vmatprep.subr.mxu0 0.0
        %2187 = vmatpush1.msra.mxu0 0.0
        %2188 = vmatprep.subr.mxu0 0.0
        %2189 = vmatpush1.msra.mxu0 0.0
        %2190 = vmatprep.subr.mxu0 0.0
        %2191 = vmatpush1.msra.mxu0 0.0
        %2192 = vmatprep.subr.mxu0 0.0
        %2193 = vmatpush1.msra.mxu0 0.0
        %2194 = vmatprep.subr.mxu0 0.0
        %2195 = vmatpush1.msra.mxu0 0.0
        %2196 = vmatprep.subr.mxu0 0.0
        %2197 = vmatpush1.msra.mxu0 0.0
        %2198 = vmatprep.subr.mxu0 0.0
        %2199 = vmatpush1.msra.mxu0 0.0
        %2200 = vmatprep.subr.mxu0 0.0
        %2201 = vmatpush1.msra.mxu0 0.0
        %2202 = vmatprep.subr.mxu0 0.0
        %2203 = vmatpush1.msra.mxu0 0.0
        %2204 = vmatprep.subr.mxu0 0.0
        %2205 = vmatpush1.msra.mxu0 0.0
        %2206 = vmatprep.subr.mxu0 0.0
        %2207 = vmatpush1.msra.mxu0 0.0
        %2208 = vmatprep.subr.mxu0 0.0
        %2209 = vmatpush1.msra.mxu0 0.0
        %2210 = vmatprep.subr.mxu0 0.0
        %2211 = vmatpush1.msra.mxu0 0.0
        %2212 = vmatprep.subr.mxu0 0.0
        %2213 = vmatpush1.msra.mxu0 0.0
        %2214 = vmatprep.subr.mxu0 0.0
        %2215 = vmatpush1.msra.mxu0 0.0
        %2216 = vmatprep.subr.mxu0 0.0
        %2217 = vmatpush1.msra.mxu0 0.0
        %2218 = vmatprep.subr.mxu0 0.0
        %2219 = vmatpush1.msra.mxu0 0.0
        %2220 = vmatprep.subr.mxu0 0.0
        %2221 = vmatpush1.msra.mxu0 0.0
        %2222 = vmatprep.subr.mxu0 0.0
        %2223 = vmatpush1.msra.mxu0 0.0
        %2224 = vmatprep.subr.mxu0 0.0
        %2225 = vmatpush1.msra.mxu0 0.0
        %2226 = vmatprep.subr.mxu0 0.0
        %2227 = vmatpush1.msra.mxu0 0.0
        %2228 = vmatprep.subr.mxu0 0.0
        %2229 = vmatpush1.msra.mxu0 0.0
        %2230 = vmatprep.subr.mxu0 0.0
        %2231 = vmatpush1.msra.mxu0 0.0
        %2232 = vmatprep.subr.mxu0 0.0
        %2233 = vmatpush1.msra.mxu0 0.0
        %2234 = vmatprep.subr.mxu0 0.0
        %2235 = vmatpush1.msra.mxu0 0.0
        %2236 = vmatprep.mubr.f32.mxu0 0.0
        %2237 = vmatmul.mubr.f32.gmra.mrb[0].mxu0 %v2170
        %v2238 = vpop.f32.mrb[0].mxu0
        %v2239 = vadd.f32 0.0, %v2238
        %v2240 = vpop.f32.mrb[0].mxu0
        %2241 = vdwg.mxu0
        %2242 = vset.pattern.permute.xlu0 1
        %2243 = vperm.xlu0 %2242, %v705
        %v2244 = vpop.permute.xlu0 %2243
        %2246 = vset.pattern.permute.xlu0 1
        %2247 = vperm.xlu0 %2246, %v710
        %v2248 = vpop.permute.xlu0 %2247
        %2250 = vset.pattern.permute.xlu0 1
        %2251 = vperm.xlu0 %2250, %v715
        %v2252 = vpop.permute.xlu0 %2251
        %2254 = vset.pattern.permute.xlu0 1
        %2255 = vperm.xlu0 %2254, %v720
        %v2256 = vpop.permute.xlu0 %2255
        %2258 = vset.pattern.permute.xlu0 1
        %2259 = vperm.xlu0 %2258, %v725
        %v2260 = vpop.permute.xlu0 %2259
        %2262 = vset.pattern.permute.xlu0 1
        %2263 = vperm.xlu0 %2262, %v730
        %v2264 = vpop.permute.xlu0 %2263
        %2266 = vset.pattern.permute.xlu0 1
        %2267 = vperm.xlu0 %2266, %v735
        %v2268 = vpop.permute.xlu0 %2267
        %2270 = vset.pattern.permute.xlu0 1
        %2271 = vperm.xlu0 %2270, %v740
        %v2272 = vpop.permute.xlu0 %2271
        %v2274 = vlaneseq
        %v2275 = vshrl.u32 %v2274, 7
        %v2276 = vsub.s32 1, %v2275
        %v2277 = vrot.slane %v811, %v2276
        %v2278 = vlaneseq
        %v2279 = vshrl.u32 %v2278, 7
        %v2280 = vsub.s32 1, %v2279
        %v2281 = vrot.slane %v881, %v2280
        %v2282 = vlaneseq
        %v2283 = vshrl.u32 %v2282, 7
        %v2284 = vsub.s32 1, %v2283
        %v2285 = vrot.slane %v951, %v2284
        %v2286 = vlaneseq
        %v2287 = vshrl.u32 %v2286, 7
        %v2288 = vsub.s32 1, %v2287
        %v2289 = vrot.slane %v1021, %v2288
        %v2290 = vlaneseq
        %v2291 = vshrl.u32 %v2290, 7
        %v2292 = vsub.s32 1, %v2291
        %v2293 = vrot.slane %v1091, %v2292
        %v2294 = vlaneseq
        %v2295 = vshrl.u32 %v2294, 7
        %v2296 = vsub.s32 1, %v2295
        %v2297 = vrot.slane %v1161, %v2296
        %v2298 = vlaneseq
        %v2299 = vshrl.u32 %v2298, 7
        %v2300 = vsub.s32 1, %v2299
        %v2301 = vrot.slane %v1231, %v2300
        %v2302 = vlaneseq
        %v2303 = vshrl.u32 %v2302, 7
        %v2304 = vsub.s32 1, %v2303
        %v2305 = vrot.slane %v1301, %v2304
        %v2306 = vadd.f32 %v2244, %v2277
        %v2307 = vadd.f32 %v2248, %v2281
        %v2308 = vadd.f32 %v2252, %v2285
        %v2309 = vadd.f32 %v2256, %v2289
        %v2310 = vadd.f32 %v2260, %v2293
        %v2311 = vadd.f32 %v2264, %v2297
        %v2312 = vadd.f32 %v2268, %v2301
        %v2313 = vadd.f32 %v2272, %v2305
        %v2314 = vsel %vm1545, -1e+10, %v2306
        %v2315 = vsel %vm1546, -1e+10, %v2307
        %v2316 = vsel %vm1547, -1e+10, %v2308
        %v2317 = vsel %vm1548, -1e+10, %v2309
        %v2318 = vsel %vm1549, -1e+10, %v2310
        %v2319 = vsel %vm1550, -1e+10, %v2311
        %v2320 = vsel %vm1551, -1e+10, %v2312
        %v2321 = vsel %vm1552, -1e+10, %v2313
        %v2322 = vsel %vm1561, %v2314, -inf
        %2323 = vmax.xlane.f32.xlu0 %v2322
        %v2324 = vpop.xlane.xlu0 %2323
        %v2325 = vsel %vm1561, %v2315, -inf
        %2326 = vmax.xlane.f32.xlu0 %v2325
        %v2327 = vpop.xlane.xlu0 %2326
        %v2328 = vsel %vm1561, %v2316, -inf
        %2329 = vmax.xlane.f32.xlu0 %v2328
        %v2330 = vpop.xlane.xlu0 %2329
        %v2331 = vsel %vm1561, %v2317, -inf
        %2332 = vmax.xlane.f32.xlu0 %v2331
        %v2333 = vpop.xlane.xlu0 %2332
        %v2334 = vsel %vm1561, %v2318, -inf
        %2335 = vmax.xlane.f32.xlu0 %v2334
        %v2336 = vpop.xlane.xlu0 %2335
        %v2337 = vsel %vm1561, %v2319, -inf
        %2338 = vmax.xlane.f32.xlu0 %v2337
        %v2339 = vpop.xlane.xlu0 %2338
        %v2340 = vsel %vm1561, %v2320, -inf
        %2341 = vmax.xlane.f32.xlu0 %v2340
        %v2342 = vpop.xlane.xlu0 %2341
        %v2343 = vsel %vm1561, %v2321, -inf
        %2344 = vmax.xlane.f32.xlu0 %v2343
        %v2345 = vpop.xlane.xlu0 %2344
        %v2346 = vsub.f32 %v2314, %v2324
        %v2347 = vsub.f32 %v2315, %v2327
        %v2348 = vsub.f32 %v2316, %v2330
        %v2349 = vsub.f32 %v2317, %v2333
        %v2350 = vsub.f32 %v2318, %v2336
        %v2351 = vsub.f32 %v2319, %v2339
        %v2352 = vsub.f32 %v2320, %v2342
        %v2353 = vsub.f32 %v2321, %v2345
        %v2354 = vmul.f32 %v2346, 1.442695
        %v2355 = vpow.pop %v2354
        %v2356 = vmul.f32 %v2347, 1.442695
        %v2357 = vpow.pop %v2356
        %v2358 = vmul.f32 %v2348, 1.442695
        %v2359 = vpow.pop %v2358
        %v2360 = vmul.f32 %v2349, 1.442695
        %v2361 = vpow.pop %v2360
        %v2362 = vmul.f32 %v2350, 1.442695
        %v2363 = vpow.pop %v2362
        %v2364 = vmul.f32 %v2351, 1.442695
        %v2365 = vpow.pop %v2364
        %v2366 = vmul.f32 %v2352, 1.442695
        %v2367 = vpow.pop %v2366
        %v2368 = vmul.f32 %v2353, 1.442695
        %v2369 = vpow.pop %v2368
        %v2370 = vsel %vm1561, %v2355, 0.0
        %2371 = vadd.xlane.f32.xlu0 %v2370
        %v2372 = vpop.xlane.xlu0 %2371
        %v2373 = vsel %vm1561, %v2357, 0.0
        %2374 = vadd.xlane.f32.xlu0 %v2373
        %v2375 = vpop.xlane.xlu0 %2374
        %v2376 = vsel %vm1561, %v2359, 0.0
        %2377 = vadd.xlane.f32.xlu0 %v2376
        %v2378 = vpop.xlane.xlu0 %2377
        %v2379 = vsel %vm1561, %v2361, 0.0
        %2380 = vadd.xlane.f32.xlu0 %v2379
        %v2381 = vpop.xlane.xlu0 %2380
        %v2382 = vsel %vm1561, %v2363, 0.0
        %2383 = vadd.xlane.f32.xlu0 %v2382
        %v2384 = vpop.xlane.xlu0 %2383
        %v2385 = vsel %vm1561, %v2365, 0.0
        %2386 = vadd.xlane.f32.xlu0 %v2385
        %v2387 = vpop.xlane.xlu0 %2386
        %v2388 = vsel %vm1561, %v2367, 0.0
        %2389 = vadd.xlane.f32.xlu0 %v2388
        %v2390 = vpop.xlane.xlu0 %2389
        %v2391 = vsel %vm1561, %v2369, 0.0
        %2392 = vadd.xlane.f32.xlu0 %v2391
        %v2393 = vpop.xlane.xlu0 %2392
        %v2394 = vrcp.pop %v2372
        %v2395 = vrcp.pop %v2375
        %v2396 = vrcp.pop %v2378
        %v2397 = vrcp.pop %v2381
        %v2398 = vrcp.pop %v2384
        %v2399 = vrcp.pop %v2387
        %v2400 = vrcp.pop %v2390
        %v2401 = vrcp.pop %v2393
        %v2402 = vmul.f32 %v2355, %v2394
        %v2403 = vmul.f32 %v2357, %v2395
        %v2404 = vmul.f32 %v2359, %v2396
        %v2405 = vmul.f32 %v2361, %v2397
        %v2406 = vmul.f32 %v2363, %v2398
        %v2407 = vmul.f32 %v2365, %v2399
        %v2408 = vmul.f32 %v2367, %v2400
        %v2409 = vmul.f32 %v2369, %v2401
        %s2410 = scalar_lea.vmem %s556, 64 [#allocation12]
        %2411 = vst.msk [vmem:[%s2410] sm:$0xff] %vm1561, %v2402
        %2412 = vst.msk [vmem:[%s2410 + $0x8] sm:$0xff] %vm1561, %v2403
        %2413 = vst.msk [vmem:[%s2410 + $0x10] sm:$0xff] %vm1561, %v2404
        %2414 = vst.msk [vmem:[%s2410 + $0x18] sm:$0xff] %vm1561, %v2405
        %2415 = vst.msk [vmem:[%s2410 + $0x20] sm:$0xff] %vm1561, %v2406
        %2416 = vst.msk [vmem:[%s2410 + $0x28] sm:$0xff] %vm1561, %v2407
        %2417 = vst.msk [vmem:[%s2410 + $0x30] sm:$0xff] %vm1561, %v2408
        %2418 = vst.msk [vmem:[%s2410 + $0x38] sm:$0xff] %vm1561, %v2409
        %2421 = vrot.lane.b32.xlu0 %v1387, 96
        %v2422 = vpop.permute.xlu0 %2421
        %2423 = vrot.lane.b32.xlu0 %v1392, 96
        %v2424 = vpop.permute.xlu0 %2423
        %v2428 = vsel %vm1561, %v2402, 0
        %2430 = vmatprep.subr.mxu0 0.0
        %2431 = vmatpush1.msra.mxu0 %v2422
        %2432 = vmatprep.subr.mxu0 0.0
        %2433 = vmatpush1.msra.mxu0 %v2424
        %2434 = vmatprep.subr.mxu0 0.0
        %2435 = vmatpush1.msra.mxu0 0.0
        %2436 = vmatprep.subr.mxu0 0.0
        %2437 = vmatpush1.msra.mxu0 0.0
        %2438 = vmatprep.subr.mxu0 0.0
        %2439 = vmatpush1.msra.mxu0 0.0
        %2440 = vmatprep.subr.mxu0 0.0
        %2441 = vmatpush1.msra.mxu0 0.0
        %2442 = vmatprep.subr.mxu0 0.0
        %2443 = vmatpush1.msra.mxu0 0.0
        %2444 = vmatprep.subr.mxu0 0.0
        %2445 = vmatpush1.msra.mxu0 0.0
        %2446 = vmatprep.subr.mxu0 0.0
        %2447 = vmatpush1.msra.mxu0 0.0
        %2448 = vmatprep.subr.mxu0 0.0
        %2449 = vmatpush1.msra.mxu0 0.0
        %2450 = vmatprep.subr.mxu0 0.0
        %2451 = vmatpush1.msra.mxu0 0.0
        %2452 = vmatprep.subr.mxu0 0.0
        %2453 = vmatpush1.msra.mxu0 0.0
        %2454 = vmatprep.subr.mxu0 0.0
        %2455 = vmatpush1.msra.mxu0 0.0
        %2456 = vmatprep.subr.mxu0 0.0
        %2457 = vmatpush1.msra.mxu0 0.0
        %2458 = vmatprep.subr.mxu0 0.0
        %2459 = vmatpush1.msra.mxu0 0.0
        %2460 = vmatprep.subr.mxu0 0.0
        %2461 = vmatpush1.msra.mxu0 0.0
        %2462 = vmatprep.subr.mxu0 0.0
        %2463 = vmatpush1.msra.mxu0 0.0
        %2464 = vmatprep.subr.mxu0 0.0
        %2465 = vmatpush1.msra.mxu0 0.0
        %2466 = vmatprep.subr.mxu0 0.0
        %2467 = vmatpush1.msra.mxu0 0.0
        %2468 = vmatprep.subr.mxu0 0.0
        %2469 = vmatpush1.msra.mxu0 0.0
        %2470 = vmatprep.subr.mxu0 0.0
        %2471 = vmatpush1.msra.mxu0 0.0
        %2472 = vmatprep.subr.mxu0 0.0
        %2473 = vmatpush1.msra.mxu0 0.0
        %2474 = vmatprep.subr.mxu0 0.0
        %2475 = vmatpush1.msra.mxu0 0.0
        %2476 = vmatprep.subr.mxu0 0.0
        %2477 = vmatpush1.msra.mxu0 0.0
        %2478 = vmatprep.subr.mxu0 0.0
        %2479 = vmatpush1.msra.mxu0 0.0
        %2480 = vmatprep.subr.mxu0 0.0
        %2481 = vmatpush1.msra.mxu0 0.0
        %2482 = vmatprep.subr.mxu0 0.0
        %2483 = vmatpush1.msra.mxu0 0.0
        %2484 = vmatprep.subr.mxu0 0.0
        %2485 = vmatpush1.msra.mxu0 0.0
        %2486 = vmatprep.subr.mxu0 0.0
        %2487 = vmatpush1.msra.mxu0 0.0
        %2488 = vmatprep.subr.mxu0 0.0
        %2489 = vmatpush1.msra.mxu0 0.0
        %2490 = vmatprep.subr.mxu0 0.0
        %2491 = vmatpush1.msra.mxu0 0.0
        %2492 = vmatprep.subr.mxu0 0.0
        %2493 = vmatpush1.msra.mxu0 0.0
        %2494 = vmatprep.mubr.f32.mxu0 0.0
        %2495 = vmatmul.mubr.f32.gmra.mrb[0].mxu0 %v2428
        %v2496 = vpop.f32.mrb[0].mxu0
        %v2497 = vadd.f32 0.0, %v2496
        %v2498 = vpop.f32.mrb[0].mxu0
        %2499 = vdwg.mxu0
        %2502 = vrot.lane.b32.xlu0 %v1397, 96
        %v2503 = vpop.permute.xlu0 %2502
        %2504 = vrot.lane.b32.xlu0 %v1402, 96
        %v2505 = vpop.permute.xlu0 %2504
        %v2509 = vsel %vm1561, %v2403, 0
        %2511 = vmatprep.subr.mxu0 0.0
        %2512 = vmatpush1.msra.mxu0 %v2503
        %2513 = vmatprep.subr.mxu0 0.0
        %2514 = vmatpush1.msra.mxu0 %v2505
        %2515 = vmatprep.subr.mxu0 0.0
        %2516 = vmatpush1.msra.mxu0 0.0
        %2517 = vmatprep.subr.mxu0 0.0
        %2518 = vmatpush1.msra.mxu0 0.0
        %2519 = vmatprep.subr.mxu0 0.0
        %2520 = vmatpush1.msra.mxu0 0.0
        %2521 = vmatprep.subr.mxu0 0.0
        %2522 = vmatpush1.msra.mxu0 0.0
        %2523 = vmatprep.subr.mxu0 0.0
        %2524 = vmatpush1.msra.mxu0 0.0
        %2525 = vmatprep.subr.mxu0 0.0
        %2526 = vmatpush1.msra.mxu0 0.0
        %2527 = vmatprep.subr.mxu0 0.0
        %2528 = vmatpush1.msra.mxu0 0.0
        %2529 = vmatprep.subr.mxu0 0.0
        %2530 = vmatpush1.msra.mxu0 0.0
        %2531 = vmatprep.subr.mxu0 0.0
        %2532 = vmatpush1.msra.mxu0 0.0
        %2533 = vmatprep.subr.mxu0 0.0
        %2534 = vmatpush1.msra.mxu0 0.0
        %2535 = vmatprep.subr.mxu0 0.0
        %2536 = vmatpush1.msra.mxu0 0.0
        %2537 = vmatprep.subr.mxu0 0.0
        %2538 = vmatpush1.msra.mxu0 0.0
        %2539 = vmatprep.subr.mxu0 0.0
        %2540 = vmatpush1.msra.mxu0 0.0
        %2541 = vmatprep.subr.mxu0 0.0
        %2542 = vmatpush1.msra.mxu0 0.0
        %2543 = vmatprep.subr.mxu0 0.0
        %2544 = vmatpush1.msra.mxu0 0.0
        %2545 = vmatprep.subr.mxu0 0.0
        %2546 = vmatpush1.msra.mxu0 0.0
        %2547 = vmatprep.subr.mxu0 0.0
        %2548 = vmatpush1.msra.mxu0 0.0
        %2549 = vmatprep.subr.mxu0 0.0
        %2550 = vmatpush1.msra.mxu0 0.0
        %2551 = vmatprep.subr.mxu0 0.0
        %2552 = vmatpush1.msra.mxu0 0.0
        %2553 = vmatprep.subr.mxu0 0.0
        %2554 = vmatpush1.msra.mxu0 0.0
        %2555 = vmatprep.subr.mxu0 0.0
        %2556 = vmatpush1.msra.mxu0 0.0
        %2557 = vmatprep.subr.mxu0 0.0
        %2558 = vmatpush1.msra.mxu0 0.0
        %2559 = vmatprep.subr.mxu0 0.0
        %2560 = vmatpush1.msra.mxu0 0.0
        %2561 = vmatprep.subr.mxu0 0.0
        %2562 = vmatpush1.msra.mxu0 0.0
        %2563 = vmatprep.subr.mxu0 0.0
        %2564 = vmatpush1.msra.mxu0 0.0
        %2565 = vmatprep.subr.mxu0 0.0
        %2566 = vmatpush1.msra.mxu0 0.0
        %2567 = vmatprep.subr.mxu0 0.0
        %2568 = vmatpush1.msra.mxu0 0.0
        %2569 = vmatprep.subr.mxu0 0.0
        %2570 = vmatpush1.msra.mxu0 0.0
        %2571 = vmatprep.subr.mxu0 0.0
        %2572 = vmatpush1.msra.mxu0 0.0
        %2573 = vmatprep.subr.mxu0 0.0
        %2574 = vmatpush1.msra.mxu0 0.0
        %2575 = vmatprep.mubr.f32.mxu0 0.0
        %2576 = vmatmul.mubr.f32.gmra.mrb[0].mxu0 %v2509
        %v2577 = vpop.f32.mrb[0].mxu0
        %v2578 = vadd.f32 0.0, %v2577
        %v2579 = vpop.f32.mrb[0].mxu0
        %2580 = vdwg.mxu0
        %2583 = vrot.lane.b32.xlu0 %v1407, 96
        %v2584 = vpop.permute.xlu0 %2583
        %2585 = vrot.lane.b32.xlu0 %v1412, 96
        %v2586 = vpop.permute.xlu0 %2585
        %v2590 = vsel %vm1561, %v2404, 0
        %2592 = vmatprep.subr.mxu0 0.0
        %2593 = vmatpush1.msra.mxu0 %v2584
        %2594 = vmatprep.subr.mxu0 0.0
        %2595 = vmatpush1.msra.mxu0 %v2586
        %2596 = vmatprep.subr.mxu0 0.0
        %2597 = vmatpush1.msra.mxu0 0.0
        %2598 = vmatprep.subr.mxu0 0.0
        %2599 = vmatpush1.msra.mxu0 0.0
        %2600 = vmatprep.subr.mxu0 0.0
        %2601 = vmatpush1.msra.mxu0 0.0
        %2602 = vmatprep.subr.mxu0 0.0
        %2603 = vmatpush1.msra.mxu0 0.0
        %2604 = vmatprep.subr.mxu0 0.0
        %2605 = vmatpush1.msra.mxu0 0.0
        %2606 = vmatprep.subr.mxu0 0.0
        %2607 = vmatpush1.msra.mxu0 0.0
        %2608 = vmatprep.subr.mxu0 0.0
        %2609 = vmatpush1.msra.mxu0 0.0
        %2610 = vmatprep.subr.mxu0 0.0
        %2611 = vmatpush1.msra.mxu0 0.0
        %2612 = vmatprep.subr.mxu0 0.0
        %2613 = vmatpush1.msra.mxu0 0.0
        %2614 = vmatprep.subr.mxu0 0.0
        %2615 = vmatpush1.msra.mxu0 0.0
        %2616 = vmatprep.subr.mxu0 0.0
        %2617 = vmatpush1.msra.mxu0 0.0
        %2618 = vmatprep.subr.mxu0 0.0
        %2619 = vmatpush1.msra.mxu0 0.0
        %2620 = vmatprep.subr.mxu0 0.0
        %2621 = vmatpush1.msra.mxu0 0.0
        %2622 = vmatprep.subr.mxu0 0.0
        %2623 = vmatpush1.msra.mxu0 0.0
        %2624 = vmatprep.subr.mxu0 0.0
        %2625 = vmatpush1.msra.mxu0 0.0
        %2626 = vmatprep.subr.mxu0 0.0
        %2627 = vmatpush1.msra.mxu0 0.0
        %2628 = vmatprep.subr.mxu0 0.0
        %2629 = vmatpush1.msra.mxu0 0.0
        %2630 = vmatprep.subr.mxu0 0.0
        %2631 = vmatpush1.msra.mxu0 0.0
        %2632 = vmatprep.subr.mxu0 0.0
        %2633 = vmatpush1.msra.mxu0 0.0
        %2634 = vmatprep.subr.mxu0 0.0
        %2635 = vmatpush1.msra.mxu0 0.0
        %2636 = vmatprep.subr.mxu0 0.0
        %2637 = vmatpush1.msra.mxu0 0.0
        %2638 = vmatprep.subr.mxu0 0.0
        %2639 = vmatpush1.msra.mxu0 0.0
        %2640 = vmatprep.subr.mxu0 0.0
        %2641 = vmatpush1.msra.mxu0 0.0
        %2642 = vmatprep.subr.mxu0 0.0
        %2643 = vmatpush1.msra.mxu0 0.0
        %2644 = vmatprep.subr.mxu0 0.0
        %2645 = vmatpush1.msra.mxu0 0.0
        %2646 = vmatprep.subr.mxu0 0.0
        %2647 = vmatpush1.msra.mxu0 0.0
        %2648 = vmatprep.subr.mxu0 0.0
        %2649 = vmatpush1.msra.mxu0 0.0
        %2650 = vmatprep.subr.mxu0 0.0
        %2651 = vmatpush1.msra.mxu0 0.0
        %2652 = vmatprep.subr.mxu0 0.0
        %2653 = vmatpush1.msra.mxu0 0.0
        %2654 = vmatprep.subr.mxu0 0.0
        %2655 = vmatpush1.msra.mxu0 0.0
        %2656 = vmatprep.mubr.f32.mxu0 0.0
        %2657 = vmatmul.mubr.f32.gmra.mrb[0].mxu0 %v2590
        %v2658 = vpop.f32.mrb[0].mxu0
        %v2659 = vadd.f32 0.0, %v2658
        %v2660 = vpop.f32.mrb[0].mxu0
        %2661 = vdwg.mxu0
        %2664 = vrot.lane.b32.xlu0 %v1417, 96
        %v2665 = vpop.permute.xlu0 %2664
        %2666 = vrot.lane.b32.xlu0 %v1422, 96
        %v2667 = vpop.permute.xlu0 %2666
        %v2671 = vsel %vm1561, %v2405, 0
        %2673 = vmatprep.subr.mxu0 0.0
        %2674 = vmatpush1.msra.mxu0 %v2665
        %2675 = vmatprep.subr.mxu0 0.0
        %2676 = vmatpush1.msra.mxu0 %v2667
        %2677 = vmatprep.subr.mxu0 0.0
        %2678 = vmatpush1.msra.mxu0 0.0
        %2679 = vmatprep.subr.mxu0 0.0
        %2680 = vmatpush1.msra.mxu0 0.0
        %2681 = vmatprep.subr.mxu0 0.0
        %2682 = vmatpush1.msra.mxu0 0.0
        %2683 = vmatprep.subr.mxu0 0.0
        %2684 = vmatpush1.msra.mxu0 0.0
        %2685 = vmatprep.subr.mxu0 0.0
        %2686 = vmatpush1.msra.mxu0 0.0
        %2687 = vmatprep.subr.mxu0 0.0
        %2688 = vmatpush1.msra.mxu0 0.0
        %2689 = vmatprep.subr.mxu0 0.0
        %2690 = vmatpush1.msra.mxu0 0.0
        %2691 = vmatprep.subr.mxu0 0.0
        %2692 = vmatpush1.msra.mxu0 0.0
        %2693 = vmatprep.subr.mxu0 0.0
        %2694 = vmatpush1.msra.mxu0 0.0
        %2695 = vmatprep.subr.mxu0 0.0
        %2696 = vmatpush1.msra.mxu0 0.0
        %2697 = vmatprep.subr.mxu0 0.0
        %2698 = vmatpush1.msra.mxu0 0.0
        %2699 = vmatprep.subr.mxu0 0.0
        %2700 = vmatpush1.msra.mxu0 0.0
        %2701 = vmatprep.subr.mxu0 0.0
        %2702 = vmatpush1.msra.mxu0 0.0
        %2703 = vmatprep.subr.mxu0 0.0
        %2704 = vmatpush1.msra.mxu0 0.0
        %2705 = vmatprep.subr.mxu0 0.0
        %2706 = vmatpush1.msra.mxu0 0.0
        %2707 = vmatprep.subr.mxu0 0.0
        %2708 = vmatpush1.msra.mxu0 0.0
        %2709 = vmatprep.subr.mxu0 0.0
        %2710 = vmatpush1.msra.mxu0 0.0
        %2711 = vmatprep.subr.mxu0 0.0
        %2712 = vmatpush1.msra.mxu0 0.0
        %2713 = vmatprep.subr.mxu0 0.0
        %2714 = vmatpush1.msra.mxu0 0.0
        %2715 = vmatprep.subr.mxu0 0.0
        %2716 = vmatpush1.msra.mxu0 0.0
        %2717 = vmatprep.subr.mxu0 0.0
        %2718 = vmatpush1.msra.mxu0 0.0
        %2719 = vmatprep.subr.mxu0 0.0
        %2720 = vmatpush1.msra.mxu0 0.0
        %2721 = vmatprep.subr.mxu0 0.0
        %2722 = vmatpush1.msra.mxu0 0.0
        %2723 = vmatprep.subr.mxu0 0.0
        %2724 = vmatpush1.msra.mxu0 0.0
        %2725 = vmatprep.subr.mxu0 0.0
        %2726 = vmatpush1.msra.mxu0 0.0
        %2727 = vmatprep.subr.mxu0 0.0
        %2728 = vmatpush1.msra.mxu0 0.0
        %2729 = vmatprep.subr.mxu0 0.0
        %2730 = vmatpush1.msra.mxu0 0.0
        %2731 = vmatprep.subr.mxu0 0.0
        %2732 = vmatpush1.msra.mxu0 0.0
        %2733 = vmatprep.subr.mxu0 0.0
        %2734 = vmatpush1.msra.mxu0 0.0
        %2735 = vmatprep.subr.mxu0 0.0
        %2736 = vmatpush1.msra.mxu0 0.0
        %2737 = vmatprep.mubr.f32.mxu0 0.0
        %2738 = vmatmul.mubr.f32.gmra.mrb[0].mxu0 %v2671
        %v2739 = vpop.f32.mrb[0].mxu0
        %v2740 = vadd.f32 0.0, %v2739
        %v2741 = vpop.f32.mrb[0].mxu0
        %2742 = vdwg.mxu0
        %2745 = vrot.lane.b32.xlu0 %v1427, 96
        %v2746 = vpop.permute.xlu0 %2745
        %2747 = vrot.lane.b32.xlu0 %v1432, 96
        %v2748 = vpop.permute.xlu0 %2747
        %v2752 = vsel %vm1561, %v2406, 0
        %2754 = vmatprep.subr.mxu0 0.0
        %2755 = vmatpush1.msra.mxu0 %v2746
        %2756 = vmatprep.subr.mxu0 0.0
        %2757 = vmatpush1.msra.mxu0 %v2748
        %2758 = vmatprep.subr.mxu0 0.0
        %2759 = vmatpush1.msra.mxu0 0.0
        %2760 = vmatprep.subr.mxu0 0.0
        %2761 = vmatpush1.msra.mxu0 0.0
        %2762 = vmatprep.subr.mxu0 0.0
        %2763 = vmatpush1.msra.mxu0 0.0
        %2764 = vmatprep.subr.mxu0 0.0
        %2765 = vmatpush1.msra.mxu0 0.0
        %2766 = vmatprep.subr.mxu0 0.0
        %2767 = vmatpush1.msra.mxu0 0.0
        %2768 = vmatprep.subr.mxu0 0.0
        %2769 = vmatpush1.msra.mxu0 0.0
        %2770 = vmatprep.subr.mxu0 0.0
        %2771 = vmatpush1.msra.mxu0 0.0
        %2772 = vmatprep.subr.mxu0 0.0
        %2773 = vmatpush1.msra.mxu0 0.0
        %2774 = vmatprep.subr.mxu0 0.0
        %2775 = vmatpush1.msra.mxu0 0.0
        %2776 = vmatprep.subr.mxu0 0.0
        %2777 = vmatpush1.msra.mxu0 0.0
        %2778 = vmatprep.subr.mxu0 0.0
        %2779 = vmatpush1.msra.mxu0 0.0
        %2780 = vmatprep.subr.mxu0 0.0
        %2781 = vmatpush1.msra.mxu0 0.0
        %2782 = vmatprep.subr.mxu0 0.0
        %2783 = vmatpush1.msra.mxu0 0.0
        %2784 = vmatprep.subr.mxu0 0.0
        %2785 = vmatpush1.msra.mxu0 0.0
        %2786 = vmatprep.subr.mxu0 0.0
        %2787 = vmatpush1.msra.mxu0 0.0
        %2788 = vmatprep.subr.mxu0 0.0
        %2789 = vmatpush1.msra.mxu0 0.0
        %2790 = vmatprep.subr.mxu0 0.0
        %2791 = vmatpush1.msra.mxu0 0.0
        %2792 = vmatprep.subr.mxu0 0.0
        %2793 = vmatpush1.msra.mxu0 0.0
        %2794 = vmatprep.subr.mxu0 0.0
        %2795 = vmatpush1.msra.mxu0 0.0
        %2796 = vmatprep.subr.mxu0 0.0
        %2797 = vmatpush1.msra.mxu0 0.0
        %2798 = vmatprep.subr.mxu0 0.0
        %2799 = vmatpush1.msra.mxu0 0.0
        %2800 = vmatprep.subr.mxu0 0.0
        %2801 = vmatpush1.msra.mxu0 0.0
        %2802 = vmatprep.subr.mxu0 0.0
        %2803 = vmatpush1.msra.mxu0 0.0
        %2804 = vmatprep.subr.mxu0 0.0
        %2805 = vmatpush1.msra.mxu0 0.0
        %2806 = vmatprep.subr.mxu0 0.0
        %2807 = vmatpush1.msra.mxu0 0.0
        %2808 = vmatprep.subr.mxu0 0.0
        %2809 = vmatpush1.msra.mxu0 0.0
        %2810 = vmatprep.subr.mxu0 0.0
        %2811 = vmatpush1.msra.mxu0 0.0
        %2812 = vmatprep.subr.mxu0 0.0
        %2813 = vmatpush1.msra.mxu0 0.0
        %2814 = vmatprep.subr.mxu0 0.0
        %2815 = vmatpush1.msra.mxu0 0.0
        %2816 = vmatprep.subr.mxu0 0.0
        %2817 = vmatpush1.msra.mxu0 0.0
        %2818 = vmatprep.mubr.f32.mxu0 0.0
        %2819 = vmatmul.mubr.f32.gmra.mrb[0].mxu0 %v2752
        %v2820 = vpop.f32.mrb[0].mxu0
        %v2821 = vadd.f32 0.0, %v2820
        %v2822 = vpop.f32.mrb[0].mxu0
        %2823 = vdwg.mxu0
        %2826 = vrot.lane.b32.xlu0 %v1437, 96
        %v2827 = vpop.permute.xlu0 %2826
        %2828 = vrot.lane.b32.xlu0 %v1442, 96
        %v2829 = vpop.permute.xlu0 %2828
        %v2833 = vsel %vm1561, %v2407, 0
        %2835 = vmatprep.subr.mxu0 0.0
        %2836 = vmatpush1.msra.mxu0 %v2827
        %2837 = vmatprep.subr.mxu0 0.0
        %2838 = vmatpush1.msra.mxu0 %v2829
        %2839 = vmatprep.subr.mxu0 0.0
        %2840 = vmatpush1.msra.mxu0 0.0
        %2841 = vmatprep.subr.mxu0 0.0
        %2842 = vmatpush1.msra.mxu0 0.0
        %2843 = vmatprep.subr.mxu0 0.0
        %2844 = vmatpush1.msra.mxu0 0.0
        %2845 = vmatprep.subr.mxu0 0.0
        %2846 = vmatpush1.msra.mxu0 0.0
        %2847 = vmatprep.subr.mxu0 0.0
        %2848 = vmatpush1.msra.mxu0 0.0
        %2849 = vmatprep.subr.mxu0 0.0
        %2850 = vmatpush1.msra.mxu0 0.0
        %2851 = vmatprep.subr.mxu0 0.0
        %2852 = vmatpush1.msra.mxu0 0.0
        %2853 = vmatprep.subr.mxu0 0.0
        %2854 = vmatpush1.msra.mxu0 0.0
        %2855 = vmatprep.subr.mxu0 0.0
        %2856 = vmatpush1.msra.mxu0 0.0
        %2857 = vmatprep.subr.mxu0 0.0
        %2858 = vmatpush1.msra.mxu0 0.0
        %2859 = vmatprep.subr.mxu0 0.0
        %2860 = vmatpush1.msra.mxu0 0.0
        %2861 = vmatprep.subr.mxu0 0.0
        %2862 = vmatpush1.msra.mxu0 0.0
        %2863 = vmatprep.subr.mxu0 0.0
        %2864 = vmatpush1.msra.mxu0 0.0
        %2865 = vmatprep.subr.mxu0 0.0
        %2866 = vmatpush1.msra.mxu0 0.0
        %2867 = vmatprep.subr.mxu0 0.0
        %2868 = vmatpush1.msra.mxu0 0.0
        %2869 = vmatprep.subr.mxu0 0.0
        %2870 = vmatpush1.msra.mxu0 0.0
        %2871 = vmatprep.subr.mxu0 0.0
        %2872 = vmatpush1.msra.mxu0 0.0
        %2873 = vmatprep.subr.mxu0 0.0
        %2874 = vmatpush1.msra.mxu0 0.0
        %2875 = vmatprep.subr.mxu0 0.0
        %2876 = vmatpush1.msra.mxu0 0.0
        %2877 = vmatprep.subr.mxu0 0.0
        %2878 = vmatpush1.msra.mxu0 0.0
        %2879 = vmatprep.subr.mxu0 0.0
        %2880 = vmatpush1.msra.mxu0 0.0
        %2881 = vmatprep.subr.mxu0 0.0
        %2882 = vmatpush1.msra.mxu0 0.0
        %2883 = vmatprep.subr.mxu0 0.0
        %2884 = vmatpush1.msra.mxu0 0.0
        %2885 = vmatprep.subr.mxu0 0.0
        %2886 = vmatpush1.msra.mxu0 0.0
        %2887 = vmatprep.subr.mxu0 0.0
        %2888 = vmatpush1.msra.mxu0 0.0
        %2889 = vmatprep.subr.mxu0 0.0
        %2890 = vmatpush1.msra.mxu0 0.0
        %2891 = vmatprep.subr.mxu0 0.0
        %2892 = vmatpush1.msra.mxu0 0.0
        %2893 = vmatprep.subr.mxu0 0.0
        %2894 = vmatpush1.msra.mxu0 0.0
        %2895 = vmatprep.subr.mxu0 0.0
        %2896 = vmatpush1.msra.mxu0 0.0
        %2897 = vmatprep.subr.mxu0 0.0
        %2898 = vmatpush1.msra.mxu0 0.0
        %2899 = vmatprep.mubr.f32.mxu0 0.0
        %2900 = vmatmul.mubr.f32.gmra.mrb[0].mxu0 %v2833
        %v2901 = vpop.f32.mrb[0].mxu0
        %v2902 = vadd.f32 0.0, %v2901
        %v2903 = vpop.f32.mrb[0].mxu0
        %2904 = vdwg.mxu0
        %2907 = vrot.lane.b32.xlu0 %v1447, 96
        %v2908 = vpop.permute.xlu0 %2907
        %2909 = vrot.lane.b32.xlu0 %v1452, 96
        %v2910 = vpop.permute.xlu0 %2909
        %v2914 = vsel %vm1561, %v2408, 0
        %2916 = vmatprep.subr.mxu0 0.0
        %2917 = vmatpush1.msra.mxu0 %v2908
        %2918 = vmatprep.subr.mxu0 0.0
        %2919 = vmatpush1.msra.mxu0 %v2910
        %2920 = vmatprep.subr.mxu0 0.0
        %2921 = vmatpush1.msra.mxu0 0.0
        %2922 = vmatprep.subr.mxu0 0.0
        %2923 = vmatpush1.msra.mxu0 0.0
        %2924 = vmatprep.subr.mxu0 0.0
        %2925 = vmatpush1.msra.mxu0 0.0
        %2926 = vmatprep.subr.mxu0 0.0
        %2927 = vmatpush1.msra.mxu0 0.0
        %2928 = vmatprep.subr.mxu0 0.0
        %2929 = vmatpush1.msra.mxu0 0.0
        %2930 = vmatprep.subr.mxu0 0.0
        %2931 = vmatpush1.msra.mxu0 0.0
        %2932 = vmatprep.subr.mxu0 0.0
        %2933 = vmatpush1.msra.mxu0 0.0
        %2934 = vmatprep.subr.mxu0 0.0
        %2935 = vmatpush1.msra.mxu0 0.0
        %2936 = vmatprep.subr.mxu0 0.0
        %2937 = vmatpush1.msra.mxu0 0.0
        %2938 = vmatprep.subr.mxu0 0.0
        %2939 = vmatpush1.msra.mxu0 0.0
        %2940 = vmatprep.subr.mxu0 0.0
        %2941 = vmatpush1.msra.mxu0 0.0
        %2942 = vmatprep.subr.mxu0 0.0
        %2943 = vmatpush1.msra.mxu0 0.0
        %2944 = vmatprep.subr.mxu0 0.0
        %2945 = vmatpush1.msra.mxu0 0.0
        %2946 = vmatprep.subr.mxu0 0.0
        %2947 = vmatpush1.msra.mxu0 0.0
        %2948 = vmatprep.subr.mxu0 0.0
        %2949 = vmatpush1.msra.mxu0 0.0
        %2950 = vmatprep.subr.mxu0 0.0
        %2951 = vmatpush1.msra.mxu0 0.0
        %2952 = vmatprep.subr.mxu0 0.0
        %2953 = vmatpush1.msra.mxu0 0.0
        %2954 = vmatprep.subr.mxu0 0.0
        %2955 = vmatpush1.msra.mxu0 0.0
        %2956 = vmatprep.subr.mxu0 0.0
        %2957 = vmatpush1.msra.mxu0 0.0
        %2958 = vmatprep.subr.mxu0 0.0
        %2959 = vmatpush1.msra.mxu0 0.0
        %2960 = vmatprep.subr.mxu0 0.0
        %2961 = vmatpush1.msra.mxu0 0.0
        %2962 = vmatprep.subr.mxu0 0.0
        %2963 = vmatpush1.msra.mxu0 0.0
        %2964 = vmatprep.subr.mxu0 0.0
        %2965 = vmatpush1.msra.mxu0 0.0
        %2966 = vmatprep.subr.mxu0 0.0
        %2967 = vmatpush1.msra.mxu0 0.0
        %2968 = vmatprep.subr.mxu0 0.0
        %2969 = vmatpush1.msra.mxu0 0.0
        %2970 = vmatprep.subr.mxu0 0.0
        %2971 = vmatpush1.msra.mxu0 0.0
        %2972 = vmatprep.subr.mxu0 0.0
        %2973 = vmatpush1.msra.mxu0 0.0
        %2974 = vmatprep.subr.mxu0 0.0
        %2975 = vmatpush1.msra.mxu0 0.0
        %2976 = vmatprep.subr.mxu0 0.0
        %2977 = vmatpush1.msra.mxu0 0.0
        %2978 = vmatprep.subr.mxu0 0.0
        %2979 = vmatpush1.msra.mxu0 0.0
        %2980 = vmatprep.mubr.f32.mxu0 0.0
        %2981 = vmatmul.mubr.f32.gmra.mrb[0].mxu0 %v2914
        %v2982 = vpop.f32.mrb[0].mxu0
        %v2983 = vadd.f32 0.0, %v2982
        %v2984 = vpop.f32.mrb[0].mxu0
        %2985 = vdwg.mxu0
        %2988 = vrot.lane.b32.xlu0 %v1457, 96
        %v2989 = vpop.permute.xlu0 %2988
        %2990 = vrot.lane.b32.xlu0 %v1462, 96
        %v2991 = vpop.permute.xlu0 %2990
        %v2995 = vsel %vm1561, %v2409, 0
        %2997 = vmatprep.subr.mxu0 0.0
        %2998 = vmatpush1.msra.mxu0 %v2989
        %2999 = vmatprep.subr.mxu0 0.0
        %3000 = vmatpush1.msra.mxu0 %v2991
        %3001 = vmatprep.subr.mxu0 0.0
        %3002 = vmatpush1.msra.mxu0 0.0
        %3003 = vmatprep.subr.mxu0 0.0
        %3004 = vmatpush1.msra.mxu0 0.0
        %3005 = vmatprep.subr.mxu0 0.0
        %3006 = vmatpush1.msra.mxu0 0.0
        %3007 = vmatprep.subr.mxu0 0.0
        %3008 = vmatpush1.msra.mxu0 0.0
        %3009 = vmatprep.subr.mxu0 0.0
        %3010 = vmatpush1.msra.mxu0 0.0
        %3011 = vmatprep.subr.mxu0 0.0
        %3012 = vmatpush1.msra.mxu0 0.0
        %3013 = vmatprep.subr.mxu0 0.0
        %3014 = vmatpush1.msra.mxu0 0.0
        %3015 = vmatprep.subr.mxu0 0.0
        %3016 = vmatpush1.msra.mxu0 0.0
        %3017 = vmatprep.subr.mxu0 0.0
        %3018 = vmatpush1.msra.mxu0 0.0
        %3019 = vmatprep.subr.mxu0 0.0
        %3020 = vmatpush1.msra.mxu0 0.0
        %3021 = vmatprep.subr.mxu0 0.0
        %3022 = vmatpush1.msra.mxu0 0.0
        %3023 = vmatprep.subr.mxu0 0.0
        %3024 = vmatpush1.msra.mxu0 0.0
        %3025 = vmatprep.subr.mxu0 0.0
        %3026 = vmatpush1.msra.mxu0 0.0
        %3027 = vmatprep.subr.mxu0 0.0
        %3028 = vmatpush1.msra.mxu0 0.0
        %3029 = vmatprep.subr.mxu0 0.0
        %3030 = vmatpush1.msra.mxu0 0.0
        %3031 = vmatprep.subr.mxu0 0.0
        %3032 = vmatpush1.msra.mxu0 0.0
        %3033 = vmatprep.subr.mxu0 0.0
        %3034 = vmatpush1.msra.mxu0 0.0
        %3035 = vmatprep.subr.mxu0 0.0
        %3036 = vmatpush1.msra.mxu0 0.0
        %3037 = vmatprep.subr.mxu0 0.0
        %3038 = vmatpush1.msra.mxu0 0.0
        %3039 = vmatprep.subr.mxu0 0.0
        %3040 = vmatpush1.msra.mxu0 0.0
        %3041 = vmatprep.subr.mxu0 0.0
        %3042 = vmatpush1.msra.mxu0 0.0
        %3043 = vmatprep.subr.mxu0 0.0
        %3044 = vmatpush1.msra.mxu0 0.0
        %3045 = vmatprep.subr.mxu0 0.0
        %3046 = vmatpush1.msra.mxu0 0.0
        %3047 = vmatprep.subr.mxu0 0.0
        %3048 = vmatpush1.msra.mxu0 0.0
        %3049 = vmatprep.subr.mxu0 0.0
        %3050 = vmatpush1.msra.mxu0 0.0
        %3051 = vmatprep.subr.mxu0 0.0
        %3052 = vmatpush1.msra.mxu0 0.0
        %3053 = vmatprep.subr.mxu0 0.0
        %3054 = vmatpush1.msra.mxu0 0.0
        %3055 = vmatprep.subr.mxu0 0.0
        %3056 = vmatpush1.msra.mxu0 0.0
        %3057 = vmatprep.subr.mxu0 0.0
        %3058 = vmatpush1.msra.mxu0 0.0
        %3059 = vmatprep.subr.mxu0 0.0
        %3060 = vmatpush1.msra.mxu0 0.0
        %3061 = vmatprep.mubr.f32.mxu0 0.0
        %3062 = vmatmul.mubr.f32.gmra.mrb[0].mxu0 %v2995
        %v3063 = vpop.f32.mrb[0].mxu0
        %v3064 = vadd.f32 0.0, %v3063
        %v3065 = vpop.f32.mrb[0].mxu0
        %3066 = vdwg.mxu0
        %3067 = vset.pattern.permute.xlu0 2
        %3068 = vperm.xlu0 %3067, %v705
        %v3069 = vpop.permute.xlu0 %3068
        %3071 = vset.pattern.permute.xlu0 2
        %3072 = vperm.xlu0 %3071, %v710
        %v3073 = vpop.permute.xlu0 %3072
        %3075 = vset.pattern.permute.xlu0 2
        %3076 = vperm.xlu0 %3075, %v715
        %v3077 = vpop.permute.xlu0 %3076
        %3079 = vset.pattern.permute.xlu0 2
        %3080 = vperm.xlu0 %3079, %v720
        %v3081 = vpop.permute.xlu0 %3080
        %3083 = vset.pattern.permute.xlu0 2
        %3084 = vperm.xlu0 %3083, %v725
        %v3085 = vpop.permute.xlu0 %3084
        %3087 = vset.pattern.permute.xlu0 2
        %3088 = vperm.xlu0 %3087, %v730
        %v3089 = vpop.permute.xlu0 %3088
        %3091 = vset.pattern.permute.xlu0 2
        %3092 = vperm.xlu0 %3091, %v735
        %v3093 = vpop.permute.xlu0 %3092
        %3095 = vset.pattern.permute.xlu0 2
        %3096 = vperm.xlu0 %3095, %v740
        %v3097 = vpop.permute.xlu0 %3096
        %v3099 = vlaneseq
        %v3100 = vshrl.u32 %v3099, 7
        %v3101 = vsub.s32 2, %v3100
        %v3102 = vrot.slane %v811, %v3101
        %v3103 = vlaneseq
        %v3104 = vshrl.u32 %v3103, 7
        %v3105 = vsub.s32 2, %v3104
        %v3106 = vrot.slane %v881, %v3105
        %v3107 = vlaneseq
        %v3108 = vshrl.u32 %v3107, 7
        %v3109 = vsub.s32 2, %v3108
        %v3110 = vrot.slane %v951, %v3109
        %v3111 = vlaneseq
        %v3112 = vshrl.u32 %v3111, 7
        %v3113 = vsub.s32 2, %v3112
        %v3114 = vrot.slane %v1021, %v3113
        %v3115 = vlaneseq
        %v3116 = vshrl.u32 %v3115, 7
        %v3117 = vsub.s32 2, %v3116
        %v3118 = vrot.slane %v1091, %v3117
        %v3119 = vlaneseq
        %v3120 = vshrl.u32 %v3119, 7
        %v3121 = vsub.s32 2, %v3120
        %v3122 = vrot.slane %v1161, %v3121
        %v3123 = vlaneseq
        %v3124 = vshrl.u32 %v3123, 7
        %v3125 = vsub.s32 2, %v3124
        %v3126 = vrot.slane %v1231, %v3125
        %v3127 = vlaneseq
        %v3128 = vshrl.u32 %v3127, 7
        %v3129 = vsub.s32 2, %v3128
        %v3130 = vrot.slane %v1301, %v3129
        %v3131 = vadd.f32 %v3069, %v3102
        %v3132 = vadd.f32 %v3073, %v3106
        %v3133 = vadd.f32 %v3077, %v3110
        %v3134 = vadd.f32 %v3081, %v3114
        %v3135 = vadd.f32 %v3085, %v3118
        %v3136 = vadd.f32 %v3089, %v3122
        %v3137 = vadd.f32 %v3093, %v3126
        %v3138 = vadd.f32 %v3097, %v3130
        %v3139 = vsel %vm1545, -1e+10, %v3131
        %v3140 = vsel %vm1546, -1e+10, %v3132
        %v3141 = vsel %vm1547, -1e+10, %v3133
        %v3142 = vsel %vm1548, -1e+10, %v3134
        %v3143 = vsel %vm1549, -1e+10, %v3135
        %v3144 = vsel %vm1550, -1e+10, %v3136
        %v3145 = vsel %vm1551, -1e+10, %v3137
        %v3146 = vsel %vm1552, -1e+10, %v3138
        %v3147 = vsel %vm1561, %v3139, -inf
        %3148 = vmax.xlane.f32.xlu0 %v3147
        %v3149 = vpop.xlane.xlu0 %3148
        %v3150 = vsel %vm1561, %v3140, -inf
        %3151 = vmax.xlane.f32.xlu0 %v3150
        %v3152 = vpop.xlane.xlu0 %3151
        %v3153 = vsel %vm1561, %v3141, -inf
        %3154 = vmax.xlane.f32.xlu0 %v3153
        %v3155 = vpop.xlane.xlu0 %3154
        %v3156 = vsel %vm1561, %v3142, -inf
        %3157 = vmax.xlane.f32.xlu0 %v3156
        %v3158 = vpop.xlane.xlu0 %3157
        %v3159 = vsel %vm1561, %v3143, -inf
        %3160 = vmax.xlane.f32.xlu0 %v3159
        %v3161 = vpop.xlane.xlu0 %3160
        %v3162 = vsel %vm1561, %v3144, -inf
        %3163 = vmax.xlane.f32.xlu0 %v3162
        %v3164 = vpop.xlane.xlu0 %3163
        %v3165 = vsel %vm1561, %v3145, -inf
        %3166 = vmax.xlane.f32.xlu0 %v3165
        %v3167 = vpop.xlane.xlu0 %3166
        %v3168 = vsel %vm1561, %v3146, -inf
        %3169 = vmax.xlane.f32.xlu0 %v3168
        %v3170 = vpop.xlane.xlu0 %3169
        %v3171 = vsub.f32 %v3139, %v3149
        %v3172 = vsub.f32 %v3140, %v3152
        %v3173 = vsub.f32 %v3141, %v3155
        %v3174 = vsub.f32 %v3142, %v3158
        %v3175 = vsub.f32 %v3143, %v3161
        %v3176 = vsub.f32 %v3144, %v3164
        %v3177 = vsub.f32 %v3145, %v3167
        %v3178 = vsub.f32 %v3146, %v3170
        %v3179 = vmul.f32 %v3171, 1.442695
        %v3180 = vpow.pop %v3179
        %v3181 = vmul.f32 %v3172, 1.442695
        %v3182 = vpow.pop %v3181
        %v3183 = vmul.f32 %v3173, 1.442695
        %v3184 = vpow.pop %v3183
        %v3185 = vmul.f32 %v3174, 1.442695
        %v3186 = vpow.pop %v3185
        %v3187 = vmul.f32 %v3175, 1.442695
        %v3188 = vpow.pop %v3187
        %v3189 = vmul.f32 %v3176, 1.442695
        %v3190 = vpow.pop %v3189
        %v3191 = vmul.f32 %v3177, 1.442695
        %v3192 = vpow.pop %v3191
        %v3193 = vmul.f32 %v3178, 1.442695
        %v3194 = vpow.pop %v3193
        %v3195 = vsel %vm1561, %v3180, 0.0
        %3196 = vadd.xlane.f32.xlu0 %v3195
        %v3197 = vpop.xlane.xlu0 %3196
        %v3198 = vsel %vm1561, %v3182, 0.0
        %3199 = vadd.xlane.f32.xlu0 %v3198
        %v3200 = vpop.xlane.xlu0 %3199
        %v3201 = vsel %vm1561, %v3184, 0.0
        %3202 = vadd.xlane.f32.xlu0 %v3201
        %v3203 = vpop.xlane.xlu0 %3202
        %v3204 = vsel %vm1561, %v3186, 0.0
        %3205 = vadd.xlane.f32.xlu0 %v3204
        %v3206 = vpop.xlane.xlu0 %3205
        %v3207 = vsel %vm1561, %v3188, 0.0
        %3208 = vadd.xlane.f32.xlu0 %v3207
        %v3209 = vpop.xlane.xlu0 %3208
        %v3210 = vsel %vm1561, %v3190, 0.0
        %3211 = vadd.xlane.f32.xlu0 %v3210
        %v3212 = vpop.xlane.xlu0 %3211
        %v3213 = vsel %vm1561, %v3192, 0.0
        %3214 = vadd.xlane.f32.xlu0 %v3213
        %v3215 = vpop.xlane.xlu0 %3214
        %v3216 = vsel %vm1561, %v3194, 0.0
        %3217 = vadd.xlane.f32.xlu0 %v3216
        %v3218 = vpop.xlane.xlu0 %3217
        %v3219 = vrcp.pop %v3197
        %v3220 = vrcp.pop %v3200
        %v3221 = vrcp.pop %v3203
        %v3222 = vrcp.pop %v3206
        %v3223 = vrcp.pop %v3209
        %v3224 = vrcp.pop %v3212
        %v3225 = vrcp.pop %v3215
        %v3226 = vrcp.pop %v3218
        %v3227 = vmul.f32 %v3180, %v3219
        %v3228 = vmul.f32 %v3182, %v3220
        %v3229 = vmul.f32 %v3184, %v3221
        %v3230 = vmul.f32 %v3186, %v3222
        %v3231 = vmul.f32 %v3188, %v3223
        %v3232 = vmul.f32 %v3190, %v3224
        %v3233 = vmul.f32 %v3192, %v3225
        %v3234 = vmul.f32 %v3194, %v3226
        %s3235 = scalar_lea.vmem %s556, 128 [#allocation12]
        %3236 = vst.msk [vmem:[%s3235] sm:$0xff] %vm1561, %v3227
        %3237 = vst.msk [vmem:[%s3235 + $0x8] sm:$0xff] %vm1561, %v3228
        %3238 = vst.msk [vmem:[%s3235 + $0x10] sm:$0xff] %vm1561, %v3229
        %3239 = vst.msk [vmem:[%s3235 + $0x18] sm:$0xff] %vm1561, %v3230
        %3240 = vst.msk [vmem:[%s3235 + $0x20] sm:$0xff] %vm1561, %v3231
        %3241 = vst.msk [vmem:[%s3235 + $0x28] sm:$0xff] %vm1561, %v3232
        %3242 = vst.msk [vmem:[%s3235 + $0x30] sm:$0xff] %vm1561, %v3233
        %3243 = vst.msk [vmem:[%s3235 + $0x38] sm:$0xff] %vm1561, %v3234
        %3244 = vrot.lane.b32.xlu0 %v1387, 64
        %v3245 = vpop.permute.xlu0 %3244
        %3246 = vrot.lane.b32.xlu0 %v1392, 64
        %v3247 = vpop.permute.xlu0 %3246
        %v3251 = vsel %vm1561, %v3227, 0
        %3253 = vmatprep.subr.mxu0 0.0
        %3254 = vmatpush1.msra.mxu0 %v3245
        %3255 = vmatprep.subr.mxu0 0.0
        %3256 = vmatpush1.msra.mxu0 %v3247
        %3257 = vmatprep.subr.mxu0 0.0
        %3258 = vmatpush1.msra.mxu0 0.0
        %3259 = vmatprep.subr.mxu0 0.0
        %3260 = vmatpush1.msra.mxu0 0.0
        %3261 = vmatprep.subr.mxu0 0.0
        %3262 = vmatpush1.msra.mxu0 0.0
        %3263 = vmatprep.subr.mxu0 0.0
        %3264 = vmatpush1.msra.mxu0 0.0
        %3265 = vmatprep.subr.mxu0 0.0
        %3266 = vmatpush1.msra.mxu0 0.0
        %3267 = vmatprep.subr.mxu0 0.0
        %3268 = vmatpush1.msra.mxu0 0.0
        %3269 = vmatprep.subr.mxu0 0.0
        %3270 = vmatpush1.msra.mxu0 0.0
        %3271 = vmatprep.subr.mxu0 0.0
        %3272 = vmatpush1.msra.mxu0 0.0
        %3273 = vmatprep.subr.mxu0 0.0
        %3274 = vmatpush1.msra.mxu0 0.0
        %3275 = vmatprep.subr.mxu0 0.0
        %3276 = vmatpush1.msra.mxu0 0.0
        %3277 = vmatprep.subr.mxu0 0.0
        %3278 = vmatpush1.msra.mxu0 0.0
        %3279 = vmatprep.subr.mxu0 0.0
        %3280 = vmatpush1.msra.mxu0 0.0
        %3281 = vmatprep.subr.mxu0 0.0
        %3282 = vmatpush1.msra.mxu0 0.0
        %3283 = vmatprep.subr.mxu0 0.0
        %3284 = vmatpush1.msra.mxu0 0.0
        %3285 = vmatprep.subr.mxu0 0.0
        %3286 = vmatpush1.msra.mxu0 0.0
        %3287 = vmatprep.subr.mxu0 0.0
        %3288 = vmatpush1.msra.mxu0 0.0
        %3289 = vmatprep.subr.mxu0 0.0
        %3290 = vmatpush1.msra.mxu0 0.0
        %3291 = vmatprep.subr.mxu0 0.0
        %3292 = vmatpush1.msra.mxu0 0.0
        %3293 = vmatprep.subr.mxu0 0.0
        %3294 = vmatpush1.msra.mxu0 0.0
        %3295 = vmatprep.subr.mxu0 0.0
        %3296 = vmatpush1.msra.mxu0 0.0
        %3297 = vmatprep.subr.mxu0 0.0
        %3298 = vmatpush1.msra.mxu0 0.0
        %3299 = vmatprep.subr.mxu0 0.0
        %3300 = vmatpush1.msra.mxu0 0.0
        %3301 = vmatprep.subr.mxu0 0.0
        %3302 = vmatpush1.msra.mxu0 0.0
        %3303 = vmatprep.subr.mxu0 0.0
        %3304 = vmatpush1.msra.mxu0 0.0
        %3305 = vmatprep.subr.mxu0 0.0
        %3306 = vmatpush1.msra.mxu0 0.0
        %3307 = vmatprep.subr.mxu0 0.0
        %3308 = vmatpush1.msra.mxu0 0.0
        %3309 = vmatprep.subr.mxu0 0.0
        %3310 = vmatpush1.msra.mxu0 0.0
        %3311 = vmatprep.subr.mxu0 0.0
        %3312 = vmatpush1.msra.mxu0 0.0
        %3313 = vmatprep.subr.mxu0 0.0
        %3314 = vmatpush1.msra.mxu0 0.0
        %3315 = vmatprep.subr.mxu0 0.0
        %3316 = vmatpush1.msra.mxu0 0.0
        %3317 = vmatprep.mubr.f32.mxu0 0.0
        %3318 = vmatmul.mubr.f32.gmra.mrb[0].mxu0 %v3251
        %v3319 = vpop.f32.mrb[0].mxu0
        %v3320 = vadd.f32 0.0, %v3319
        %v3321 = vpop.f32.mrb[0].mxu0
        %3322 = vdwg.mxu0
        %3323 = vrot.lane.b32.xlu0 %v1397, 64
        %v3324 = vpop.permute.xlu0 %3323
        %3325 = vrot.lane.b32.xlu0 %v1402, 64
        %v3326 = vpop.permute.xlu0 %3325
        %v3330 = vsel %vm1561, %v3228, 0
        %3332 = vmatprep.subr.mxu0 0.0
        %3333 = vmatpush1.msra.mxu0 %v3324
        %3334 = vmatprep.subr.mxu0 0.0
        %3335 = vmatpush1.msra.mxu0 %v3326
        %3336 = vmatprep.subr.mxu0 0.0
        %3337 = vmatpush1.msra.mxu0 0.0
        %3338 = vmatprep.subr.mxu0 0.0
        %3339 = vmatpush1.msra.mxu0 0.0
        %3340 = vmatprep.subr.mxu0 0.0
        %3341 = vmatpush1.msra.mxu0 0.0
        %3342 = vmatprep.subr.mxu0 0.0
        %3343 = vmatpush1.msra.mxu0 0.0
        %3344 = vmatprep.subr.mxu0 0.0
        %3345 = vmatpush1.msra.mxu0 0.0
        %3346 = vmatprep.subr.mxu0 0.0
        %3347 = vmatpush1.msra.mxu0 0.0
        %3348 = vmatprep.subr.mxu0 0.0
        %3349 = vmatpush1.msra.mxu0 0.0
        %3350 = vmatprep.subr.mxu0 0.0
        %3351 = vmatpush1.msra.mxu0 0.0
        %3352 = vmatprep.subr.mxu0 0.0
        %3353 = vmatpush1.msra.mxu0 0.0
        %3354 = vmatprep.subr.mxu0 0.0
        %3355 = vmatpush1.msra.mxu0 0.0
        %3356 = vmatprep.subr.mxu0 0.0
        %3357 = vmatpush1.msra.mxu0 0.0
        %3358 = vmatprep.subr.mxu0 0.0
        %3359 = vmatpush1.msra.mxu0 0.0
        %3360 = vmatprep.subr.mxu0 0.0
        %3361 = vmatpush1.msra.mxu0 0.0
        %3362 = vmatprep.subr.mxu0 0.0
        %3363 = vmatpush1.msra.mxu0 0.0
        %3364 = vmatprep.subr.mxu0 0.0
        %3365 = vmatpush1.msra.mxu0 0.0
        %3366 = vmatprep.subr.mxu0 0.0
        %3367 = vmatpush1.msra.mxu0 0.0
        %3368 = vmatprep.subr.mxu0 0.0
        %3369 = vmatpush1.msra.mxu0 0.0
        %3370 = vmatprep.subr.mxu0 0.0
        %3371 = vmatpush1.msra.mxu0 0.0
        %3372 = vmatprep.subr.mxu0 0.0
        %3373 = vmatpush1.msra.mxu0 0.0
        %3374 = vmatprep.subr.mxu0 0.0
        %3375 = vmatpush1.msra.mxu0 0.0
        %3376 = vmatprep.subr.mxu0 0.0
        %3377 = vmatpush1.msra.mxu0 0.0
        %3378 = vmatprep.subr.mxu0 0.0
        %3379 = vmatpush1.msra.mxu0 0.0
        %3380 = vmatprep.subr.mxu0 0.0
        %3381 = vmatpush1.msra.mxu0 0.0
        %3382 = vmatprep.subr.mxu0 0.0
        %3383 = vmatpush1.msra.mxu0 0.0
        %3384 = vmatprep.subr.mxu0 0.0
        %3385 = vmatpush1.msra.mxu0 0.0
        %3386 = vmatprep.subr.mxu0 0.0
        %3387 = vmatpush1.msra.mxu0 0.0
        %3388 = vmatprep.subr.mxu0 0.0
        %3389 = vmatpush1.msra.mxu0 0.0
        %3390 = vmatprep.subr.mxu0 0.0
        %3391 = vmatpush1.msra.mxu0 0.0
        %3392 = vmatprep.subr.mxu0 0.0
        %3393 = vmatpush1.msra.mxu0 0.0
        %3394 = vmatprep.subr.mxu0 0.0
        %3395 = vmatpush1.msra.mxu0 0.0
        %3396 = vmatprep.mubr.f32.mxu0 0.0
        %3397 = vmatmul.mubr.f32.gmra.mrb[0].mxu0 %v3330
        %v3398 = vpop.f32.mrb[0].mxu0
        %v3399 = vadd.f32 0.0, %v3398
        %v3400 = vpop.f32.mrb[0].mxu0
        %3401 = vdwg.mxu0
        %3402 = vrot.lane.b32.xlu0 %v1407, 64
        %v3403 = vpop.permute.xlu0 %3402
        %3404 = vrot.lane.b32.xlu0 %v1412, 64
        %v3405 = vpop.permute.xlu0 %3404
        %v3409 = vsel %vm1561, %v3229, 0
        %3411 = vmatprep.subr.mxu0 0.0
        %3412 = vmatpush1.msra.mxu0 %v3403
        %3413 = vmatprep.subr.mxu0 0.0
        %3414 = vmatpush1.msra.mxu0 %v3405
        %3415 = vmatprep.subr.mxu0 0.0
        %3416 = vmatpush1.msra.mxu0 0.0
        %3417 = vmatprep.subr.mxu0 0.0
        %3418 = vmatpush1.msra.mxu0 0.0
        %3419 = vmatprep.subr.mxu0 0.0
        %3420 = vmatpush1.msra.mxu0 0.0
        %3421 = vmatprep.subr.mxu0 0.0
        %3422 = vmatpush1.msra.mxu0 0.0
        %3423 = vmatprep.subr.mxu0 0.0
        %3424 = vmatpush1.msra.mxu0 0.0
        %3425 = vmatprep.subr.mxu0 0.0
        %3426 = vmatpush1.msra.mxu0 0.0
        %3427 = vmatprep.subr.mxu0 0.0
        %3428 = vmatpush1.msra.mxu0 0.0
        %3429 = vmatprep.subr.mxu0 0.0
        %3430 = vmatpush1.msra.mxu0 0.0
        %3431 = vmatprep.subr.mxu0 0.0
        %3432 = vmatpush1.msra.mxu0 0.0
        %3433 = vmatprep.subr.mxu0 0.0
        %3434 = vmatpush1.msra.mxu0 0.0
        %3435 = vmatprep.subr.mxu0 0.0
        %3436 = vmatpush1.msra.mxu0 0.0
        %3437 = vmatprep.subr.mxu0 0.0
        %3438 = vmatpush1.msra.mxu0 0.0
        %3439 = vmatprep.subr.mxu0 0.0
        %3440 = vmatpush1.msra.mxu0 0.0
        %3441 = vmatprep.subr.mxu0 0.0
        %3442 = vmatpush1.msra.mxu0 0.0
        %3443 = vmatprep.subr.mxu0 0.0
        %3444 = vmatpush1.msra.mxu0 0.0
        %3445 = vmatprep.subr.mxu0 0.0
        %3446 = vmatpush1.msra.mxu0 0.0
        %3447 = vmatprep.subr.mxu0 0.0
        %3448 = vmatpush1.msra.mxu0 0.0
        %3449 = vmatprep.subr.mxu0 0.0
        %3450 = vmatpush1.msra.mxu0 0.0
        %3451 = vmatprep.subr.mxu0 0.0
        %3452 = vmatpush1.msra.mxu0 0.0
        %3453 = vmatprep.subr.mxu0 0.0
        %3454 = vmatpush1.msra.mxu0 0.0
        %3455 = vmatprep.subr.mxu0 0.0
        %3456 = vmatpush1.msra.mxu0 0.0
        %3457 = vmatprep.subr.mxu0 0.0
        %3458 = vmatpush1.msra.mxu0 0.0
        %3459 = vmatprep.subr.mxu0 0.0
        %3460 = vmatpush1.msra.mxu0 0.0
        %3461 = vmatprep.subr.mxu0 0.0
        %3462 = vmatpush1.msra.mxu0 0.0
        %3463 = vmatprep.subr.mxu0 0.0
        %3464 = vmatpush1.msra.mxu0 0.0
        %3465 = vmatprep.subr.mxu0 0.0
        %3466 = vmatpush1.msra.mxu0 0.0
        %3467 = vmatprep.subr.mxu0 0.0
        %3468 = vmatpush1.msra.mxu0 0.0
        %3469 = vmatprep.subr.mxu0 0.0
        %3470 = vmatpush1.msra.mxu0 0.0
        %3471 = vmatprep.subr.mxu0 0.0
        %3472 = vmatpush1.msra.mxu0 0.0
        %3473 = vmatprep.subr.mxu0 0.0
        %3474 = vmatpush1.msra.mxu0 0.0
        %3475 = vmatprep.mubr.f32.mxu0 0.0
        %3476 = vmatmul.mubr.f32.gmra.mrb[0].mxu0 %v3409
        %v3477 = vpop.f32.mrb[0].mxu0
        %v3478 = vadd.f32 0.0, %v3477
        %v3479 = vpop.f32.mrb[0].mxu0
        %3480 = vdwg.mxu0
        %3481 = vrot.lane.b32.xlu0 %v1417, 64
        %v3482 = vpop.permute.xlu0 %3481
        %3483 = vrot.lane.b32.xlu0 %v1422, 64
        %v3484 = vpop.permute.xlu0 %3483
        %v3488 = vsel %vm1561, %v3230, 0
        %3490 = vmatprep.subr.mxu0 0.0
        %3491 = vmatpush1.msra.mxu0 %v3482
        %3492 = vmatprep.subr.mxu0 0.0
        %3493 = vmatpush1.msra.mxu0 %v3484
        %3494 = vmatprep.subr.mxu0 0.0
        %3495 = vmatpush1.msra.mxu0 0.0
        %3496 = vmatprep.subr.mxu0 0.0
        %3497 = vmatpush1.msra.mxu0 0.0
        %3498 = vmatprep.subr.mxu0 0.0
        %3499 = vmatpush1.msra.mxu0 0.0
        %3500 = vmatprep.subr.mxu0 0.0
        %3501 = vmatpush1.msra.mxu0 0.0
        %3502 = vmatprep.subr.mxu0 0.0
        %3503 = vmatpush1.msra.mxu0 0.0
        %3504 = vmatprep.subr.mxu0 0.0
        %3505 = vmatpush1.msra.mxu0 0.0
        %3506 = vmatprep.subr.mxu0 0.0
        %3507 = vmatpush1.msra.mxu0 0.0
        %3508 = vmatprep.subr.mxu0 0.0
        %3509 = vmatpush1.msra.mxu0 0.0
        %3510 = vmatprep.subr.mxu0 0.0
        %3511 = vmatpush1.msra.mxu0 0.0
        %3512 = vmatprep.subr.mxu0 0.0
        %3513 = vmatpush1.msra.mxu0 0.0
        %3514 = vmatprep.subr.mxu0 0.0
        %3515 = vmatpush1.msra.mxu0 0.0
        %3516 = vmatprep.subr.mxu0 0.0
        %3517 = vmatpush1.msra.mxu0 0.0
        %3518 = vmatprep.subr.mxu0 0.0
        %3519 = vmatpush1.msra.mxu0 0.0
        %3520 = vmatprep.subr.mxu0 0.0
        %3521 = vmatpush1.msra.mxu0 0.0
        %3522 = vmatprep.subr.mxu0 0.0
        %3523 = vmatpush1.msra.mxu0 0.0
        %3524 = vmatprep.subr.mxu0 0.0
        %3525 = vmatpush1.msra.mxu0 0.0
        %3526 = vmatprep.subr.mxu0 0.0
        %3527 = vmatpush1.msra.mxu0 0.0
        %3528 = vmatprep.subr.mxu0 0.0
        %3529 = vmatpush1.msra.mxu0 0.0
        %3530 = vmatprep.subr.mxu0 0.0
        %3531 = vmatpush1.msra.mxu0 0.0
        %3532 = vmatprep.subr.mxu0 0.0
        %3533 = vmatpush1.msra.mxu0 0.0
        %3534 = vmatprep.subr.mxu0 0.0
        %3535 = vmatpush1.msra.mxu0 0.0
        %3536 = vmatprep.subr.mxu0 0.0
        %3537 = vmatpush1.msra.mxu0 0.0
        %3538 = vmatprep.subr.mxu0 0.0
        %3539 = vmatpush1.msra.mxu0 0.0
        %3540 = vmatprep.subr.mxu0 0.0
        %3541 = vmatpush1.msra.mxu0 0.0
        %3542 = vmatprep.subr.mxu0 0.0
        %3543 = vmatpush1.msra.mxu0 0.0
        %3544 = vmatprep.subr.mxu0 0.0
        %3545 = vmatpush1.msra.mxu0 0.0
        %3546 = vmatprep.subr.mxu0 0.0
        %3547 = vmatpush1.msra.mxu0 0.0
        %3548 = vmatprep.subr.mxu0 0.0
        %3549 = vmatpush1.msra.mxu0 0.0
        %3550 = vmatprep.subr.mxu0 0.0
        %3551 = vmatpush1.msra.mxu0 0.0
        %3552 = vmatprep.subr.mxu0 0.0
        %3553 = vmatpush1.msra.mxu0 0.0
        %3554 = vmatprep.mubr.f32.mxu0 0.0
        %3555 = vmatmul.mubr.f32.gmra.mrb[0].mxu0 %v3488
        %v3556 = vpop.f32.mrb[0].mxu0
        %v3557 = vadd.f32 0.0, %v3556
        %v3558 = vpop.f32.mrb[0].mxu0
        %3559 = vdwg.mxu0
        %3560 = vrot.lane.b32.xlu0 %v1427, 64
        %v3561 = vpop.permute.xlu0 %3560
        %3562 = vrot.lane.b32.xlu0 %v1432, 64
        %v3563 = vpop.permute.xlu0 %3562
        %v3567 = vsel %vm1561, %v3231, 0
        %3569 = vmatprep.subr.mxu0 0.0
        %3570 = vmatpush1.msra.mxu0 %v3561
        %3571 = vmatprep.subr.mxu0 0.0
        %3572 = vmatpush1.msra.mxu0 %v3563
        %3573 = vmatprep.subr.mxu0 0.0
        %3574 = vmatpush1.msra.mxu0 0.0
        %3575 = vmatprep.subr.mxu0 0.0
        %3576 = vmatpush1.msra.mxu0 0.0
        %3577 = vmatprep.subr.mxu0 0.0
        %3578 = vmatpush1.msra.mxu0 0.0
        %3579 = vmatprep.subr.mxu0 0.0
        %3580 = vmatpush1.msra.mxu0 0.0
        %3581 = vmatprep.subr.mxu0 0.0
        %3582 = vmatpush1.msra.mxu0 0.0
        %3583 = vmatprep.subr.mxu0 0.0
        %3584 = vmatpush1.msra.mxu0 0.0
        %3585 = vmatprep.subr.mxu0 0.0
        %3586 = vmatpush1.msra.mxu0 0.0
        %3587 = vmatprep.subr.mxu0 0.0
        %3588 = vmatpush1.msra.mxu0 0.0
        %3589 = vmatprep.subr.mxu0 0.0
        %3590 = vmatpush1.msra.mxu0 0.0
        %3591 = vmatprep.subr.mxu0 0.0
        %3592 = vmatpush1.msra.mxu0 0.0
        %3593 = vmatprep.subr.mxu0 0.0
        %3594 = vmatpush1.msra.mxu0 0.0
        %3595 = vmatprep.subr.mxu0 0.0
        %3596 = vmatpush1.msra.mxu0 0.0
        %3597 = vmatprep.subr.mxu0 0.0
        %3598 = vmatpush1.msra.mxu0 0.0
        %3599 = vmatprep.subr.mxu0 0.0
        %3600 = vmatpush1.msra.mxu0 0.0
        %3601 = vmatprep.subr.mxu0 0.0
        %3602 = vmatpush1.msra.mxu0 0.0
        %3603 = vmatprep.subr.mxu0 0.0
        %3604 = vmatpush1.msra.mxu0 0.0
        %3605 = vmatprep.subr.mxu0 0.0
        %3606 = vmatpush1.msra.mxu0 0.0
        %3607 = vmatprep.subr.mxu0 0.0
        %3608 = vmatpush1.msra.mxu0 0.0
        %3609 = vmatprep.subr.mxu0 0.0
        %3610 = vmatpush1.msra.mxu0 0.0
        %3611 = vmatprep.subr.mxu0 0.0
        %3612 = vmatpush1.msra.mxu0 0.0
        %3613 = vmatprep.subr.mxu0 0.0
        %3614 = vmatpush1.msra.mxu0 0.0
        %3615 = vmatprep.subr.mxu0 0.0
        %3616 = vmatpush1.msra.mxu0 0.0
        %3617 = vmatprep.subr.mxu0 0.0
        %3618 = vmatpush1.msra.mxu0 0.0
        %3619 = vmatprep.subr.mxu0 0.0
        %3620 = vmatpush1.msra.mxu0 0.0
        %3621 = vmatprep.subr.mxu0 0.0
        %3622 = vmatpush1.msra.mxu0 0.0
        %3623 = vmatprep.subr.mxu0 0.0
        %3624 = vmatpush1.msra.mxu0 0.0
        %3625 = vmatprep.subr.mxu0 0.0
        %3626 = vmatpush1.msra.mxu0 0.0
        %3627 = vmatprep.subr.mxu0 0.0
        %3628 = vmatpush1.msra.mxu0 0.0
        %3629 = vmatprep.subr.mxu0 0.0
        %3630 = vmatpush1.msra.mxu0 0.0
        %3631 = vmatprep.subr.mxu0 0.0
        %3632 = vmatpush1.msra.mxu0 0.0
        %3633 = vmatprep.mubr.f32.mxu0 0.0
        %3634 = vmatmul.mubr.f32.gmra.mrb[0].mxu0 %v3567
        %v3635 = vpop.f32.mrb[0].mxu0
        %v3636 = vadd.f32 0.0, %v3635
        %v3637 = vpop.f32.mrb[0].mxu0
        %3638 = vdwg.mxu0
        %3639 = vrot.lane.b32.xlu0 %v1437, 64
        %v3640 = vpop.permute.xlu0 %3639
        %3641 = vrot.lane.b32.xlu0 %v1442, 64
        %v3642 = vpop.permute.xlu0 %3641
        %v3646 = vsel %vm1561, %v3232, 0
        %3648 = vmatprep.subr.mxu0 0.0
        %3649 = vmatpush1.msra.mxu0 %v3640
        %3650 = vmatprep.subr.mxu0 0.0
        %3651 = vmatpush1.msra.mxu0 %v3642
        %3652 = vmatprep.subr.mxu0 0.0
        %3653 = vmatpush1.msra.mxu0 0.0
        %3654 = vmatprep.subr.mxu0 0.0
        %3655 = vmatpush1.msra.mxu0 0.0
        %3656 = vmatprep.subr.mxu0 0.0
        %3657 = vmatpush1.msra.mxu0 0.0
        %3658 = vmatprep.subr.mxu0 0.0
        %3659 = vmatpush1.msra.mxu0 0.0
        %3660 = vmatprep.subr.mxu0 0.0
        %3661 = vmatpush1.msra.mxu0 0.0
        %3662 = vmatprep.subr.mxu0 0.0
        %3663 = vmatpush1.msra.mxu0 0.0
        %3664 = vmatprep.subr.mxu0 0.0
        %3665 = vmatpush1.msra.mxu0 0.0
        %3666 = vmatprep.subr.mxu0 0.0
        %3667 = vmatpush1.msra.mxu0 0.0
        %3668 = vmatprep.subr.mxu0 0.0
        %3669 = vmatpush1.msra.mxu0 0.0
        %3670 = vmatprep.subr.mxu0 0.0
        %3671 = vmatpush1.msra.mxu0 0.0
        %3672 = vmatprep.subr.mxu0 0.0
        %3673 = vmatpush1.msra.mxu0 0.0
        %3674 = vmatprep.subr.mxu0 0.0
        %3675 = vmatpush1.msra.mxu0 0.0
        %3676 = vmatprep.subr.mxu0 0.0
        %3677 = vmatpush1.msra.mxu0 0.0
        %3678 = vmatprep.subr.mxu0 0.0
        %3679 = vmatpush1.msra.mxu0 0.0
        %3680 = vmatprep.subr.mxu0 0.0
        %3681 = vmatpush1.msra.mxu0 0.0
        %3682 = vmatprep.subr.mxu0 0.0
        %3683 = vmatpush1.msra.mxu0 0.0
        %3684 = vmatprep.subr.mxu0 0.0
        %3685 = vmatpush1.msra.mxu0 0.0
        %3686 = vmatprep.subr.mxu0 0.0
        %3687 = vmatpush1.msra.mxu0 0.0
        %3688 = vmatprep.subr.mxu0 0.0
        %3689 = vmatpush1.msra.mxu0 0.0
        %3690 = vmatprep.subr.mxu0 0.0
        %3691 = vmatpush1.msra.mxu0 0.0
        %3692 = vmatprep.subr.mxu0 0.0
        %3693 = vmatpush1.msra.mxu0 0.0
        %3694 = vmatprep.subr.mxu0 0.0
        %3695 = vmatpush1.msra.mxu0 0.0
        %3696 = vmatprep.subr.mxu0 0.0
        %3697 = vmatpush1.msra.mxu0 0.0
        %3698 = vmatprep.subr.mxu0 0.0
        %3699 = vmatpush1.msra.mxu0 0.0
        %3700 = vmatprep.subr.mxu0 0.0
        %3701 = vmatpush1.msra.mxu0 0.0
        %3702 = vmatprep.subr.mxu0 0.0
        %3703 = vmatpush1.msra.mxu0 0.0
        %3704 = vmatprep.subr.mxu0 0.0
        %3705 = vmatpush1.msra.mxu0 0.0
        %3706 = vmatprep.subr.mxu0 0.0
        %3707 = vmatpush1.msra.mxu0 0.0
        %3708 = vmatprep.subr.mxu0 0.0
        %3709 = vmatpush1.msra.mxu0 0.0
        %3710 = vmatprep.subr.mxu0 0.0
        %3711 = vmatpush1.msra.mxu0 0.0
        %3712 = vmatprep.mubr.f32.mxu0 0.0
        %3713 = vmatmul.mubr.f32.gmra.mrb[0].mxu0 %v3646
        %v3714 = vpop.f32.mrb[0].mxu0
        %v3715 = vadd.f32 0.0, %v3714
        %v3716 = vpop.f32.mrb[0].mxu0
        %3717 = vdwg.mxu0
        %3718 = vrot.lane.b32.xlu0 %v1447, 64
        %v3719 = vpop.permute.xlu0 %3718
        %3720 = vrot.lane.b32.xlu0 %v1452, 64
        %v3721 = vpop.permute.xlu0 %3720
        %v3725 = vsel %vm1561, %v3233, 0
        %3727 = vmatprep.subr.mxu0 0.0
        %3728 = vmatpush1.msra.mxu0 %v3719
        %3729 = vmatprep.subr.mxu0 0.0
        %3730 = vmatpush1.msra.mxu0 %v3721
        %3731 = vmatprep.subr.mxu0 0.0
        %3732 = vmatpush1.msra.mxu0 0.0
        %3733 = vmatprep.subr.mxu0 0.0
        %3734 = vmatpush1.msra.mxu0 0.0
        %3735 = vmatprep.subr.mxu0 0.0
        %3736 = vmatpush1.msra.mxu0 0.0
        %3737 = vmatprep.subr.mxu0 0.0
        %3738 = vmatpush1.msra.mxu0 0.0
        %3739 = vmatprep.subr.mxu0 0.0
        %3740 = vmatpush1.msra.mxu0 0.0
        %3741 = vmatprep.subr.mxu0 0.0
        %3742 = vmatpush1.msra.mxu0 0.0
        %3743 = vmatprep.subr.mxu0 0.0
        %3744 = vmatpush1.msra.mxu0 0.0
        %3745 = vmatprep.subr.mxu0 0.0
        %3746 = vmatpush1.msra.mxu0 0.0
        %3747 = vmatprep.subr.mxu0 0.0
        %3748 = vmatpush1.msra.mxu0 0.0
        %3749 = vmatprep.subr.mxu0 0.0
        %3750 = vmatpush1.msra.mxu0 0.0
        %3751 = vmatprep.subr.mxu0 0.0
        %3752 = vmatpush1.msra.mxu0 0.0
        %3753 = vmatprep.subr.mxu0 0.0
        %3754 = vmatpush1.msra.mxu0 0.0
        %3755 = vmatprep.subr.mxu0 0.0
        %3756 = vmatpush1.msra.mxu0 0.0
        %3757 = vmatprep.subr.mxu0 0.0
        %3758 = vmatpush1.msra.mxu0 0.0
        %3759 = vmatprep.subr.mxu0 0.0
        %3760 = vmatpush1.msra.mxu0 0.0
        %3761 = vmatprep.subr.mxu0 0.0
        %3762 = vmatpush1.msra.mxu0 0.0
        %3763 = vmatprep.subr.mxu0 0.0
        %3764 = vmatpush1.msra.mxu0 0.0
        %3765 = vmatprep.subr.mxu0 0.0
        %3766 = vmatpush1.msra.mxu0 0.0
        %3767 = vmatprep.subr.mxu0 0.0
        %3768 = vmatpush1.msra.mxu0 0.0
        %3769 = vmatprep.subr.mxu0 0.0
        %3770 = vmatpush1.msra.mxu0 0.0
        %3771 = vmatprep.subr.mxu0 0.0
        %3772 = vmatpush1.msra.mxu0 0.0
        %3773 = vmatprep.subr.mxu0 0.0
        %3774 = vmatpush1.msra.mxu0 0.0
        %3775 = vmatprep.subr.mxu0 0.0
        %3776 = vmatpush1.msra.mxu0 0.0
        %3777 = vmatprep.subr.mxu0 0.0
        %3778 = vmatpush1.msra.mxu0 0.0
        %3779 = vmatprep.subr.mxu0 0.0
        %3780 = vmatpush1.msra.mxu0 0.0
        %3781 = vmatprep.subr.mxu0 0.0
        %3782 = vmatpush1.msra.mxu0 0.0
        %3783 = vmatprep.subr.mxu0 0.0
        %3784 = vmatpush1.msra.mxu0 0.0
        %3785 = vmatprep.subr.mxu0 0.0
        %3786 = vmatpush1.msra.mxu0 0.0
        %3787 = vmatprep.subr.mxu0 0.0
        %3788 = vmatpush1.msra.mxu0 0.0
        %3789 = vmatprep.subr.mxu0 0.0
        %3790 = vmatpush1.msra.mxu0 0.0
        %3791 = vmatprep.mubr.f32.mxu0 0.0
        %3792 = vmatmul.mubr.f32.gmra.mrb[0].mxu0 %v3725
        %v3793 = vpop.f32.mrb[0].mxu0
        %v3794 = vadd.f32 0.0, %v3793
        %v3795 = vpop.f32.mrb[0].mxu0
        %3796 = vdwg.mxu0
        %3797 = vrot.lane.b32.xlu0 %v1457, 64
        %v3798 = vpop.permute.xlu0 %3797
        %3799 = vrot.lane.b32.xlu0 %v1462, 64
        %v3800 = vpop.permute.xlu0 %3799
        %v3804 = vsel %vm1561, %v3234, 0
        %3806 = vmatprep.subr.mxu0 0.0
        %3807 = vmatpush1.msra.mxu0 %v3798
        %3808 = vmatprep.subr.mxu0 0.0
        %3809 = vmatpush1.msra.mxu0 %v3800
        %3810 = vmatprep.subr.mxu0 0.0
        %3811 = vmatpush1.msra.mxu0 0.0
        %3812 = vmatprep.subr.mxu0 0.0
        %3813 = vmatpush1.msra.mxu0 0.0
        %3814 = vmatprep.subr.mxu0 0.0
        %3815 = vmatpush1.msra.mxu0 0.0
        %3816 = vmatprep.subr.mxu0 0.0
        %3817 = vmatpush1.msra.mxu0 0.0
        %3818 = vmatprep.subr.mxu0 0.0
        %3819 = vmatpush1.msra.mxu0 0.0
        %3820 = vmatprep.subr.mxu0 0.0
        %3821 = vmatpush1.msra.mxu0 0.0
        %3822 = vmatprep.subr.mxu0 0.0
        %3823 = vmatpush1.msra.mxu0 0.0
        %3824 = vmatprep.subr.mxu0 0.0
        %3825 = vmatpush1.msra.mxu0 0.0
        %3826 = vmatprep.subr.mxu0 0.0
        %3827 = vmatpush1.msra.mxu0 0.0
        %3828 = vmatprep.subr.mxu0 0.0
        %3829 = vmatpush1.msra.mxu0 0.0
        %3830 = vmatprep.subr.mxu0 0.0
        %3831 = vmatpush1.msra.mxu0 0.0
        %3832 = vmatprep.subr.mxu0 0.0
        %3833 = vmatpush1.msra.mxu0 0.0
        %3834 = vmatprep.subr.mxu0 0.0
        %3835 = vmatpush1.msra.mxu0 0.0
        %3836 = vmatprep.subr.mxu0 0.0
        %3837 = vmatpush1.msra.mxu0 0.0
        %3838 = vmatprep.subr.mxu0 0.0
        %3839 = vmatpush1.msra.mxu0 0.0
        %3840 = vmatprep.subr.mxu0 0.0
        %3841 = vmatpush1.msra.mxu0 0.0
        %3842 = vmatprep.subr.mxu0 0.0
        %3843 = vmatpush1.msra.mxu0 0.0
        %3844 = vmatprep.subr.mxu0 0.0
        %3845 = vmatpush1.msra.mxu0 0.0
        %3846 = vmatprep.subr.mxu0 0.0
        %3847 = vmatpush1.msra.mxu0 0.0
        %3848 = vmatprep.subr.mxu0 0.0
        %3849 = vmatpush1.msra.mxu0 0.0
        %3850 = vmatprep.subr.mxu0 0.0
        %3851 = vmatpush1.msra.mxu0 0.0
        %3852 = vmatprep.subr.mxu0 0.0
        %3853 = vmatpush1.msra.mxu0 0.0
        %3854 = vmatprep.subr.mxu0 0.0
        %3855 = vmatpush1.msra.mxu0 0.0
        %3856 = vmatprep.subr.mxu0 0.0
        %3857 = vmatpush1.msra.mxu0 0.0
        %3858 = vmatprep.subr.mxu0 0.0
        %3859 = vmatpush1.msra.mxu0 0.0
        %3860 = vmatprep.subr.mxu0 0.0
        %3861 = vmatpush1.msra.mxu0 0.0
        %3862 = vmatprep.subr.mxu0 0.0
        %3863 = vmatpush1.msra.mxu0 0.0
        %3864 = vmatprep.subr.mxu0 0.0
        %3865 = vmatpush1.msra.mxu0 0.0
        %3866 = vmatprep.subr.mxu0 0.0
        %3867 = vmatpush1.msra.mxu0 0.0
        %3868 = vmatprep.subr.mxu0 0.0
        %3869 = vmatpush1.msra.mxu0 0.0
        %3870 = vmatprep.mubr.f32.mxu0 0.0
        %3871 = vmatmul.mubr.f32.gmra.mrb[0].mxu0 %v3804
        %v3872 = vpop.f32.mrb[0].mxu0
        %v3873 = vadd.f32 0.0, %v3872
        %v3874 = vpop.f32.mrb[0].mxu0
        %3875 = vdwg.mxu0
        %3876 = vset.pattern.permute.xlu0 3
        %3877 = vperm.xlu0 %3876, %v705
        %v3878 = vpop.permute.xlu0 %3877
        %3880 = vset.pattern.permute.xlu0 3
        %3881 = vperm.xlu0 %3880, %v710
        %v3882 = vpop.permute.xlu0 %3881
        %3884 = vset.pattern.permute.xlu0 3
        %3885 = vperm.xlu0 %3884, %v715
        %v3886 = vpop.permute.xlu0 %3885
        %3888 = vset.pattern.permute.xlu0 3
        %3889 = vperm.xlu0 %3888, %v720
        %v3890 = vpop.permute.xlu0 %3889
        %3892 = vset.pattern.permute.xlu0 3
        %3893 = vperm.xlu0 %3892, %v725
        %v3894 = vpop.permute.xlu0 %3893
        %3896 = vset.pattern.permute.xlu0 3
        %3897 = vperm.xlu0 %3896, %v730
        %v3898 = vpop.permute.xlu0 %3897
        %3900 = vset.pattern.permute.xlu0 3
        %3901 = vperm.xlu0 %3900, %v735
        %v3902 = vpop.permute.xlu0 %3901
        %3904 = vset.pattern.permute.xlu0 3
        %3905 = vperm.xlu0 %3904, %v740
        %v3906 = vpop.permute.xlu0 %3905
        %v3908 = vlaneseq
        %v3909 = vshrl.u32 %v3908, 7
        %v3910 = vsub.s32 3, %v3909
        %v3911 = vrot.slane %v811, %v3910
        %v3912 = vlaneseq
        %v3913 = vshrl.u32 %v3912, 7
        %v3914 = vsub.s32 3, %v3913
        %v3915 = vrot.slane %v881, %v3914
        %v3916 = vlaneseq
        %v3917 = vshrl.u32 %v3916, 7
        %v3918 = vsub.s32 3, %v3917
        %v3919 = vrot.slane %v951, %v3918
        %v3920 = vlaneseq
        %v3921 = vshrl.u32 %v3920, 7
        %v3922 = vsub.s32 3, %v3921
        %v3923 = vrot.slane %v1021, %v3922
        %v3924 = vlaneseq
        %v3925 = vshrl.u32 %v3924, 7
        %v3926 = vsub.s32 3, %v3925
        %v3927 = vrot.slane %v1091, %v3926
        %v3928 = vlaneseq
        %v3929 = vshrl.u32 %v3928, 7
        %v3930 = vsub.s32 3, %v3929
        %v3931 = vrot.slane %v1161, %v3930
        %v3932 = vlaneseq
        %v3933 = vshrl.u32 %v3932, 7
        %v3934 = vsub.s32 3, %v3933
        %v3935 = vrot.slane %v1231, %v3934
        %v3936 = vlaneseq
        %v3937 = vshrl.u32 %v3936, 7
        %v3938 = vsub.s32 3, %v3937
        %v3939 = vrot.slane %v1301, %v3938
        %v3940 = vadd.f32 %v3878, %v3911
        %v3941 = vadd.f32 %v3882, %v3915
        %v3942 = vadd.f32 %v3886, %v3919
        %v3943 = vadd.f32 %v3890, %v3923
        %v3944 = vadd.f32 %v3894, %v3927
        %v3945 = vadd.f32 %v3898, %v3931
        %v3946 = vadd.f32 %v3902, %v3935
        %v3947 = vadd.f32 %v3906, %v3939
        %v3948 = vsel %vm1545, -1e+10, %v3940
        %v3949 = vsel %vm1546, -1e+10, %v3941
        %v3950 = vsel %vm1547, -1e+10, %v3942
        %v3951 = vsel %vm1548, -1e+10, %v3943
        %v3952 = vsel %vm1549, -1e+10, %v3944
        %v3953 = vsel %vm1550, -1e+10, %v3945
        %v3954 = vsel %vm1551, -1e+10, %v3946
        %v3955 = vsel %vm1552, -1e+10, %v3947
        %v3956 = vsel %vm1561, %v3948, -inf
        %3957 = vmax.xlane.f32.xlu0 %v3956
        %v3958 = vpop.xlane.xlu0 %3957
        %v3959 = vsel %vm1561, %v3949, -inf
        %3960 = vmax.xlane.f32.xlu0 %v3959
        %v3961 = vpop.xlane.xlu0 %3960
        %v3962 = vsel %vm1561, %v3950, -inf
        %3963 = vmax.xlane.f32.xlu0 %v3962
        %v3964 = vpop.xlane.xlu0 %3963
        %v3965 = vsel %vm1561, %v3951, -inf
        %3966 = vmax.xlane.f32.xlu0 %v3965
        %v3967 = vpop.xlane.xlu0 %3966
        %v3968 = vsel %vm1561, %v3952, -inf
        %3969 = vmax.xlane.f32.xlu0 %v3968
        %v3970 = vpop.xlane.xlu0 %3969
        %v3971 = vsel %vm1561, %v3953, -inf
        %3972 = vmax.xlane.f32.xlu0 %v3971
        %v3973 = vpop.xlane.xlu0 %3972
        %v3974 = vsel %vm1561, %v3954, -inf
        %3975 = vmax.xlane.f32.xlu0 %v3974
        %v3976 = vpop.xlane.xlu0 %3975
        %v3977 = vsel %vm1561, %v3955, -inf
        %3978 = vmax.xlane.f32.xlu0 %v3977
        %v3979 = vpop.xlane.xlu0 %3978
        %v3980 = vsub.f32 %v3948, %v3958
        %v3981 = vsub.f32 %v3949, %v3961
        %v3982 = vsub.f32 %v3950, %v3964
        %v3983 = vsub.f32 %v3951, %v3967
        %v3984 = vsub.f32 %v3952, %v3970
        %v3985 = vsub.f32 %v3953, %v3973
        %v3986 = vsub.f32 %v3954, %v3976
        %v3987 = vsub.f32 %v3955, %v3979
        %v3988 = vmul.f32 %v3980, 1.442695
        %v3989 = vpow.pop %v3988
        %v3990 = vmul.f32 %v3981, 1.442695
        %v3991 = vpow.pop %v3990
        %v3992 = vmul.f32 %v3982, 1.442695
        %v3993 = vpow.pop %v3992
        %v3994 = vmul.f32 %v3983, 1.442695
        %v3995 = vpow.pop %v3994
        %v3996 = vmul.f32 %v3984, 1.442695
        %v3997 = vpow.pop %v3996
        %v3998 = vmul.f32 %v3985, 1.442695
        %v3999 = vpow.pop %v3998
        %v4000 = vmul.f32 %v3986, 1.442695
        %v4001 = vpow.pop %v4000
        %v4002 = vmul.f32 %v3987, 1.442695
        %v4003 = vpow.pop %v4002
        %v4004 = vsel %vm1561, %v3989, 0.0
        %4005 = vadd.xlane.f32.xlu0 %v4004
        %v4006 = vpop.xlane.xlu0 %4005
        %v4007 = vsel %vm1561, %v3991, 0.0
        %4008 = vadd.xlane.f32.xlu0 %v4007
        %v4009 = vpop.xlane.xlu0 %4008
        %v4010 = vsel %vm1561, %v3993, 0.0
        %4011 = vadd.xlane.f32.xlu0 %v4010
        %v4012 = vpop.xlane.xlu0 %4011
        %v4013 = vsel %vm1561, %v3995, 0.0
        %4014 = vadd.xlane.f32.xlu0 %v4013
        %v4015 = vpop.xlane.xlu0 %4014
        %v4016 = vsel %vm1561, %v3997, 0.0
        %4017 = vadd.xlane.f32.xlu0 %v4016
        %v4018 = vpop.xlane.xlu0 %4017
        %v4019 = vsel %vm1561, %v3999, 0.0
        %4020 = vadd.xlane.f32.xlu0 %v4019
        %v4021 = vpop.xlane.xlu0 %4020
        %v4022 = vsel %vm1561, %v4001, 0.0
        %4023 = vadd.xlane.f32.xlu0 %v4022
        %v4024 = vpop.xlane.xlu0 %4023
        %v4025 = vsel %vm1561, %v4003, 0.0
        %4026 = vadd.xlane.f32.xlu0 %v4025
        %v4027 = vpop.xlane.xlu0 %4026
        %v4028 = vrcp.pop %v4006
        %v4029 = vrcp.pop %v4009
        %v4030 = vrcp.pop %v4012
        %v4031 = vrcp.pop %v4015
        %v4032 = vrcp.pop %v4018
        %v4033 = vrcp.pop %v4021
        %v4034 = vrcp.pop %v4024
        %v4035 = vrcp.pop %v4027
        %v4036 = vmul.f32 %v3989, %v4028
        %v4037 = vmul.f32 %v3991, %v4029
        %v4038 = vmul.f32 %v3993, %v4030
        %v4039 = vmul.f32 %v3995, %v4031
        %v4040 = vmul.f32 %v3997, %v4032
        %v4041 = vmul.f32 %v3999, %v4033
        %v4042 = vmul.f32 %v4001, %v4034
        %v4043 = vmul.f32 %v4003, %v4035
        %s4044 = scalar_lea.vmem %s556, 192 [#allocation12]
        %4045 = vst.msk [vmem:[%s4044] sm:$0xff] %vm1561, %v4036
        %4046 = vst.msk [vmem:[%s4044 + $0x8] sm:$0xff] %vm1561, %v4037
        %4047 = vst.msk [vmem:[%s4044 + $0x10] sm:$0xff] %vm1561, %v4038
        %4048 = vst.msk [vmem:[%s4044 + $0x18] sm:$0xff] %vm1561, %v4039
        %4049 = vst.msk [vmem:[%s4044 + $0x20] sm:$0xff] %vm1561, %v4040
        %4050 = vst.msk [vmem:[%s4044 + $0x28] sm:$0xff] %vm1561, %v4041
        %4051 = vst.msk [vmem:[%s4044 + $0x30] sm:$0xff] %vm1561, %v4042
        %4052 = vst.msk [vmem:[%s4044 + $0x38] sm:$0xff] %vm1561, %v4043
        %4053 = vrot.lane.b32.xlu0 %v1387, 32
        %v4054 = vpop.permute.xlu0 %4053
        %4055 = vrot.lane.b32.xlu0 %v1392, 32
        %v4056 = vpop.permute.xlu0 %4055
        %v4060 = vsel %vm1561, %v4036, 0
        %4062 = vmatprep.subr.mxu0 0.0
        %4063 = vmatpush1.msra.mxu0 %v4054
        %4064 = vmatprep.subr.mxu0 0.0
        %4065 = vmatpush1.msra.mxu0 %v4056
        %4066 = vmatprep.subr.mxu0 0.0
        %4067 = vmatpush1.msra.mxu0 0.0
        %4068 = vmatprep.subr.mxu0 0.0
        %4069 = vmatpush1.msra.mxu0 0.0
        %4070 = vmatprep.subr.mxu0 0.0
        %4071 = vmatpush1.msra.mxu0 0.0
        %4072 = vmatprep.subr.mxu0 0.0
        %4073 = vmatpush1.msra.mxu0 0.0
        %4074 = vmatprep.subr.mxu0 0.0
        %4075 = vmatpush1.msra.mxu0 0.0
        %4076 = vmatprep.subr.mxu0 0.0
        %4077 = vmatpush1.msra.mxu0 0.0
        %4078 = vmatprep.subr.mxu0 0.0
        %4079 = vmatpush1.msra.mxu0 0.0
        %4080 = vmatprep.subr.mxu0 0.0
        %4081 = vmatpush1.msra.mxu0 0.0
        %4082 = vmatprep.subr.mxu0 0.0
        %4083 = vmatpush1.msra.mxu0 0.0
        %4084 = vmatprep.subr.mxu0 0.0
        %4085 = vmatpush1.msra.mxu0 0.0
        %4086 = vmatprep.subr.mxu0 0.0
        %4087 = vmatpush1.msra.mxu0 0.0
        %4088 = vmatprep.subr.mxu0 0.0
        %4089 = vmatpush1.msra.mxu0 0.0
        %4090 = vmatprep.subr.mxu0 0.0
        %4091 = vmatpush1.msra.mxu0 0.0
        %4092 = vmatprep.subr.mxu0 0.0
        %4093 = vmatpush1.msra.mxu0 0.0
        %4094 = vmatprep.subr.mxu0 0.0
        %4095 = vmatpush1.msra.mxu0 0.0
        %4096 = vmatprep.subr.mxu0 0.0
        %4097 = vmatpush1.msra.mxu0 0.0
        %4098 = vmatprep.subr.mxu0 0.0
        %4099 = vmatpush1.msra.mxu0 0.0
        %4100 = vmatprep.subr.mxu0 0.0
        %4101 = vmatpush1.msra.mxu0 0.0
        %4102 = vmatprep.subr.mxu0 0.0
        %4103 = vmatpush1.msra.mxu0 0.0
        %4104 = vmatprep.subr.mxu0 0.0
        %4105 = vmatpush1.msra.mxu0 0.0
        %4106 = vmatprep.subr.mxu0 0.0
        %4107 = vmatpush1.msra.mxu0 0.0
        %4108 = vmatprep.subr.mxu0 0.0
        %4109 = vmatpush1.msra.mxu0 0.0
        %4110 = vmatprep.subr.mxu0 0.0
        %4111 = vmatpush1.msra.mxu0 0.0
        %4112 = vmatprep.subr.mxu0 0.0
        %4113 = vmatpush1.msra.mxu0 0.0
        %4114 = vmatprep.subr.mxu0 0.0
        %4115 = vmatpush1.msra.mxu0 0.0
        %4116 = vmatprep.subr.mxu0 0.0
        %4117 = vmatpush1.msra.mxu0 0.0
        %4118 = vmatprep.subr.mxu0 0.0
        %4119 = vmatpush1.msra.mxu0 0.0
        %4120 = vmatprep.subr.mxu0 0.0
        %4121 = vmatpush1.msra.mxu0 0.0
        %4122 = vmatprep.subr.mxu0 0.0
        %4123 = vmatpush1.msra.mxu0 0.0
        %4124 = vmatprep.subr.mxu0 0.0
        %4125 = vmatpush1.msra.mxu0 0.0
        %4126 = vmatprep.mubr.f32.mxu0 0.0
        %4127 = vmatmul.mubr.f32.gmra.mrb[0].mxu0 %v4060
        %v4128 = vpop.f32.mrb[0].mxu0
        %v4129 = vadd.f32 0.0, %v4128
        %v4130 = vpop.f32.mrb[0].mxu0
        %4131 = vdwg.mxu0
        %4132 = vrot.lane.b32.xlu0 %v1397, 32
        %v4133 = vpop.permute.xlu0 %4132
        %4134 = vrot.lane.b32.xlu0 %v1402, 32
        %v4135 = vpop.permute.xlu0 %4134
        %v4139 = vsel %vm1561, %v4037, 0
        %4141 = vmatprep.subr.mxu0 0.0
        %4142 = vmatpush1.msra.mxu0 %v4133
        %4143 = vmatprep.subr.mxu0 0.0
        %4144 = vmatpush1.msra.mxu0 %v4135
        %4145 = vmatprep.subr.mxu0 0.0
        %4146 = vmatpush1.msra.mxu0 0.0
        %4147 = vmatprep.subr.mxu0 0.0
        %4148 = vmatpush1.msra.mxu0 0.0
        %4149 = vmatprep.subr.mxu0 0.0
        %4150 = vmatpush1.msra.mxu0 0.0
        %4151 = vmatprep.subr.mxu0 0.0
        %4152 = vmatpush1.msra.mxu0 0.0
        %4153 = vmatprep.subr.mxu0 0.0
        %4154 = vmatpush1.msra.mxu0 0.0
        %4155 = vmatprep.subr.mxu0 0.0
        %4156 = vmatpush1.msra.mxu0 0.0
        %4157 = vmatprep.subr.mxu0 0.0
        %4158 = vmatpush1.msra.mxu0 0.0
        %4159 = vmatprep.subr.mxu0 0.0
        %4160 = vmatpush1.msra.mxu0 0.0
        %4161 = vmatprep.subr.mxu0 0.0
        %4162 = vmatpush1.msra.mxu0 0.0
        %4163 = vmatprep.subr.mxu0 0.0
        %4164 = vmatpush1.msra.mxu0 0.0
        %4165 = vmatprep.subr.mxu0 0.0
        %4166 = vmatpush1.msra.mxu0 0.0
        %4167 = vmatprep.subr.mxu0 0.0
        %4168 = vmatpush1.msra.mxu0 0.0
        %4169 = vmatprep.subr.mxu0 0.0
        %4170 = vmatpush1.msra.mxu0 0.0
        %4171 = vmatprep.subr.mxu0 0.0
        %4172 = vmatpush1.msra.mxu0 0.0
        %4173 = vmatprep.subr.mxu0 0.0
        %4174 = vmatpush1.msra.mxu0 0.0
        %4175 = vmatprep.subr.mxu0 0.0
        %4176 = vmatpush1.msra.mxu0 0.0
        %4177 = vmatprep.subr.mxu0 0.0
        %4178 = vmatpush1.msra.mxu0 0.0
        %4179 = vmatprep.subr.mxu0 0.0
        %4180 = vmatpush1.msra.mxu0 0.0
        %4181 = vmatprep.subr.mxu0 0.0
        %4182 = vmatpush1.msra.mxu0 0.0
        %4183 = vmatprep.subr.mxu0 0.0
        %4184 = vmatpush1.msra.mxu0 0.0
        %4185 = vmatprep.subr.mxu0 0.0
        %4186 = vmatpush1.msra.mxu0 0.0
        %4187 = vmatprep.subr.mxu0 0.0
        %4188 = vmatpush1.msra.mxu0 0.0
        %4189 = vmatprep.subr.mxu0 0.0
        %4190 = vmatpush1.msra.mxu0 0.0
        %4191 = vmatprep.subr.mxu0 0.0
        %4192 = vmatpush1.msra.mxu0 0.0
        %4193 = vmatprep.subr.mxu0 0.0
        %4194 = vmatpush1.msra.mxu0 0.0
        %4195 = vmatprep.subr.mxu0 0.0
        %4196 = vmatpush1.msra.mxu0 0.0
        %4197 = vmatprep.subr.mxu0 0.0
        %4198 = vmatpush1.msra.mxu0 0.0
        %4199 = vmatprep.subr.mxu0 0.0
        %4200 = vmatpush1.msra.mxu0 0.0
        %4201 = vmatprep.subr.mxu0 0.0
        %4202 = vmatpush1.msra.mxu0 0.0
        %4203 = vmatprep.subr.mxu0 0.0
        %4204 = vmatpush1.msra.mxu0 0.0
        %4205 = vmatprep.mubr.f32.mxu0 0.0
        %4206 = vmatmul.mubr.f32.gmra.mrb[0].mxu0 %v4139
        %v4207 = vpop.f32.mrb[0].mxu0
        %v4208 = vadd.f32 0.0, %v4207
        %v4209 = vpop.f32.mrb[0].mxu0
        %4210 = vdwg.mxu0
        %4211 = vrot.lane.b32.xlu0 %v1407, 32
        %v4212 = vpop.permute.xlu0 %4211
        %4213 = vrot.lane.b32.xlu0 %v1412, 32
        %v4214 = vpop.permute.xlu0 %4213
        %v4218 = vsel %vm1561, %v4038, 0
        %4220 = vmatprep.subr.mxu0 0.0
        %4221 = vmatpush1.msra.mxu0 %v4212
        %4222 = vmatprep.subr.mxu0 0.0
        %4223 = vmatpush1.msra.mxu0 %v4214
        %4224 = vmatprep.subr.mxu0 0.0
        %4225 = vmatpush1.msra.mxu0 0.0
        %4226 = vmatprep.subr.mxu0 0.0
        %4227 = vmatpush1.msra.mxu0 0.0
        %4228 = vmatprep.subr.mxu0 0.0
        %4229 = vmatpush1.msra.mxu0 0.0
        %4230 = vmatprep.subr.mxu0 0.0
        %4231 = vmatpush1.msra.mxu0 0.0
        %4232 = vmatprep.subr.mxu0 0.0
        %4233 = vmatpush1.msra.mxu0 0.0
        %4234 = vmatprep.subr.mxu0 0.0
        %4235 = vmatpush1.msra.mxu0 0.0
        %4236 = vmatprep.subr.mxu0 0.0
        %4237 = vmatpush1.msra.mxu0 0.0
        %4238 = vmatprep.subr.mxu0 0.0
        %4239 = vmatpush1.msra.mxu0 0.0
        %4240 = vmatprep.subr.mxu0 0.0
        %4241 = vmatpush1.msra.mxu0 0.0
        %4242 = vmatprep.subr.mxu0 0.0
        %4243 = vmatpush1.msra.mxu0 0.0
        %4244 = vmatprep.subr.mxu0 0.0
        %4245 = vmatpush1.msra.mxu0 0.0
        %4246 = vmatprep.subr.mxu0 0.0
        %4247 = vmatpush1.msra.mxu0 0.0
        %4248 = vmatprep.subr.mxu0 0.0
        %4249 = vmatpush1.msra.mxu0 0.0
        %4250 = vmatprep.subr.mxu0 0.0
        %4251 = vmatpush1.msra.mxu0 0.0
        %4252 = vmatprep.subr.mxu0 0.0
        %4253 = vmatpush1.msra.mxu0 0.0
        %4254 = vmatprep.subr.mxu0 0.0
        %4255 = vmatpush1.msra.mxu0 0.0
        %4256 = vmatprep.subr.mxu0 0.0
        %4257 = vmatpush1.msra.mxu0 0.0
        %4258 = vmatprep.subr.mxu0 0.0
        %4259 = vmatpush1.msra.mxu0 0.0
        %4260 = vmatprep.subr.mxu0 0.0
        %4261 = vmatpush1.msra.mxu0 0.0
        %4262 = vmatprep.subr.mxu0 0.0
        %4263 = vmatpush1.msra.mxu0 0.0
        %4264 = vmatprep.subr.mxu0 0.0
        %4265 = vmatpush1.msra.mxu0 0.0
        %4266 = vmatprep.subr.mxu0 0.0
        %4267 = vmatpush1.msra.mxu0 0.0
        %4268 = vmatprep.subr.mxu0 0.0
        %4269 = vmatpush1.msra.mxu0 0.0
        %4270 = vmatprep.subr.mxu0 0.0
        %4271 = vmatpush1.msra.mxu0 0.0
        %4272 = vmatprep.subr.mxu0 0.0
        %4273 = vmatpush1.msra.mxu0 0.0
        %4274 = vmatprep.subr.mxu0 0.0
        %4275 = vmatpush1.msra.mxu0 0.0
        %4276 = vmatprep.subr.mxu0 0.0
        %4277 = vmatpush1.msra.mxu0 0.0
        %4278 = vmatprep.subr.mxu0 0.0
        %4279 = vmatpush1.msra.mxu0 0.0
        %4280 = vmatprep.subr.mxu0 0.0
        %4281 = vmatpush1.msra.mxu0 0.0
        %4282 = vmatprep.subr.mxu0 0.0
        %4283 = vmatpush1.msra.mxu0 0.0
        %4284 = vmatprep.mubr.f32.mxu0 0.0
        %4285 = vmatmul.mubr.f32.gmra.mrb[0].mxu0 %v4218
        %v4286 = vpop.f32.mrb[0].mxu0
        %v4287 = vadd.f32 0.0, %v4286
        %v4288 = vpop.f32.mrb[0].mxu0
        %4289 = vdwg.mxu0
        %4290 = vrot.lane.b32.xlu0 %v1417, 32
        %v4291 = vpop.permute.xlu0 %4290
        %4292 = vrot.lane.b32.xlu0 %v1422, 32
        %v4293 = vpop.permute.xlu0 %4292
        %v4297 = vsel %vm1561, %v4039, 0
        %4299 = vmatprep.subr.mxu0 0.0
        %4300 = vmatpush1.msra.mxu0 %v4291
        %4301 = vmatprep.subr.mxu0 0.0
        %4302 = vmatpush1.msra.mxu0 %v4293
        %4303 = vmatprep.subr.mxu0 0.0
        %4304 = vmatpush1.msra.mxu0 0.0
        %4305 = vmatprep.subr.mxu0 0.0
        %4306 = vmatpush1.msra.mxu0 0.0
        %4307 = vmatprep.subr.mxu0 0.0
        %4308 = vmatpush1.msra.mxu0 0.0
        %4309 = vmatprep.subr.mxu0 0.0
        %4310 = vmatpush1.msra.mxu0 0.0
        %4311 = vmatprep.subr.mxu0 0.0
        %4312 = vmatpush1.msra.mxu0 0.0
        %4313 = vmatprep.subr.mxu0 0.0
        %4314 = vmatpush1.msra.mxu0 0.0
        %4315 = vmatprep.subr.mxu0 0.0
        %4316 = vmatpush1.msra.mxu0 0.0
        %4317 = vmatprep.subr.mxu0 0.0
        %4318 = vmatpush1.msra.mxu0 0.0
        %4319 = vmatprep.subr.mxu0 0.0
        %4320 = vmatpush1.msra.mxu0 0.0
        %4321 = vmatprep.subr.mxu0 0.0
        %4322 = vmatpush1.msra.mxu0 0.0
        %4323 = vmatprep.subr.mxu0 0.0
        %4324 = vmatpush1.msra.mxu0 0.0
        %4325 = vmatprep.subr.mxu0 0.0
        %4326 = vmatpush1.msra.mxu0 0.0
        %4327 = vmatprep.subr.mxu0 0.0
        %4328 = vmatpush1.msra.mxu0 0.0
        %4329 = vmatprep.subr.mxu0 0.0
        %4330 = vmatpush1.msra.mxu0 0.0
        %4331 = vmatprep.subr.mxu0 0.0
        %4332 = vmatpush1.msra.mxu0 0.0
        %4333 = vmatprep.subr.mxu0 0.0
        %4334 = vmatpush1.msra.mxu0 0.0
        %4335 = vmatprep.subr.mxu0 0.0
        %4336 = vmatpush1.msra.mxu0 0.0
        %4337 = vmatprep.subr.mxu0 0.0
        %4338 = vmatpush1.msra.mxu0 0.0
        %4339 = vmatprep.subr.mxu0 0.0
        %4340 = vmatpush1.msra.mxu0 0.0
        %4341 = vmatprep.subr.mxu0 0.0
        %4342 = vmatpush1.msra.mxu0 0.0
        %4343 = vmatprep.subr.mxu0 0.0
        %4344 = vmatpush1.msra.mxu0 0.0
        %4345 = vmatprep.subr.mxu0 0.0
        %4346 = vmatpush1.msra.mxu0 0.0
        %4347 = vmatprep.subr.mxu0 0.0
        %4348 = vmatpush1.msra.mxu0 0.0
        %4349 = vmatprep.subr.mxu0 0.0
        %4350 = vmatpush1.msra.mxu0 0.0
        %4351 = vmatprep.subr.mxu0 0.0
        %4352 = vmatpush1.msra.mxu0 0.0
        %4353 = vmatprep.subr.mxu0 0.0
        %4354 = vmatpush1.msra.mxu0 0.0
        %4355 = vmatprep.subr.mxu0 0.0
        %4356 = vmatpush1.msra.mxu0 0.0
        %4357 = vmatprep.subr.mxu0 0.0
        %4358 = vmatpush1.msra.mxu0 0.0
        %4359 = vmatprep.subr.mxu0 0.0
        %4360 = vmatpush1.msra.mxu0 0.0
        %4361 = vmatprep.subr.mxu0 0.0
        %4362 = vmatpush1.msra.mxu0 0.0
        %4363 = vmatprep.mubr.f32.mxu0 0.0
        %4364 = vmatmul.mubr.f32.gmra.mrb[0].mxu0 %v4297
        %v4365 = vpop.f32.mrb[0].mxu0
        %v4366 = vadd.f32 0.0, %v4365
        %v4367 = vpop.f32.mrb[0].mxu0
        %4368 = vdwg.mxu0
        %4369 = vrot.lane.b32.xlu0 %v1427, 32
        %v4370 = vpop.permute.xlu0 %4369
        %4371 = vrot.lane.b32.xlu0 %v1432, 32
        %v4372 = vpop.permute.xlu0 %4371
        %v4376 = vsel %vm1561, %v4040, 0
        %4378 = vmatprep.subr.mxu0 0.0
        %4379 = vmatpush1.msra.mxu0 %v4370
        %4380 = vmatprep.subr.mxu0 0.0
        %4381 = vmatpush1.msra.mxu0 %v4372
        %4382 = vmatprep.subr.mxu0 0.0
        %4383 = vmatpush1.msra.mxu0 0.0
        %4384 = vmatprep.subr.mxu0 0.0
        %4385 = vmatpush1.msra.mxu0 0.0
        %4386 = vmatprep.subr.mxu0 0.0
        %4387 = vmatpush1.msra.mxu0 0.0
        %4388 = vmatprep.subr.mxu0 0.0
        %4389 = vmatpush1.msra.mxu0 0.0
        %4390 = vmatprep.subr.mxu0 0.0
        %4391 = vmatpush1.msra.mxu0 0.0
        %4392 = vmatprep.subr.mxu0 0.0
        %4393 = vmatpush1.msra.mxu0 0.0
        %4394 = vmatprep.subr.mxu0 0.0
        %4395 = vmatpush1.msra.mxu0 0.0
        %4396 = vmatprep.subr.mxu0 0.0
        %4397 = vmatpush1.msra.mxu0 0.0
        %4398 = vmatprep.subr.mxu0 0.0
        %4399 = vmatpush1.msra.mxu0 0.0
        %4400 = vmatprep.subr.mxu0 0.0
        %4401 = vmatpush1.msra.mxu0 0.0
        %4402 = vmatprep.subr.mxu0 0.0
        %4403 = vmatpush1.msra.mxu0 0.0
        %4404 = vmatprep.subr.mxu0 0.0
        %4405 = vmatpush1.msra.mxu0 0.0
        %4406 = vmatprep.subr.mxu0 0.0
        %4407 = vmatpush1.msra.mxu0 0.0
        %4408 = vmatprep.subr.mxu0 0.0
        %4409 = vmatpush1.msra.mxu0 0.0
        %4410 = vmatprep.subr.mxu0 0.0
        %4411 = vmatpush1.msra.mxu0 0.0
        %4412 = vmatprep.subr.mxu0 0.0
        %4413 = vmatpush1.msra.mxu0 0.0
        %4414 = vmatprep.subr.mxu0 0.0
        %4415 = vmatpush1.msra.mxu0 0.0
        %4416 = vmatprep.subr.mxu0 0.0
        %4417 = vmatpush1.msra.mxu0 0.0
        %4418 = vmatprep.subr.mxu0 0.0
        %4419 = vmatpush1.msra.mxu0 0.0
        %4420 = vmatprep.subr.mxu0 0.0
        %4421 = vmatpush1.msra.mxu0 0.0
        %4422 = vmatprep.subr.mxu0 0.0
        %4423 = vmatpush1.msra.mxu0 0.0
        %4424 = vmatprep.subr.mxu0 0.0
        %4425 = vmatpush1.msra.mxu0 0.0
        %4426 = vmatprep.subr.mxu0 0.0
        %4427 = vmatpush1.msra.mxu0 0.0
        %4428 = vmatprep.subr.mxu0 0.0
        %4429 = vmatpush1.msra.mxu0 0.0
        %4430 = vmatprep.subr.mxu0 0.0
        %4431 = vmatpush1.msra.mxu0 0.0
        %4432 = vmatprep.subr.mxu0 0.0
        %4433 = vmatpush1.msra.mxu0 0.0
        %4434 = vmatprep.subr.mxu0 0.0
        %4435 = vmatpush1.msra.mxu0 0.0
        %4436 = vmatprep.subr.mxu0 0.0
        %4437 = vmatpush1.msra.mxu0 0.0
        %4438 = vmatprep.subr.mxu0 0.0
        %4439 = vmatpush1.msra.mxu0 0.0
        %4440 = vmatprep.subr.mxu0 0.0
        %4441 = vmatpush1.msra.mxu0 0.0
        %4442 = vmatprep.mubr.f32.mxu0 0.0
        %4443 = vmatmul.mubr.f32.gmra.mrb[0].mxu0 %v4376
        %v4444 = vpop.f32.mrb[0].mxu0
        %v4445 = vadd.f32 0.0, %v4444
        %v4446 = vpop.f32.mrb[0].mxu0
        %4447 = vdwg.mxu0
        %4448 = vrot.lane.b32.xlu0 %v1437, 32
        %v4449 = vpop.permute.xlu0 %4448
        %4450 = vrot.lane.b32.xlu0 %v1442, 32
        %v4451 = vpop.permute.xlu0 %4450
        %v4455 = vsel %vm1561, %v4041, 0
        %4457 = vmatprep.subr.mxu0 0.0
        %4458 = vmatpush1.msra.mxu0 %v4449
        %4459 = vmatprep.subr.mxu0 0.0
        %4460 = vmatpush1.msra.mxu0 %v4451
        %4461 = vmatprep.subr.mxu0 0.0
        %4462 = vmatpush1.msra.mxu0 0.0
        %4463 = vmatprep.subr.mxu0 0.0
        %4464 = vmatpush1.msra.mxu0 0.0
        %4465 = vmatprep.subr.mxu0 0.0
        %4466 = vmatpush1.msra.mxu0 0.0
        %4467 = vmatprep.subr.mxu0 0.0
        %4468 = vmatpush1.msra.mxu0 0.0
        %4469 = vmatprep.subr.mxu0 0.0
        %4470 = vmatpush1.msra.mxu0 0.0
        %4471 = vmatprep.subr.mxu0 0.0
        %4472 = vmatpush1.msra.mxu0 0.0
        %4473 = vmatprep.subr.mxu0 0.0
        %4474 = vmatpush1.msra.mxu0 0.0
        %4475 = vmatprep.subr.mxu0 0.0
        %4476 = vmatpush1.msra.mxu0 0.0
        %4477 = vmatprep.subr.mxu0 0.0
        %4478 = vmatpush1.msra.mxu0 0.0
        %4479 = vmatprep.subr.mxu0 0.0
        %4480 = vmatpush1.msra.mxu0 0.0
        %4481 = vmatprep.subr.mxu0 0.0
        %4482 = vmatpush1.msra.mxu0 0.0
        %4483 = vmatprep.subr.mxu0 0.0
        %4484 = vmatpush1.msra.mxu0 0.0
        %4485 = vmatprep.subr.mxu0 0.0
        %4486 = vmatpush1.msra.mxu0 0.0
        %4487 = vmatprep.subr.mxu0 0.0
        %4488 = vmatpush1.msra.mxu0 0.0
        %4489 = vmatprep.subr.mxu0 0.0
        %4490 = vmatpush1.msra.mxu0 0.0
        %4491 = vmatprep.subr.mxu0 0.0
        %4492 = vmatpush1.msra.mxu0 0.0
        %4493 = vmatprep.subr.mxu0 0.0
        %4494 = vmatpush1.msra.mxu0 0.0
        %4495 = vmatprep.subr.mxu0 0.0
        %4496 = vmatpush1.msra.mxu0 0.0
        %4497 = vmatprep.subr.mxu0 0.0
        %4498 = vmatpush1.msra.mxu0 0.0
        %4499 = vmatprep.subr.mxu0 0.0
        %4500 = vmatpush1.msra.mxu0 0.0
        %4501 = vmatprep.subr.mxu0 0.0
        %4502 = vmatpush1.msra.mxu0 0.0
        %4503 = vmatprep.subr.mxu0 0.0
        %4504 = vmatpush1.msra.mxu0 0.0
        %4505 = vmatprep.subr.mxu0 0.0
        %4506 = vmatpush1.msra.mxu0 0.0
        %4507 = vmatprep.subr.mxu0 0.0
        %4508 = vmatpush1.msra.mxu0 0.0
        %4509 = vmatprep.subr.mxu0 0.0
        %4510 = vmatpush1.msra.mxu0 0.0
        %4511 = vmatprep.subr.mxu0 0.0
        %4512 = vmatpush1.msra.mxu0 0.0
        %4513 = vmatprep.subr.mxu0 0.0
        %4514 = vmatpush1.msra.mxu0 0.0
        %4515 = vmatprep.subr.mxu0 0.0
        %4516 = vmatpush1.msra.mxu0 0.0
        %4517 = vmatprep.subr.mxu0 0.0
        %4518 = vmatpush1.msra.mxu0 0.0
        %4519 = vmatprep.subr.mxu0 0.0
        %4520 = vmatpush1.msra.mxu0 0.0
        %4521 = vmatprep.mubr.f32.mxu0 0.0
        %4522 = vmatmul.mubr.f32.gmra.mrb[0].mxu0 %v4455
        %v4523 = vpop.f32.mrb[0].mxu0
        %v4524 = vadd.f32 0.0, %v4523
        %v4525 = vpop.f32.mrb[0].mxu0
        %4526 = vdwg.mxu0
        %4527 = vrot.lane.b32.xlu0 %v1447, 32
        %v4528 = vpop.permute.xlu0 %4527
        %4529 = vrot.lane.b32.xlu0 %v1452, 32
        %v4530 = vpop.permute.xlu0 %4529
        %v4534 = vsel %vm1561, %v4042, 0
        %4536 = vmatprep.subr.mxu0 0.0
        %4537 = vmatpush1.msra.mxu0 %v4528
        %4538 = vmatprep.subr.mxu0 0.0
        %4539 = vmatpush1.msra.mxu0 %v4530
        %4540 = vmatprep.subr.mxu0 0.0
        %4541 = vmatpush1.msra.mxu0 0.0
        %4542 = vmatprep.subr.mxu0 0.0
        %4543 = vmatpush1.msra.mxu0 0.0
        %4544 = vmatprep.subr.mxu0 0.0
        %4545 = vmatpush1.msra.mxu0 0.0
        %4546 = vmatprep.subr.mxu0 0.0
        %4547 = vmatpush1.msra.mxu0 0.0
        %4548 = vmatprep.subr.mxu0 0.0
        %4549 = vmatpush1.msra.mxu0 0.0
        %4550 = vmatprep.subr.mxu0 0.0
        %4551 = vmatpush1.msra.mxu0 0.0
        %4552 = vmatprep.subr.mxu0 0.0
        %4553 = vmatpush1.msra.mxu0 0.0
        %4554 = vmatprep.subr.mxu0 0.0
        %4555 = vmatpush1.msra.mxu0 0.0
        %4556 = vmatprep.subr.mxu0 0.0
        %4557 = vmatpush1.msra.mxu0 0.0
        %4558 = vmatprep.subr.mxu0 0.0
        %4559 = vmatpush1.msra.mxu0 0.0
        %4560 = vmatprep.subr.mxu0 0.0
        %4561 = vmatpush1.msra.mxu0 0.0
        %4562 = vmatprep.subr.mxu0 0.0
        %4563 = vmatpush1.msra.mxu0 0.0
        %4564 = vmatprep.subr.mxu0 0.0
        %4565 = vmatpush1.msra.mxu0 0.0
        %4566 = vmatprep.subr.mxu0 0.0
        %4567 = vmatpush1.msra.mxu0 0.0
        %4568 = vmatprep.subr.mxu0 0.0
        %4569 = vmatpush1.msra.mxu0 0.0
        %4570 = vmatprep.subr.mxu0 0.0
        %4571 = vmatpush1.msra.mxu0 0.0
        %4572 = vmatprep.subr.mxu0 0.0
        %4573 = vmatpush1.msra.mxu0 0.0
        %4574 = vmatprep.subr.mxu0 0.0
        %4575 = vmatpush1.msra.mxu0 0.0
        %4576 = vmatprep.subr.mxu0 0.0
        %4577 = vmatpush1.msra.mxu0 0.0
        %4578 = vmatprep.subr.mxu0 0.0
        %4579 = vmatpush1.msra.mxu0 0.0
        %4580 = vmatprep.subr.mxu0 0.0
        %4581 = vmatpush1.msra.mxu0 0.0
        %4582 = vmatprep.subr.mxu0 0.0
        %4583 = vmatpush1.msra.mxu0 0.0
        %4584 = vmatprep.subr.mxu0 0.0
        %4585 = vmatpush1.msra.mxu0 0.0
        %4586 = vmatprep.subr.mxu0 0.0
        %4587 = vmatpush1.msra.mxu0 0.0
        %4588 = vmatprep.subr.mxu0 0.0
        %4589 = vmatpush1.msra.mxu0 0.0
        %4590 = vmatprep.subr.mxu0 0.0
        %4591 = vmatpush1.msra.mxu0 0.0
        %4592 = vmatprep.subr.mxu0 0.0
        %4593 = vmatpush1.msra.mxu0 0.0
        %4594 = vmatprep.subr.mxu0 0.0
        %4595 = vmatpush1.msra.mxu0 0.0
        %4596 = vmatprep.subr.mxu0 0.0
        %4597 = vmatpush1.msra.mxu0 0.0
        %4598 = vmatprep.subr.mxu0 0.0
        %4599 = vmatpush1.msra.mxu0 0.0
        %4600 = vmatprep.mubr.f32.mxu0 0.0
        %4601 = vmatmul.mubr.f32.gmra.mrb[0].mxu0 %v4534
        %v4602 = vpop.f32.mrb[0].mxu0
        %v4603 = vadd.f32 0.0, %v4602
        %v4604 = vpop.f32.mrb[0].mxu0
        %4605 = vdwg.mxu0
        %4606 = vrot.lane.b32.xlu0 %v1457, 32
        %v4607 = vpop.permute.xlu0 %4606
        %4608 = vrot.lane.b32.xlu0 %v1462, 32
        %v4609 = vpop.permute.xlu0 %4608
        %v4613 = vsel %vm1561, %v4043, 0
        %4615 = vmatprep.subr.mxu0 0.0
        %4616 = vmatpush1.msra.mxu0 %v4607
        %4617 = vmatprep.subr.mxu0 0.0
        %4618 = vmatpush1.msra.mxu0 %v4609
        %4619 = vmatprep.subr.mxu0 0.0
        %4620 = vmatpush1.msra.mxu0 0.0
        %4621 = vmatprep.subr.mxu0 0.0
        %4622 = vmatpush1.msra.mxu0 0.0
        %4623 = vmatprep.subr.mxu0 0.0
        %4624 = vmatpush1.msra.mxu0 0.0
        %4625 = vmatprep.subr.mxu0 0.0
        %4626 = vmatpush1.msra.mxu0 0.0
        %4627 = vmatprep.subr.mxu0 0.0
        %4628 = vmatpush1.msra.mxu0 0.0
        %4629 = vmatprep.subr.mxu0 0.0
        %4630 = vmatpush1.msra.mxu0 0.0
        %4631 = vmatprep.subr.mxu0 0.0
        %4632 = vmatpush1.msra.mxu0 0.0
        %4633 = vmatprep.subr.mxu0 0.0
        %4634 = vmatpush1.msra.mxu0 0.0
        %4635 = vmatprep.subr.mxu0 0.0
        %4636 = vmatpush1.msra.mxu0 0.0
        %4637 = vmatprep.subr.mxu0 0.0
        %4638 = vmatpush1.msra.mxu0 0.0
        %4639 = vmatprep.subr.mxu0 0.0
        %4640 = vmatpush1.msra.mxu0 0.0
        %4641 = vmatprep.subr.mxu0 0.0
        %4642 = vmatpush1.msra.mxu0 0.0
        %4643 = vmatprep.subr.mxu0 0.0
        %4644 = vmatpush1.msra.mxu0 0.0
        %4645 = vmatprep.subr.mxu0 0.0
        %4646 = vmatpush1.msra.mxu0 0.0
        %4647 = vmatprep.subr.mxu0 0.0
        %4648 = vmatpush1.msra.mxu0 0.0
        %4649 = vmatprep.subr.mxu0 0.0
        %4650 = vmatpush1.msra.mxu0 0.0
        %4651 = vmatprep.subr.mxu0 0.0
        %4652 = vmatpush1.msra.mxu0 0.0
        %4653 = vmatprep.subr.mxu0 0.0
        %4654 = vmatpush1.msra.mxu0 0.0
        %4655 = vmatprep.subr.mxu0 0.0
        %4656 = vmatpush1.msra.mxu0 0.0
        %4657 = vmatprep.subr.mxu0 0.0
        %4658 = vmatpush1.msra.mxu0 0.0
        %4659 = vmatprep.subr.mxu0 0.0
        %4660 = vmatpush1.msra.mxu0 0.0
        %4661 = vmatprep.subr.mxu0 0.0
        %4662 = vmatpush1.msra.mxu0 0.0
        %4663 = vmatprep.subr.mxu0 0.0
        %4664 = vmatpush1.msra.mxu0 0.0
        %4665 = vmatprep.subr.mxu0 0.0
        %4666 = vmatpush1.msra.mxu0 0.0
        %4667 = vmatprep.subr.mxu0 0.0
        %4668 = vmatpush1.msra.mxu0 0.0
        %4669 = vmatprep.subr.mxu0 0.0
        %4670 = vmatpush1.msra.mxu0 0.0
        %4671 = vmatprep.subr.mxu0 0.0
        %4672 = vmatpush1.msra.mxu0 0.0
        %4673 = vmatprep.subr.mxu0 0.0
        %4674 = vmatpush1.msra.mxu0 0.0
        %4675 = vmatprep.subr.mxu0 0.0
        %4676 = vmatpush1.msra.mxu0 0.0
        %4677 = vmatprep.subr.mxu0 0.0
        %4678 = vmatpush1.msra.mxu0 0.0
        %4679 = vmatprep.mubr.f32.mxu0 0.0
        %4680 = vmatmul.mubr.f32.gmra.mrb[0].mxu0 %v4613
        %v4681 = vpop.f32.mrb[0].mxu0
        %v4682 = vadd.f32 0.0, %v4681
        %v4683 = vpop.f32.mrb[0].mxu0
        %4684 = vdwg.mxu0
        %4693 = vrot.lane.b32.xlu0 %v2497, 32
        %v4694 = vpop.permute.xlu0 %4693
        %4695 = vrot.lane.b32.xlu0 %v2578, 32
        %v4696 = vpop.permute.xlu0 %4695
        %4697 = vrot.lane.b32.xlu0 %v2659, 32
        %v4698 = vpop.permute.xlu0 %4697
        %4699 = vrot.lane.b32.xlu0 %v2740, 32
        %v4700 = vpop.permute.xlu0 %4699
        %4701 = vrot.lane.b32.xlu0 %v2821, 32
        %v4702 = vpop.permute.xlu0 %4701
        %4703 = vrot.lane.b32.xlu0 %v2902, 32
        %v4704 = vpop.permute.xlu0 %4703
        %4705 = vrot.lane.b32.xlu0 %v2983, 32
        %v4706 = vpop.permute.xlu0 %4705
        %4707 = vrot.lane.b32.xlu0 %v3064, 32
        %v4708 = vpop.permute.xlu0 %4707
        %4725 = vrot.lane.b32.xlu0 %v3320, 64
        %v4726 = vpop.permute.xlu0 %4725
        %4727 = vrot.lane.b32.xlu0 %v3399, 64
        %v4728 = vpop.permute.xlu0 %4727
        %4729 = vrot.lane.b32.xlu0 %v3478, 64
        %v4730 = vpop.permute.xlu0 %4729
        %4731 = vrot.lane.b32.xlu0 %v3557, 64
        %v4732 = vpop.permute.xlu0 %4731
        %4733 = vrot.lane.b32.xlu0 %v3636, 64
        %v4734 = vpop.permute.xlu0 %4733
        %4735 = vrot.lane.b32.xlu0 %v3715, 64
        %v4736 = vpop.permute.xlu0 %4735
        %4737 = vrot.lane.b32.xlu0 %v3794, 64
        %v4738 = vpop.permute.xlu0 %4737
        %4739 = vrot.lane.b32.xlu0 %v3873, 64
        %v4740 = vpop.permute.xlu0 %4739
        %4757 = vrot.lane.b32.xlu0 %v4129, 96
        %v4758 = vpop.permute.xlu0 %4757
        %4759 = vrot.lane.b32.xlu0 %v4208, 96
        %v4760 = vpop.permute.xlu0 %4759
        %4761 = vrot.lane.b32.xlu0 %v4287, 96
        %v4762 = vpop.permute.xlu0 %4761
        %4763 = vrot.lane.b32.xlu0 %v4366, 96
        %v4764 = vpop.permute.xlu0 %4763
        %4765 = vrot.lane.b32.xlu0 %v4445, 96
        %v4766 = vpop.permute.xlu0 %4765
        %4767 = vrot.lane.b32.xlu0 %v4524, 96
        %v4768 = vpop.permute.xlu0 %4767
        %4769 = vrot.lane.b32.xlu0 %v4603, 96
        %v4770 = vpop.permute.xlu0 %4769
        %4771 = vrot.lane.b32.xlu0 %v4682, 96
        %v4772 = vpop.permute.xlu0 %4771
        %vm4781 = vcmask 261120
        %v4782 = vsel %vm4781, %v1728, %v4694
        %v4783 = vsel %vm4781, %v1801, %v4696
        %v4784 = vsel %vm4781, %v1874, %v4698
        %v4785 = vsel %vm4781, %v1947, %v4700
        %v4786 = vsel %vm4781, %v2020, %v4702
        %v4787 = vsel %vm4781, %v2093, %v4704
        %v4788 = vsel %vm4781, %v2166, %v4706
        %v4789 = vsel %vm4781, %v2239, %v4708
        %vm4790 = vcmask 523264
        %v4791 = vsel %vm4790, %v4782, %v4726
        %v4792 = vsel %vm4790, %v4783, %v4728
        %v4793 = vsel %vm4790, %v4784, %v4730
        %v4794 = vsel %vm4790, %v4785, %v4732
        %v4795 = vsel %vm4790, %v4786, %v4734
        %v4796 = vsel %vm4790, %v4787, %v4736
        %v4797 = vsel %vm4790, %v4788, %v4738
        %v4798 = vsel %vm4790, %v4789, %v4740
        %vm4799 = vcmask 785408
        %v4800 = vsel %vm4799, %v4791, %v4758
        %v4801 = vsel %vm4799, %v4792, %v4760
        %v4802 = vsel %vm4799, %v4793, %v4762
        %v4803 = vsel %vm4799, %v4794, %v4764
        %v4804 = vsel %vm4799, %v4795, %v4766
        %v4805 = vsel %vm4799, %v4796, %v4768
        %v4806 = vsel %vm4799, %v4797, %v4770
        %v4807 = vsel %vm4799, %v4798, %v4772
        %v4808 = vld [vmem:[#allocation10] sm:$0xff]
        %v4809 = vld [vmem:[#allocation10 + $0x8] sm:$0xff]
        %v4810 = vld [vmem:[#allocation10 + $0x10] sm:$0xff]
        %v4811 = vld [vmem:[#allocation10 + $0x18] sm:$0xff]
        %v4812 = vld [vmem:[#allocation10 + $0x20] sm:$0xff]
        %v4813 = vld [vmem:[#allocation10 + $0x28] sm:$0xff]
        %v4814 = vld [vmem:[#allocation10 + $0x30] sm:$0xff]
        %v4815 = vld [vmem:[#allocation10 + $0x38] sm:$0xff]
        %v4816 = vld [vmem:[#allocation10 + $0x40] sm:$0xff]
        %v4817 = vld [vmem:[#allocation10 + $0x48] sm:$0xff]
        %v4818 = vld [vmem:[#allocation10 + $0x50] sm:$0xff]
        %v4819 = vld [vmem:[#allocation10 + $0x58] sm:$0xff]
        %v4820 = vld [vmem:[#allocation10 + $0x60] sm:$0xff]
        %v4821 = vld [vmem:[#allocation10 + $0x68] sm:$0xff]
        %v4822 = vld [vmem:[#allocation10 + $0x70] sm:$0xff]
        %v4823 = vld [vmem:[#allocation10 + $0x78] sm:$0xff]
        %v4824 = vld [vmem:[%s8] sm:$0x1]
        %v4826 = vlaneseq
        %v4827 = vshrl.u32 %v4826, 7
        %v4828 = vsub.s32 0, %v4827
        %v4829 = vrot.slane %v4824, %v4828
        %4831 = vmatprep.subr.mxu0 0.0
        %4832 = vmatpush1.msra.mxu0 %v4808
        %4833 = vmatprep.subr.mxu0 0.0
        %4834 = vmatpush1.msra.mxu0 %v4809
        %4835 = vmatprep.subr.mxu0 0.0
        %4836 = vmatpush1.msra.mxu0 %v4810
        %4837 = vmatprep.subr.mxu0 0.0
        %4838 = vmatpush1.msra.mxu0 %v4811
        %4839 = vmatprep.subr.mxu0 0.0
        %4840 = vmatpush1.msra.mxu0 %v4812
        %4841 = vmatprep.subr.mxu0 0.0
        %4842 = vmatpush1.msra.mxu0 %v4813
        %4843 = vmatprep.subr.mxu0 0.0
        %4844 = vmatpush1.msra.mxu0 %v4814
        %4845 = vmatprep.subr.mxu0 0.0
        %4846 = vmatpush1.msra.mxu0 %v4815
        %4847 = vmatprep.subr.mxu0 0.0
        %4848 = vmatpush1.msra.mxu0 %v4816
        %4849 = vmatprep.subr.mxu0 0.0
        %4850 = vmatpush1.msra.mxu0 %v4817
        %4851 = vmatprep.subr.mxu0 0.0
        %4852 = vmatpush1.msra.mxu0 %v4818
        %4853 = vmatprep.subr.mxu0 0.0
        %4854 = vmatpush1.msra.mxu0 %v4819
        %4855 = vmatprep.subr.mxu0 0.0
        %4856 = vmatpush1.msra.mxu0 %v4820
        %4857 = vmatprep.subr.mxu0 0.0
        %4858 = vmatpush1.msra.mxu0 %v4821
        %4859 = vmatprep.subr.mxu0 0.0
        %4860 = vmatpush1.msra.mxu0 %v4822
        %4861 = vmatprep.subr.mxu0 0.0
        %4862 = vmatpush1.msra.mxu0 %v4823
        %4863 = vmatprep.subr.mxu0 0.0
        %4864 = vmatpush1.msra.mxu0 0.0
        %4865 = vmatprep.subr.mxu0 0.0
        %4866 = vmatpush1.msra.mxu0 0.0
        %4867 = vmatprep.subr.mxu0 0.0
        %4868 = vmatpush1.msra.mxu0 0.0
        %4869 = vmatprep.subr.mxu0 0.0
        %4870 = vmatpush1.msra.mxu0 0.0
        %4871 = vmatprep.subr.mxu0 0.0
        %4872 = vmatpush1.msra.mxu0 0.0
        %4873 = vmatprep.subr.mxu0 0.0
        %4874 = vmatpush1.msra.mxu0 0.0
        %4875 = vmatprep.subr.mxu0 0.0
        %4876 = vmatpush1.msra.mxu0 0.0
        %4877 = vmatprep.subr.mxu0 0.0
        %4878 = vmatpush1.msra.mxu0 0.0
        %4879 = vmatprep.subr.mxu0 0.0
        %4880 = vmatpush1.msra.mxu0 0.0
        %4881 = vmatprep.subr.mxu0 0.0
        %4882 = vmatpush1.msra.mxu0 0.0
        %4883 = vmatprep.subr.mxu0 0.0
        %4884 = vmatpush1.msra.mxu0 0.0
        %4885 = vmatprep.subr.mxu0 0.0
        %4886 = vmatpush1.msra.mxu0 0.0
        %4887 = vmatprep.subr.mxu0 0.0
        %4888 = vmatpush1.msra.mxu0 0.0
        %4889 = vmatprep.subr.mxu0 0.0
        %4890 = vmatpush1.msra.mxu0 0.0
        %4891 = vmatprep.subr.mxu0 0.0
        %4892 = vmatpush1.msra.mxu0 0.0
        %4893 = vmatprep.subr.mxu0 0.0
        %4894 = vmatpush1.msra.mxu0 0.0
        %4895 = vmatprep.mubr.f32.mxu0 0.0
        %4896 = vmatmul.mubr.f32.gmra.mrb[0].mxu0 %v4800
        %v4897 = vpop.f32.mrb[0].mxu0
        %v4898 = vadd.f32 %v4829, %v4897
        %v4899 = vpop.f32.mrb[0].mxu0
        %4900 = vmatprep.mubr.f32.mxu0 0.0
        %4901 = vmatmul.mubr.f32.gmra.mrb[0].mxu0 %v4801
        %v4902 = vpop.f32.mrb[0].mxu0
        %v4903 = vadd.f32 %v4829, %v4902
        %v4904 = vpop.f32.mrb[0].mxu0
        %4905 = vmatprep.mubr.f32.mxu0 0.0
        %4906 = vmatmul.mubr.f32.gmra.mrb[0].mxu0 %v4802
        %v4907 = vpop.f32.mrb[0].mxu0
        %v4908 = vadd.f32 %v4829, %v4907
        %v4909 = vpop.f32.mrb[0].mxu0
        %4910 = vmatprep.mubr.f32.mxu0 0.0
        %4911 = vmatmul.mubr.f32.gmra.mrb[0].mxu0 %v4803
        %v4912 = vpop.f32.mrb[0].mxu0
        %v4913 = vadd.f32 %v4829, %v4912
        %v4914 = vpop.f32.mrb[0].mxu0
        %4915 = vmatprep.mubr.f32.mxu0 0.0
        %4916 = vmatmul.mubr.f32.gmra.mrb[0].mxu0 %v4804
        %v4917 = vpop.f32.mrb[0].mxu0
        %v4918 = vadd.f32 %v4829, %v4917
        %v4919 = vpop.f32.mrb[0].mxu0
        %4920 = vmatprep.mubr.f32.mxu0 0.0
        %4921 = vmatmul.mubr.f32.gmra.mrb[0].mxu0 %v4805
        %v4922 = vpop.f32.mrb[0].mxu0
        %v4923 = vadd.f32 %v4829, %v4922
        %v4924 = vpop.f32.mrb[0].mxu0
        %4925 = vmatprep.mubr.f32.mxu0 0.0
        %4926 = vmatmul.mubr.f32.gmra.mrb[0].mxu0 %v4806
        %v4927 = vpop.f32.mrb[0].mxu0
        %v4928 = vadd.f32 %v4829, %v4927
        %v4929 = vpop.f32.mrb[0].mxu0
        %4930 = vmatprep.mubr.f32.mxu0 0.0
        %4931 = vmatmul.mubr.f32.gmra.mrb[0].mxu0 %v4807
        %v4932 = vpop.f32.mrb[0].mxu0
        %v4933 = vadd.f32 %v4829, %v4932
        %v4934 = vpop.f32.mrb[0].mxu0
        %4935 = vdwg.mxu0
        %vm4936 = vcmp.ge.f32.partialorder %v4898, 0.0
        %vm4937 = vcmp.ge.f32.partialorder %v4903, 0.0
        %vm4938 = vcmp.ge.f32.partialorder %v4908, 0.0
        %vm4939 = vcmp.ge.f32.partialorder %v4913, 0.0
        %vm4940 = vcmp.ge.f32.partialorder %v4918, 0.0
        %vm4941 = vcmp.ge.f32.partialorder %v4923, 0.0
        %vm4942 = vcmp.ge.f32.partialorder %v4928, 0.0
        %vm4943 = vcmp.ge.f32.partialorder %v4933, 0.0
        %v4944 = vmul.f32 %v4898, 0.2
        %v4945 = vmul.f32 %v4903, 0.2
        %v4946 = vmul.f32 %v4908, 0.2
        %v4947 = vmul.f32 %v4913, 0.2
        %v4948 = vmul.f32 %v4918, 0.2
        %v4949 = vmul.f32 %v4923, 0.2
        %v4950 = vmul.f32 %v4928, 0.2
        %v4951 = vmul.f32 %v4933, 0.2
        %v4952 = vsel %vm4936, %v4898, %v4944
        %v4953 = vsel %vm4937, %v4903, %v4945
        %v4954 = vsel %vm4938, %v4908, %v4946
        %v4955 = vsel %vm4939, %v4913, %v4947
        %v4956 = vsel %vm4940, %v4918, %v4948
        %v4957 = vsel %vm4941, %v4923, %v4949
        %v4958 = vsel %vm4942, %v4928, %v4950
        %v4959 = vsel %vm4943, %v4933, %v4951
        %v4960 = vadd.f32 %v4952, %v574
        %v4961 = vadd.f32 %v4953, %v575
        %v4962 = vadd.f32 %v4954, %v576
        %v4963 = vadd.f32 %v4955, %v577
        %v4964 = vadd.f32 %v4956, %v578
        %v4965 = vadd.f32 %v4957, %v579
        %v4966 = vadd.f32 %v4958, %v580
        %v4967 = vadd.f32 %v4959, %v581
        %4968 = vadd.xlane.f32.xlu0 %v4960
        %v4969 = vpop.xlane.xlu0 %4968
        %4970 = vadd.xlane.f32.xlu0 %v4961
        %v4971 = vpop.xlane.xlu0 %4970
        %4972 = vadd.xlane.f32.xlu0 %v4962
        %v4973 = vpop.xlane.xlu0 %4972
        %4974 = vadd.xlane.f32.xlu0 %v4963
        %v4975 = vpop.xlane.xlu0 %4974
        %4976 = vadd.xlane.f32.xlu0 %v4964
        %v4977 = vpop.xlane.xlu0 %4976
        %4978 = vadd.xlane.f32.xlu0 %v4965
        %v4979 = vpop.xlane.xlu0 %4978
        %4980 = vadd.xlane.f32.xlu0 %v4966
        %v4981 = vpop.xlane.xlu0 %4980
        %4982 = vadd.xlane.f32.xlu0 %v4967
        %v4983 = vpop.xlane.xlu0 %4982
        %v4984 = vrcp.pop 128.0
        %v4985 = vmul.f32 %v4969, %v4984
        %v4986 = vmul.f32 %v4971, %v4984
        %v4987 = vmul.f32 %v4973, %v4984
        %v4988 = vmul.f32 %v4975, %v4984
        %v4989 = vmul.f32 %v4977, %v4984
        %v4990 = vmul.f32 %v4979, %v4984
        %v4991 = vmul.f32 %v4981, %v4984
        %v4992 = vmul.f32 %v4983, %v4984
        %v4993 = vsub.f32 %v4960, %v4985
        %v4994 = vsub.f32 %v4961, %v4986
        %v4995 = vsub.f32 %v4962, %v4987
        %v4996 = vsub.f32 %v4963, %v4988
        %v4997 = vsub.f32 %v4964, %v4989
        %v4998 = vsub.f32 %v4965, %v4990
        %v4999 = vsub.f32 %v4966, %v4991
        %v5000 = vsub.f32 %v4967, %v4992
        %v5001 = vmul.f32 %v4993, %v4993
        %v5002 = vmul.f32 %v4994, %v4994
        %v5003 = vmul.f32 %v4995, %v4995
        %v5004 = vmul.f32 %v4996, %v4996
        %v5005 = vmul.f32 %v4997, %v4997
        %v5006 = vmul.f32 %v4998, %v4998
        %v5007 = vmul.f32 %v4999, %v4999
        %v5008 = vmul.f32 %v5000, %v5000
        %5009 = vadd.xlane.f32.xlu0 %v5001
        %v5010 = vpop.xlane.xlu0 %5009
        %5011 = vadd.xlane.f32.xlu0 %v5002
        %v5012 = vpop.xlane.xlu0 %5011
        %5013 = vadd.xlane.f32.xlu0 %v5003
        %v5014 = vpop.xlane.xlu0 %5013
        %5015 = vadd.xlane.f32.xlu0 %v5004
        %v5016 = vpop.xlane.xlu0 %5015
        %5017 = vadd.xlane.f32.xlu0 %v5005
        %v5018 = vpop.xlane.xlu0 %5017
        %5019 = vadd.xlane.f32.xlu0 %v5006
        %v5020 = vpop.xlane.xlu0 %5019
        %5021 = vadd.xlane.f32.xlu0 %v5007
        %v5022 = vpop.xlane.xlu0 %5021
        %5023 = vadd.xlane.f32.xlu0 %v5008
        %v5024 = vpop.xlane.xlu0 %5023
        %v5025 = vmul.f32 %v5010, %v4984
        %v5026 = vmul.f32 %v5012, %v4984
        %v5027 = vmul.f32 %v5014, %v4984
        %v5028 = vmul.f32 %v5016, %v4984
        %v5029 = vmul.f32 %v5018, %v4984
        %v5030 = vmul.f32 %v5020, %v4984
        %v5031 = vmul.f32 %v5022, %v4984
        %v5032 = vmul.f32 %v5024, %v4984
        %v5033 = vadd.f32 %v5025, 1e-05
        %v5034 = vadd.f32 %v5026, 1e-05
        %v5035 = vadd.f32 %v5027, 1e-05
        %v5036 = vadd.f32 %v5028, 1e-05
        %v5037 = vadd.f32 %v5029, 1e-05
        %v5038 = vadd.f32 %v5030, 1e-05
        %v5039 = vadd.f32 %v5031, 1e-05
        %v5040 = vadd.f32 %v5032, 1e-05
        %v5041 = vrsqrt.pop %v5033
        %v5042 = vrsqrt.pop %v5034
        %v5043 = vrsqrt.pop %v5035
        %v5044 = vrsqrt.pop %v5036
        %v5045 = vrsqrt.pop %v5037
        %v5046 = vrsqrt.pop %v5038
        %v5047 = vrsqrt.pop %v5039
        %v5048 = vrsqrt.pop %v5040
        %v5049 = vmul.f32 %v4993, %v5041
        %v5050 = vmul.f32 %v4994, %v5042
        %v5051 = vmul.f32 %v4995, %v5043
        %v5052 = vmul.f32 %v4996, %v5044
        %v5053 = vmul.f32 %v4997, %v5045
        %v5054 = vmul.f32 %v4998, %v5046
        %v5055 = vmul.f32 %v4999, %v5047
        %v5056 = vmul.f32 %v5000, %v5048
        %v5057 = vld [vmem:[%s9] sm:$0x1]
        %v5059 = vlaneseq
        %v5060 = vshrl.u32 %v5059, 7
        %v5061 = vsub.s32 0, %v5060
        %v5062 = vrot.slane %v5057, %v5061
        %v5064 = vmul.f32 %v5049, %v5062
        %v5065 = vmul.f32 %v5050, %v5062
        %v5066 = vmul.f32 %v5051, %v5062
        %v5067 = vmul.f32 %v5052, %v5062
        %v5068 = vmul.f32 %v5053, %v5062
        %v5069 = vmul.f32 %v5054, %v5062
        %v5070 = vmul.f32 %v5055, %v5062
        %v5071 = vmul.f32 %v5056, %v5062
        %v5072 = vld [vmem:[%s10] sm:$0x1]
        %v5074 = vlaneseq
        %v5075 = vshrl.u32 %v5074, 7
        %v5076 = vsub.s32 0, %v5075
        %v5077 = vrot.slane %v5072, %v5076
        %v5079 = vadd.f32 %v5064, %v5077
        %v5080 = vadd.f32 %v5065, %v5077
        %v5081 = vadd.f32 %v5066, %v5077
        %v5082 = vadd.f32 %v5067, %v5077
        %v5083 = vadd.f32 %v5068, %v5077
        %v5084 = vadd.f32 %v5069, %v5077
        %v5085 = vadd.f32 %v5070, %v5077
        %v5086 = vadd.f32 %v5071, %v5077
        %5087 = vst [vmem:[%s550] sm:$0xff] %v5079
        %5088 = vst [vmem:[%s550 + $0x8] sm:$0xff] %v5080
        %5089 = vst [vmem:[%s550 + $0x10] sm:$0xff] %v5081
        %5090 = vst [vmem:[%s550 + $0x18] sm:$0xff] %v5082
        %5091 = vst [vmem:[%s550 + $0x20] sm:$0xff] %v5083
        %5092 = vst [vmem:[%s550 + $0x28] sm:$0xff] %v5084
        %5093 = vst [vmem:[%s550 + $0x30] sm:$0xff] %v5085
        %5094 = vst [vmem:[%s550 + $0x38] sm:$0xff] %v5086
        %s5095 = sand.u32 %s293, 1
        %s5096 = scalar_lea.sflag [#allocation4], %s5095
        %s5097 = sand.u32 %s293, 1
        %s5098 = smul.addr %s5097, 64
        %s5099 = scalar_lea.vmem [#allocation11], %s5098
        %s5100 = sand.u32 %s319, 1
        %s5101 = sand.u32 %s319, 1
        %s5102 = smul.addr %s5101, 256
        %s5103 = scalar_lea.vmem [#allocation12], %s5102
        // Predicated region
        $region85: #{_lambda_.1} parent=63 // pred_check
          %p5104 = pneg %p303
        $region86: #{_lambda_.1} parent=63 // pred_check_branch
          %5106 = sbr.rel (%p5104) target = $region88
        $region87: #{_lambda_.1} parent=63 // pred_region
          %s5107 = smul.u32 8, %s34
          %s5109 = ssub.s32 1024, 1024
          %5110 = vsyncadd %s5096, %s5109
          %s5111 = smul.addr %s5107, 128
          %s5112 = scalar_lea.hbm %s11, %s5111
          %s5113 = sshll.u32 %s5099, 4
          %s5114 = int_to_ptr.vmem [resolvable:$true] %s5113
          %5119 = dma.vmem_to_hbm [thread:$0]  %s5114, 1024, %s5112, %s5096, 128, 128, 8
        $region88: #{_lambda_.1} parent=63 // pred_fallthru
          _
        // Predicated region
        $region89: #{_lambda_.1} parent=63 // pred_check
          %p5120 = pneg %p329
        $region90: #{_lambda_.1} parent=63 // pred_check_branch
          %5122 = sbr.rel (%p5120) target = $region92
        $region91: #{_lambda_.1} parent=63 // pred_region
          %s5123 = smul.u32 8, %s34
          %s5124 = smul.addr %s5123, 8
          %s5125 = scalar_lea.vmem %s12, %s5124
          // Predicated region
          $region93: #{_lambda_.1} parent=91 // pred_check
            _
          $region94: #{_lambda_.1} parent=91 // pred_check_branch
            %5127 = sbr.rel (0) target = $region96
          $region95: #{_lambda_.1} parent=91 // pred_region
            // Predicated region
            $region97: #{_lambda_.1} parent=95 // pred_check
              _
            $region98: #{_lambda_.1} parent=95 // pred_check_branch
              %5129 = sbr.rel (0) target = $region100
            $region99: #{_lambda_.1} parent=95 // pred_region
              // Predicated region
              $region112: #{_lambda_.1} parent=99 // pred_check
                _
              $region113: #{_lambda_.1} parent=99 // pred_check_branch
                %5206 = sbr.rel (0) target = $region115
              $region114: #{_lambda_.1} parent=99 // pred_region
                loop: start=0, step=1, limit=1
                $region116: #{_lambda_.1} parent=114 // loop_pre_header
                  _
                $region117: #{_lambda_.1} parent=114 // loop_header
                  %s5208 = sphi 0, %s5212
                  %p5209 = scmp.ge.s32.totalorder %s5208, 1
                  %s5213 = sphi %s5103, %s5103
                  %s5214 = sphi %s5125, %s5125
                $region118: #{_lambda_.1} parent=114 // loop_header_branch
                  %5211 = sbr.rel (%p5209) target = $region122
                $region119: #{_lambda_.1} parent=114 // loop_body
                  %v5215 = vld [vmem:[%s5213] sm:$0xff]
                  %5216 = vst [vmem:[%s5214] sm:$0xff] %v5215
                  %v5217 = vld [vmem:[%s5213 + $0x8] sm:$0xff]
                  %5218 = vst [vmem:[%s5214 + $0x8] sm:$0xff] %v5217
                  %v5219 = vld [vmem:[%s5213 + $0x10] sm:$0xff]
                  %5220 = vst [vmem:[%s5214 + $0x10] sm:$0xff] %v5219
                  %v5221 = vld [vmem:[%s5213 + $0x18] sm:$0xff]
                  %5222 = vst [vmem:[%s5214 + $0x18] sm:$0xff] %v5221
                  %v5223 = vld [vmem:[%s5213 + $0x20] sm:$0xff]
                  %5224 = vst [vmem:[%s5214 + $0x20] sm:$0xff] %v5223
                  %v5225 = vld [vmem:[%s5213 + $0x28] sm:$0xff]
                  %5226 = vst [vmem:[%s5214 + $0x28] sm:$0xff] %v5225
                  %v5227 = vld [vmem:[%s5213 + $0x30] sm:$0xff]
                  %5228 = vst [vmem:[%s5214 + $0x30] sm:$0xff] %v5227
                  %v5229 = vld [vmem:[%s5213 + $0x38] sm:$0xff]
                  %5230 = vst [vmem:[%s5214 + $0x38] sm:$0xff] %v5229
                  %v5231 = vld [vmem:[%s5213 + $0x40] sm:$0xff]
                  %5232 = vst [vmem:[%s5214 + $0x100] sm:$0xff] %v5231
                  %v5233 = vld [vmem:[%s5213 + $0x48] sm:$0xff]
                  %5234 = vst [vmem:[%s5214 + $0x108] sm:$0xff] %v5233
                  %v5235 = vld [vmem:[%s5213 + $0x50] sm:$0xff]
                  %5236 = vst [vmem:[%s5214 + $0x110] sm:$0xff] %v5235
                  %v5237 = vld [vmem:[%s5213 + $0x58] sm:$0xff]
                  %5238 = vst [vmem:[%s5214 + $0x118] sm:$0xff] %v5237
                  %v5239 = vld [vmem:[%s5213 + $0x60] sm:$0xff]
                  %5240 = vst [vmem:[%s5214 + $0x120] sm:$0xff] %v5239
                  %v5241 = vld [vmem:[%s5213 + $0x68] sm:$0xff]
                  %5242 = vst [vmem:[%s5214 + $0x128] sm:$0xff] %v5241
                  %v5243 = vld [vmem:[%s5213 + $0x70] sm:$0xff]
                  %5244 = vst [vmem:[%s5214 + $0x130] sm:$0xff] %v5243
                  %v5245 = vld [vmem:[%s5213 + $0x78] sm:$0xff]
                  %5246 = vst [vmem:[%s5214 + $0x138] sm:$0xff] %v5245
                  %v5247 = vld [vmem:[%s5213 + $0x80] sm:$0xff]
                  %5248 = vst [vmem:[%s5214 + $0x200] sm:$0xff] %v5247
                  %v5249 = vld [vmem:[%s5213 + $0x88] sm:$0xff]
                  %5250 = vst [vmem:[%s5214 + $0x208] sm:$0xff] %v5249
                  %v5251 = vld [vmem:[%s5213 + $0x90] sm:$0xff]
                  %5252 = vst [vmem:[%s5214 + $0x210] sm:$0xff] %v5251
                  %v5253 = vld [vmem:[%s5213 + $0x98] sm:$0xff]
                  %5254 = vst [vmem:[%s5214 + $0x218] sm:$0xff] %v5253
                  %v5255 = vld [vmem:[%s5213 + $0xa0] sm:$0xff]
                  %5256 = vst [vmem:[%s5214 + $0x220] sm:$0xff] %v5255
                  %v5257 = vld [vmem:[%s5213 + $0xa8] sm:$0xff]
                  %5258 = vst [vmem:[%s5214 + $0x228] sm:$0xff] %v5257
                  %v5259 = vld [vmem:[%s5213 + $0xb0] sm:$0xff]
                  %5260 = vst [vmem:[%s5214 + $0x230] sm:$0xff] %v5259
                  %v5261 = vld [vmem:[%s5213 + $0xb8] sm:$0xff]
                  %5262 = vst [vmem:[%s5214 + $0x238] sm:$0xff] %v5261
                  %v5263 = vld [vmem:[%s5213 + $0xc0] sm:$0xff]
                  %5264 = vst [vmem:[%s5214 + $0x300] sm:$0xff] %v5263
                  %v5265 = vld [vmem:[%s5213 + $0xc8] sm:$0xff]
                  %5266 = vst [vmem:[%s5214 + $0x308] sm:$0xff] %v5265
                  %v5267 = vld [vmem:[%s5213 + $0xd0] sm:$0xff]
                  %5268 = vst [vmem:[%s5214 + $0x310] sm:$0xff] %v5267
                  %v5269 = vld [vmem:[%s5213 + $0xd8] sm:$0xff]
                  %5270 = vst [vmem:[%s5214 + $0x318] sm:$0xff] %v5269
                  %v5271 = vld [vmem:[%s5213 + $0xe0] sm:$0xff]
                  %5272 = vst [vmem:[%s5214 + $0x320] sm:$0xff] %v5271
                  %v5273 = vld [vmem:[%s5213 + $0xe8] sm:$0xff]
                  %5274 = vst [vmem:[%s5214 + $0x328] sm:$0xff] %v5273
                  %v5275 = vld [vmem:[%s5213 + $0xf0] sm:$0xff]
                  %5276 = vst [vmem:[%s5214 + $0x330] sm:$0xff] %v5275
                  %v5277 = vld [vmem:[%s5213 + $0xf8] sm:$0xff]
                  %5278 = vst [vmem:[%s5214 + $0x338] sm:$0xff] %v5277
                $region120: #{_lambda_.1} parent=114 // loop_footer
                  %s5212 = sadd.s32 1, %s5208
                $region121: #{_lambda_.1} parent=114 // loop_footer_branch
                  %5207 = sbr.rel target = $region117
                $region122: #{_lambda_.1} parent=114 // loop_exit
                  _
              $region115: #{_lambda_.1} parent=99 // pred_fallthru
                _
              // Predicated region
              $region123: #{_lambda_.1} parent=99 // pred_check
                _
              $region124: #{_lambda_.1} parent=99 // pred_check_branch
                %5280 = sbr.rel target = $region126
              $region125: #{_lambda_.1} parent=99 // pred_region
                _
              $region126: #{_lambda_.1} parent=99 // pred_fallthru
                _
            $region100: #{_lambda_.1} parent=95 // pred_fallthru
              _
            // Predicated region
            $region101: #{_lambda_.1} parent=95 // pred_check
              _
            $region102: #{_lambda_.1} parent=95 // pred_check_branch
              %5131 = sbr.rel target = $region104
            $region103: #{_lambda_.1} parent=95 // pred_region
              loop: start=0, step=1, limit=1
              $region105: #{_lambda_.1} parent=103 // loop_pre_header
                _
              $region106: #{_lambda_.1} parent=103 // loop_header
                %s5134 = sphi 0, %s5138
                %p5135 = scmp.ge.s32.totalorder %s5134, 1
                %s5139 = sphi %s5103, %s5103
                %s5140 = sphi %s5125, %s5125
              $region107: #{_lambda_.1} parent=103 // loop_header_branch
                %5137 = sbr.rel (%p5135) target = $region111
              $region108: #{_lambda_.1} parent=103 // loop_body
                %v5141 = vld [vmem:[%s5139] sm:$0xff]
                %5142 = vst [vmem:[%s5140] sm:$0xff] %v5141
                %v5143 = vld [vmem:[%s5139 + $0x8] sm:$0xff]
                %5144 = vst [vmem:[%s5140 + $0x8] sm:$0xff] %v5143
                %v5145 = vld [vmem:[%s5139 + $0x10] sm:$0xff]
                %5146 = vst [vmem:[%s5140 + $0x10] sm:$0xff] %v5145
                %v5147 = vld [vmem:[%s5139 + $0x18] sm:$0xff]
                %5148 = vst [vmem:[%s5140 + $0x18] sm:$0xff] %v5147
                %v5149 = vld [vmem:[%s5139 + $0x20] sm:$0xff]
                %5150 = vst [vmem:[%s5140 + $0x20] sm:$0xff] %v5149
                %v5151 = vld [vmem:[%s5139 + $0x28] sm:$0xff]
                %5152 = vst [vmem:[%s5140 + $0x28] sm:$0xff] %v5151
                %v5153 = vld [vmem:[%s5139 + $0x30] sm:$0xff]
                %5154 = vst [vmem:[%s5140 + $0x30] sm:$0xff] %v5153
                %v5155 = vld [vmem:[%s5139 + $0x38] sm:$0xff]
                %5156 = vst [vmem:[%s5140 + $0x38] sm:$0xff] %v5155
                %v5157 = vld [vmem:[%s5139 + $0x40] sm:$0xff]
                %5158 = vst [vmem:[%s5140 + $0x100] sm:$0xff] %v5157
                %v5159 = vld [vmem:[%s5139 + $0x48] sm:$0xff]
                %5160 = vst [vmem:[%s5140 + $0x108] sm:$0xff] %v5159
                %v5161 = vld [vmem:[%s5139 + $0x50] sm:$0xff]
                %5162 = vst [vmem:[%s5140 + $0x110] sm:$0xff] %v5161
                %v5163 = vld [vmem:[%s5139 + $0x58] sm:$0xff]
                %5164 = vst [vmem:[%s5140 + $0x118] sm:$0xff] %v5163
                %v5165 = vld [vmem:[%s5139 + $0x60] sm:$0xff]
                %5166 = vst [vmem:[%s5140 + $0x120] sm:$0xff] %v5165
                %v5167 = vld [vmem:[%s5139 + $0x68] sm:$0xff]
                %5168 = vst [vmem:[%s5140 + $0x128] sm:$0xff] %v5167
                %v5169 = vld [vmem:[%s5139 + $0x70] sm:$0xff]
                %5170 = vst [vmem:[%s5140 + $0x130] sm:$0xff] %v5169
                %v5171 = vld [vmem:[%s5139 + $0x78] sm:$0xff]
                %5172 = vst [vmem:[%s5140 + $0x138] sm:$0xff] %v5171
                %v5173 = vld [vmem:[%s5139 + $0x80] sm:$0xff]
                %5174 = vst [vmem:[%s5140 + $0x200] sm:$0xff] %v5173
                %v5175 = vld [vmem:[%s5139 + $0x88] sm:$0xff]
                %5176 = vst [vmem:[%s5140 + $0x208] sm:$0xff] %v5175
                %v5177 = vld [vmem:[%s5139 + $0x90] sm:$0xff]
                %5178 = vst [vmem:[%s5140 + $0x210] sm:$0xff] %v5177
                %v5179 = vld [vmem:[%s5139 + $0x98] sm:$0xff]
                %5180 = vst [vmem:[%s5140 + $0x218] sm:$0xff] %v5179
                %v5181 = vld [vmem:[%s5139 + $0xa0] sm:$0xff]
                %5182 = vst [vmem:[%s5140 + $0x220] sm:$0xff] %v5181
                %v5183 = vld [vmem:[%s5139 + $0xa8] sm:$0xff]
                %5184 = vst [vmem:[%s5140 + $0x228] sm:$0xff] %v5183
                %v5185 = vld [vmem:[%s5139 + $0xb0] sm:$0xff]
                %5186 = vst [vmem:[%s5140 + $0x230] sm:$0xff] %v5185
                %v5187 = vld [vmem:[%s5139 + $0xb8] sm:$0xff]
                %5188 = vst [vmem:[%s5140 + $0x238] sm:$0xff] %v5187
                %v5189 = vld [vmem:[%s5139 + $0xc0] sm:$0xff]
                %5190 = vst [vmem:[%s5140 + $0x300] sm:$0xff] %v5189
                %v5191 = vld [vmem:[%s5139 + $0xc8] sm:$0xff]
                %5192 = vst [vmem:[%s5140 + $0x308] sm:$0xff] %v5191
                %v5193 = vld [vmem:[%s5139 + $0xd0] sm:$0xff]
                %5194 = vst [vmem:[%s5140 + $0x310] sm:$0xff] %v5193
                %v5195 = vld [vmem:[%s5139 + $0xd8] sm:$0xff]
                %5196 = vst [vmem:[%s5140 + $0x318] sm:$0xff] %v5195
                %v5197 = vld [vmem:[%s5139 + $0xe0] sm:$0xff]
                %5198 = vst [vmem:[%s5140 + $0x320] sm:$0xff] %v5197
                %v5199 = vld [vmem:[%s5139 + $0xe8] sm:$0xff]
                %5200 = vst [vmem:[%s5140 + $0x328] sm:$0xff] %v5199
                %v5201 = vld [vmem:[%s5139 + $0xf0] sm:$0xff]
                %5202 = vst [vmem:[%s5140 + $0x330] sm:$0xff] %v5201
                %v5203 = vld [vmem:[%s5139 + $0xf8] sm:$0xff]
                %5204 = vst [vmem:[%s5140 + $0x338] sm:$0xff] %v5203
              $region109: #{_lambda_.1} parent=103 // loop_footer
                %s5138 = sadd.s32 1, %s5134
              $region110: #{_lambda_.1} parent=103 // loop_footer_branch
                %5133 = sbr.rel target = $region106
              $region111: #{_lambda_.1} parent=103 // loop_exit
                _
            $region104: #{_lambda_.1} parent=95 // pred_fallthru
              _
          $region96: #{_lambda_.1} parent=91 // pred_fallthru
            _
          %5281 = vnop
        $region92: #{_lambda_.1} parent=63 // pred_fallthru
          _
      $region64: #{_lambda_.1} parent=5 // pred_fallthru
        _
      %p5282 = scmp.le.s32.totalorder 2, %s29
      // Predicated region
      $region127: #{_lambda_.1} parent=5 // pred_check
        %p5283 = pneg %p5282
      $region128: #{_lambda_.1} parent=5 // pred_check_branch
        %5285 = sbr.rel (%p5283) target = $region130
      $region129: #{_lambda_.1} parent=5 // pred_region
        %s5286 = ssub.s32 %s29, 2
        // Predicated region
        $region131: #{_lambda_.1} parent=129 // pred_check
          %p5287 = pneg %p309
        $region132: #{_lambda_.1} parent=129 // pred_check_branch
          %5289 = sbr.rel (%p5287) target = $region134
        $region133: #{_lambda_.1} parent=129 // pred_region
          %s5290 = sand.u32 %s294, 1
          %s5291 = scalar_lea.sflag [#allocation4], %s5290
          %s5292 = sand.u32 %s294, 1
          %s5293 = smul.addr %s5292, 64
          %s5294 = scalar_lea.vmem [#allocation11], %s5293
          %5295 = dma.done %s5291, 1024
        $region134: #{_lambda_.1} parent=129 // pred_fallthru
          _
        // Predicated region
        $region135: #{_lambda_.1} parent=129 // pred_check
          %p5296 = pneg %p335
        $region136: #{_lambda_.1} parent=129 // pred_check_branch
          %5298 = sbr.rel (%p5296) target = $region138
        $region137: #{_lambda_.1} parent=129 // pred_region
          %s5299 = sand.u32 %s320, 1
          %s5300 = sand.u32 %s320, 1
          %s5301 = smul.addr %s5300, 256
          %s5302 = scalar_lea.vmem [#allocation12], %s5301
        $region138: #{_lambda_.1} parent=129 // pred_fallthru
          _
      $region130: #{_lambda_.1} parent=5 // pred_fallthru
        _
    $region6: #{_lambda_.1} parent=1 // loop_footer
      %s33 = sadd.s32 1, %s29
    $region7: #{_lambda_.1} parent=1 // loop_footer_branch
      %28 = sbr.rel target = $region3
    $region8: #{_lambda_.1} parent=1 // loop_exit
      _
    %5303 = vsyncpa [#allocation3], 1
    %s5304 = scalar_lea.sflag [#allocation3], 1
    %5305 = vsyncpa %s5304, 1
    %5306 = vsyncpa [#allocation6], 1
    %s5307 = scalar_lea.sflag [#allocation6], 1
    %5308 = vsyncpa %s5307, 1
    %5309 = vsyncpa [#allocation9], 1
    %5310 = vsyncpa [#allocation4], 1
    %s5311 = scalar_lea.sflag [#allocation4], 1
    %5312 = vsyncpa %s5311, 1

</llo_original>
